<compile_context>
chip_gen: v7x
topology: tpu7x:2x2x1
jax: 0.10.0
libtpu: 0.0.40
codegen_flags: <defaults>
</compile_context>

<pallas_src>
import functools

import jax
import jax.numpy as jnp
from jax import lax
from jax.experimental import pallas as pl
from jax.experimental.pallas import tpu as pltpu


def _round_up(x, m):
    return ((x + m - 1) // m) * m


def _vmem_capacity_bytes():
    try:
        return int(pltpu.get_tpu_info().vmem_capacity_bytes)
    except Exception:
        return 64 << 20            # conservative (v7x-sized) fallback


def _col(arr, col_idx):
    """Column `col_idx` of a 2-D value as (rows, 1) via mask + lane reduction."""
    cols = lax.broadcasted_iota(jnp.int32, arr.shape, 1)
    return jnp.sum(jnp.where(cols == col_idx, arr, 0.0), axis=1, keepdims=True)


# ---------------------------------------------------------------------------
# Streaming pass 1 (grid over node tiles, 'arbitrary'):
#   accumulate E_acc = H^T (D_v^{-1/2}(X Theta + b)); a ones-column planted at
#   lane `deg_col` makes E_acc[:, deg_col] = deg_e. Finalize emits
#   E_msg = D_e^{-1} E_acc in bf16 with an exact 1.0 re-planted at deg_col so a
#   later H @ E_msg carries deg_v for free.
# ---------------------------------------------------------------------------
def _edge_msg_kernel(h_ref, x_ref, theta_ref, bias_ref, emsg_ref, eacc_ref, *, deg_col):
    i = pl.program_id(0)

    @pl.when(i == 0)
    def _init():
        eacc_ref[...] = jnp.zeros_like(eacc_ref)

    h_bf = h_ref[...].astype(jnp.bfloat16)                      # int8 -> bf16 (MXU operand)
    deg_v = jnp.maximum(
        jnp.sum(h_bf.astype(jnp.float32), axis=1, keepdims=True), 1.0)
    dv_isqrt = lax.rsqrt(deg_v)                                 # (TM, 1) f32

    z = jnp.dot(x_ref[...], theta_ref[...],
                preferred_element_type=jnp.float32) + bias_ref[...]
    z = z * dv_isqrt                                            # (TM, C_PAD) f32
    col = lax.broadcasted_iota(jnp.int32, z.shape, 1)
    z = jnp.where(col == deg_col, 1.0, z)                       # plant ones -> deg_e

    eacc_ref[...] += lax.dot_general(                           # H^T @ z (contract node axis)
        h_bf, z.astype(jnp.bfloat16),
        dimension_numbers=(((0,), (0,)), ((), ())),
        preferred_element_type=jnp.float32)

    @pl.when(i == pl.num_programs(0) - 1)
    def _finalize():
        eacc = eacc_ref[...]                                    # (E_PAD, C_PAD) f32
        de_inv = pl.reciprocal(jnp.maximum(_col(eacc, deg_col), 1.0), approx=True)
        emsg = eacc * de_inv
        cols = lax.broadcasted_iota(jnp.int32, emsg.shape, 1)
        emsg = jnp.where(cols == deg_col, 1.0, emsg)            # exact 1.0 -> deg_v lane
        emsg_ref[...] = emsg.astype(emsg_ref.dtype)


# ---------------------------------------------------------------------------
# Streaming pass 2 (grid over node tiles, 'arbitrary'):
#   y = D_v^{-1/2} H E_msg (deg_v read from the planted lane BEFORE scaling),
#   accumulate EF_acc = H^T y (ones re-planted so EF_acc[:, deg_col] = deg_e);
#   finalize applies the attention and emits bf16 weighted messages m with an
#   exact 1.0 planted at deg_col so pass 3 gets deg_v for free.
# ---------------------------------------------------------------------------
def _edge_attention_kernel(h_ref, emsg_ref, attw_ref, attb_ref, m_ref, efacc_ref, *, deg_col):
    i = pl.program_id(0)

    @pl.when(i == 0)
    def _init():
        efacc_ref[...] = jnp.zeros_like(efacc_ref)

    h_bf = h_ref[...].astype(jnp.bfloat16)                      # int8 -> bf16
    y_raw = jnp.dot(h_bf, emsg_ref[...], preferred_element_type=jnp.float32)
    deg_v = jnp.maximum(_col(y_raw, deg_col), 1.0)              # from the planted lane
    y = y_raw * lax.rsqrt(deg_v)                                # (TM, C_PAD) f32
    col = lax.broadcasted_iota(jnp.int32, y.shape, 1)
    y = jnp.where(col == deg_col, 1.0, y)                       # re-plant ones -> deg_e

    efacc_ref[...] += lax.dot_general(                          # H^T @ y
        h_bf, y.astype(jnp.bfloat16),
        dimension_numbers=(((0,), (0,)), ((), ())),
        preferred_element_type=jnp.float32)

    @pl.when(i == pl.num_programs(0) - 1)
    def _finalize():
        efacc = efacc_ref[...]
        de_inv = pl.reciprocal(jnp.maximum(_col(efacc, deg_col), 1.0), approx=True)
        ef = efacc * de_inv                                     # hyperedge features
        # width-1 attention "matmul" on the VPU: multiply + lane reduction.
        logits = jnp.sum(ef * attw_ref[...], axis=1, keepdims=True) + attb_ref[0, 0]
        w = jax.nn.sigmoid(logits)                              # (E_PAD, 1)
        m = ef * w
        cols = lax.broadcasted_iota(jnp.int32, m.shape, 1)
        m = jnp.where(cols == deg_col, 1.0, m)                  # exact 1.0 -> deg_v for pass 3
        m_ref[...] = m.astype(m_ref.dtype)


# ---------------------------------------------------------------------------
# Streaming pass 3 ('parallel' node tiles): out = D_v^{-1} H m, with deg_v read
# from the planted lane of the matmul output (no per-tile H reduction).
# ---------------------------------------------------------------------------
def _propagate_kernel(h_ref, m_ref, out_ref, *, deg_col):
    h_bf = h_ref[...].astype(jnp.bfloat16)
    out_raw = jnp.dot(h_bf, m_ref[...], preferred_element_type=jnp.float32)
    deg_v = jnp.maximum(_col(out_raw, deg_col), 1.0)
    out_ref[...] = (out_raw * pl.reciprocal(deg_v, approx=True)).astype(out_ref.dtype)


# ---------------------------------------------------------------------------
# Resident-H fast path: the whole forward in one kernel (H DMA'd once).
# ---------------------------------------------------------------------------
def _fused_kernel(h_ref, x_ref, theta_ref, bias_ref, attw_ref, attb_ref, out_ref, *, deg_col):
    h_bf = h_ref[...].astype(jnp.bfloat16)                      # (N_PAD, E_PAD)
    deg_v = jnp.maximum(
        jnp.sum(h_bf.astype(jnp.float32), axis=1, keepdims=True), 1.0)
    dv_isqrt = lax.rsqrt(deg_v)

    z = jnp.dot(x_ref[...], theta_ref[...],
                preferred_element_type=jnp.float32) + bias_ref[...]
    z = z * dv_isqrt
    col = lax.broadcasted_iota(jnp.int32, z.shape, 1)
    z = jnp.where(col == deg_col, 1.0, z)                       # plant ones -> deg_e

    eacc = lax.dot_general(h_bf, z.astype(jnp.bfloat16),
                           dimension_numbers=(((0,), (0,)), ((), ())),
                           preferred_element_type=jnp.float32)  # (E_PAD, C_PAD)
    de_inv = pl.reciprocal(jnp.maximum(_col(eacc, deg_col), 1.0), approx=True)
    emsg = (eacc * de_inv).astype(jnp.bfloat16)

    y = jnp.dot(h_bf, emsg, preferred_element_type=jnp.float32) * dv_isqrt
    efacc = lax.dot_general(h_bf, y.astype(jnp.bfloat16),
                            dimension_numbers=(((0,), (0,)), ((), ())),
                            preferred_element_type=jnp.float32)
    ef = efacc * de_inv
    logits = jnp.sum(ef * attw_ref[...], axis=1, keepdims=True) + attb_ref[0, 0]
    w = jax.nn.sigmoid(logits)
    m = (ef * w).astype(jnp.bfloat16)

    out = jnp.dot(h_bf, m, preferred_element_type=jnp.float32)
    out_ref[...] = (out * pl.reciprocal(deg_v, approx=True)).astype(out_ref.dtype)


def hypergat_conv(h, x, theta, bias, att_w, att_b, *, tile_m=None, force_streaming=False):
    """HyperGATConv forward. h: (N, E) dense 0/1 incidence, x: (N, C_in) -> (N, C_out) f32."""
    n, e = h.shape
    c_in = x.shape[1]
    c_out = theta.shape[1]

    # lane-dense feature padding; one spare (padded) lane carries degree counts.
    c_pad = _round_up(c_out + 1, 128)
    deg_col = c_out
    e_pad = _round_up(e, 128)                 # lane-dense incidence / edge matmuls

    vmem_cap = _vmem_capacity_bytes()
    vlim = int(vmem_cap * 3 // 4)             # ~96 MiB on v5e/v6e, ~48 MiB on v7x

    theta_p = jnp.pad(theta.astype(jnp.bfloat16), ((0, 0), (0, c_pad - c_out)))
    bias_p = jnp.pad(bias.astype(jnp.float32).reshape(1, -1),
                     ((0, 0), (0, c_pad - c_out)))
    attw_p = jnp.pad(att_w.astype(jnp.float32).reshape(1, -1),
                     ((0, 0), (0, c_pad - c_out)))
    attb_s = att_b.astype(jnp.float32).reshape(1, 1)

    # -------- resident-H fast path: one pallas_call, H DMA'd from HBM once ----
    n_f = _round_up(n, 16)
    fused_est = (n_f * e_pad * 7                       # H int8 + bf16/f32 in-kernel copies
                 + n_f * (c_in * 2 + 10 * c_pad * 4)   # X + z/y/out temporaries
                 + 5 * e_pad * c_pad * 4               # edge-space intermediates
                 + c_in * c_pad * 2)
    if (not force_streaming) and fused_est <= int(vmem_cap * 0.4):
        h_f = jnp.pad(h, ((0, n_f - n), (0, e_pad - e))).astype(jnp.int8)
        x_f = jnp.pad(x.astype(jnp.bfloat16), ((0, n_f - n), (0, 0)))
        out_pad = pl.pallas_call(
            functools.partial(_fused_kernel, deg_col=deg_col),
            out_shape=jax.ShapeDtypeStruct((n_f, c_pad), jnp.float32),
            grid_spec=pltpu.PrefetchScalarGridSpec(
                num_scalar_prefetch=0,
                grid=(1,),
                in_specs=[
                    pl.BlockSpec((n_f, e_pad), lambda i: (0, 0)),
                    pl.BlockSpec((n_f, c_in), lambda i: (0, 0)),
                    pl.BlockSpec((c_in, c_pad), lambda i: (0, 0)),
                    pl.BlockSpec((1, c_pad), lambda i: (0, 0)),
                    pl.BlockSpec((1, c_pad), lambda i: (0, 0)),
                    pl.BlockSpec(memory_space=pltpu.MemorySpace.SMEM),
                ],
                out_specs=pl.BlockSpec((n_f, c_pad), lambda i: (0, 0)),
            ),
            compiler_params=pltpu.CompilerParams(
                dimension_semantics=("arbitrary",), vmem_limit_bytes=vlim),
        )(h_f, x_f, theta_p, bias_p, attw_p, attb_s)
        return out_pad[:n, :c_out]

    # -------- streaming path: three tiled passes over node tiles --------------
    if tile_m is None:
        # Resident edge-space bytes (worst pass) plus per-node-row streamed /
        # in-kernel-temporary bytes; round the tile DOWN so we never exceed it.
        resident = 12 * e_pad * c_pad + c_in * c_pad * 2 + 16 * c_pad * 4
        per_row = (2 * e_pad               # int8 H tile, double-buffered DMA
                   + 3 * e_pad             # in-kernel bf16 / f32 copies of the H tile
                   + 2 * c_in * 2          # X tile (bf16), double-buffered
                   + 8 * c_pad * 4)        # z / y / out temporaries + out DMA buffers
        budget = max(int(vmem_cap * 0.5) - resident, 64 * per_row)
        tile_m = budget // per_row
    tm = int(max(32, min(tile_m, 2048, _round_up(n, 32))))
    tm = max(32, (tm // 32) * 32)
    n_pad = _round_up(n, tm)
    n_tiles = n_pad // tm

    h_p = jnp.pad(h, ((0, n_pad - n), (0, e_pad - e))).astype(jnp.int8)
    x_p = jnp.pad(x.astype(jnp.bfloat16), ((0, n_pad - n), (0, 0)))

    h_spec = pl.BlockSpec((tm, e_pad), lambda i: (i, 0))
    edge_full = lambda: pl.BlockSpec((e_pad, c_pad), lambda i: (0, 0))

    # ---- pass 1: E_msg = D_e^{-1} H^T (D_v^{-1/2}(X Theta + b))   ('arbitrary')
    e_msg = pl.pallas_call(
        functools.partial(_edge_msg_kernel, deg_col=deg_col),
        out_shape=jax.ShapeDtypeStruct((e_pad, c_pad), jnp.bfloat16),
        grid_spec=pltpu.PrefetchScalarGridSpec(
            num_scalar_prefetch=0,
            grid=(n_tiles,),
            in_specs=[
                h_spec,
                pl.BlockSpec((tm, c_in), lambda i: (i, 0)),
                pl.BlockSpec((c_in, c_pad), lambda i: (0, 0)),
                pl.BlockSpec((1, c_pad), lambda i: (0, 0)),
            ],
            out_specs=edge_full(),
            scratch_shapes=[pltpu.VMEM((e_pad, c_pad), jnp.float32)],  # E accumulator
        ),
        compiler_params=pltpu.CompilerParams(
            dimension_semantics=("arbitrary",), vmem_limit_bytes=vlim),
    )(h_p, x_p, theta_p, bias_p)

    # ---- pass 2: EF accumulation + attention -> bf16 weighted edge messages m
    m_edges = pl.pallas_call(
        functools.partial(_edge_attention_kernel, deg_col=deg_col),
        out_shape=jax.ShapeDtypeStruct((e_pad, c_pad), jnp.bfloat16),
        grid_spec=pltpu.PrefetchScalarGridSpec(
            num_scalar_prefetch=0,
            grid=(n_tiles,),
            in_specs=[
                h_spec,
                edge_full(),
                pl.BlockSpec((1, c_pad), lambda i: (0, 0)),
                pl.BlockSpec(memory_space=pltpu.MemorySpace.SMEM),
            ],
            out_specs=edge_full(),
            scratch_shapes=[pltpu.VMEM((e_pad, c_pad), jnp.float32)],  # EF accumulator
        ),
        compiler_params=pltpu.CompilerParams(
            dimension_semantics=("arbitrary",), vmem_limit_bytes=vlim),
    )(h_p, e_msg, attw_p, attb_s)

    # ---- pass 3: out = D_v^{-1} H m   ('parallel' node tiles)
    out_pad = pl.pallas_call(
        functools.partial(_propagate_kernel, deg_col=deg_col),
        out_shape=jax.ShapeDtypeStruct((n_pad, c_pad), jnp.float32),
        grid_spec=pltpu.PrefetchScalarGridSpec(
            num_scalar_prefetch=0,
            grid=(n_tiles,),
            in_specs=[h_spec, edge_full()],
            out_specs=pl.BlockSpec((tm, c_pad), lambda i: (i, 0)),
        ),
        compiler_params=pltpu.CompilerParams(
            dimension_semantics=("parallel",), vmem_limit_bytes=vlim),
    )(h_p, m_edges)

    return out_pad[:n, :c_out]


def hypergat_conv_ref(h, x, theta, bias, att_w, att_b):
    """Pure-JAX f32 reference of the same forward, for correctness checking."""
    deg_v = jnp.maximum(h.sum(axis=1, keepdims=True), 1.0)
    deg_e = jnp.maximum(h.sum(axis=0, keepdims=True), 1.0)
    z = (x @ theta + bias) / jnp.sqrt(deg_v)
    e_msg = (h.T @ z) / deg_e.T
    y = (h @ e_msg) / jnp.sqrt(deg_v)
    ef = (h.T @ y) / deg_e.T
    w = jax.nn.sigmoid(ef @ att_w + att_b)
    return (h @ (ef * w)) / deg_v


if __name__ == "__main__":
    key = jax.random.PRNGKey(0)
    k_h, k_x, k_th, k_b, k_aw, k_ab = jax.random.split(key, 6)

    N, E = 300, 200          # deliberately not tile/lane aligned
    C_IN, C_OUT = 16, 32     # in_channels, out_channels

    h = jax.random.bernoulli(k_h, 0.3, (N, E)).astype(jnp.float32)
    x = jax.random.normal(k_x, (N, C_IN), dtype=jnp.float32)

    theta = jax.random.normal(k_th, (C_IN, C_OUT), dtype=jnp.float32) / jnp.sqrt(C_IN)
    bias = jax.random.normal(k_b, (C_OUT,), dtype=jnp.float32) * 0.1
    att_w = jax.random.normal(k_aw, (C_OUT, 1), dtype=jnp.float32) / jnp.sqrt(C_OUT)
    att_b = jax.random.normal(k_ab, (1,), dtype=jnp.float32) * 0.1

    ref = hypergat_conv_ref(h, x, theta, bias, att_w, att_b)

    # Resident-H fused fast path (small graph -> single pallas_call, H read once).
    out_fast = hypergat_conv(h, x, theta, bias, att_w, att_b)
    jax.block_until_ready(out_fast)
    assert out_fast.shape == (N, C_OUT)
    assert jnp.allclose(out_fast, ref, atol=5e-3, rtol=5e-2), "fused path mismatch vs reference"

    # Streaming three-pass path (forced, small tiles to exercise multi-tile accumulation).
    out_stream = hypergat_conv(h, x, theta, bias, att_w, att_b,
                               force_streaming=True, tile_m=64)
    jax.block_until_ready(out_stream)
    assert out_stream.shape == (N, C_OUT)
    assert jnp.allclose(out_stream, ref, atol=5e-3, rtol=5e-2), "streaming path mismatch vs reference"

    print("KERNEL_OK")
</pallas_src>

<mosaic_0001>
module attributes {stable_mosaic.version = 11 : i64} {
  func.func @_fused_kernel(%arg0: i32, %arg1: memref<304x256xi8, #tpu.memory_space<vmem>>, %arg2: memref<304x16xbf16, #tpu.memory_space<vmem>>, %arg3: memref<16x128xbf16, #tpu.memory_space<vmem>>, %arg4: memref<1x128xf32, #tpu.memory_space<vmem>>, %arg5: memref<1x128xf32, #tpu.memory_space<vmem>>, %arg6: memref<1x1xf32, #tpu.memory_space<smem>>, %arg7: memref<304x128xf32, #tpu.memory_space<vmem>>) attributes {dimension_semantics = [#tpu.dimension_semantics<arbitrary>], iteration_bounds = array<i64: 1>, scalar_prefetch = 0 : i64, scratch_operands = 0 : i64, tpu.core_type = #tpu.core_type<tc>, window_params = [{pipeline_mode = #tpu.pipeline_mode<synchronous>, transform_indices = @transform_0, window_bounds = array<i64: 304, 256>}, {pipeline_mode = #tpu.pipeline_mode<synchronous>, transform_indices = @transform_1, window_bounds = array<i64: 304, 16>}, {pipeline_mode = #tpu.pipeline_mode<synchronous>, transform_indices = @transform_2, window_bounds = array<i64: 16, 128>}, {pipeline_mode = #tpu.pipeline_mode<synchronous>, transform_indices = @transform_3, window_bounds = array<i64: 1, 128>}, {pipeline_mode = #tpu.pipeline_mode<synchronous>, transform_indices = @transform_4, window_bounds = array<i64: 1, 128>}, {transform_indices = @transform_5, window_bounds = array<i64: 1, 1>}, {pipeline_mode = #tpu.pipeline_mode<synchronous>, transform_indices = @transform_6, window_bounds = array<i64: 304, 128>}]} {
    %c0 = arith.constant 0 : index
    %c0_0 = arith.constant 0 : index
    %0 = vector.load %arg1[%c0, %c0_0] : memref<304x256xi8, #tpu.memory_space<vmem>>, vector<304x256xi8>
    %1 = arith.sitofp %0 : vector<304x256xi8> to vector<304x256xbf16>
    %2 = arith.extf %1 : vector<304x256xbf16> to vector<304x256xf32>
    %cst = arith.constant dense<0.000000e+00> : vector<304xf32>
    %3 = vector.multi_reduction <add>, %2, %cst [1] : vector<304x256xf32> to vector<304xf32>
    %4 = vector.shape_cast %3 : vector<304xf32> to vector<304x1xf32>
    %cst_1 = arith.constant 1.000000e+00 : f32
    %5 = vector.broadcast %cst_1 : f32 to vector<304x1xf32>
    %6 = arith.maximumf %4, %5 : vector<304x1xf32>
    %7 = math.rsqrt %6 : vector<304x1xf32>
    %c0_2 = arith.constant 0 : index
    %c0_3 = arith.constant 0 : index
    %8 = vector.load %arg2[%c0_2, %c0_3] : memref<304x16xbf16, #tpu.memory_space<vmem>>, vector<304x16xbf16>
    %c0_4 = arith.constant 0 : index
    %c0_5 = arith.constant 0 : index
    %9 = vector.load %arg3[%c0_4, %c0_5] : memref<16x128xbf16, #tpu.memory_space<vmem>>, vector<16x128xbf16>
    %cst_6 = arith.constant dense<0.000000e+00> : vector<304x128xf32>
    %10 = tpu.matmul %8, %9, %cst_6 {dimension_numbers = #tpu.dot_dimension_numbers<[1], [0], [0], [1], [0, 0, 1, 1], [], []>} : vector<304x16xbf16>, vector<16x128xbf16>, vector<304x128xf32> -> vector<304x128xf32>
    %c0_7 = arith.constant 0 : index
    %c0_8 = arith.constant 0 : index
    %11 = vector.load %arg4[%c0_7, %c0_8] : memref<1x128xf32, #tpu.memory_space<vmem>>, vector<1x128xf32>
    %12 = vector.broadcast %11 : vector<1x128xf32> to vector<304x128xf32>
    %13 = arith.addf %10, %12 : vector<304x128xf32>
    %14 = vector.broadcast %7 : vector<304x1xf32> to vector<304x128xf32>
    %15 = arith.mulf %13, %14 : vector<304x128xf32>
    %16 = tpu.iota {dimensions = array<i32: 1>} : vector<304x128xi32>
    %c32_i32 = arith.constant 32 : i32
    %17 = vector.broadcast %c32_i32 : i32 to vector<304x128xi32>
    %18 = arith.cmpi eq, %16, %17 : vector<304x128xi32>
    %cst_9 = arith.constant 1.000000e+00 : f32
    %19 = vector.broadcast %cst_9 : f32 to vector<304x128xf32>
    %20 = arith.select %18, %19, %15 : vector<304x128xi1>, vector<304x128xf32>
    %21 = arith.truncf %20 : vector<304x128xf32> to vector<304x128xbf16>
    %cst_10 = arith.constant dense<0.000000e+00> : vector<256x128xf32>
    %22 = tpu.matmul %1, %21, %cst_10 {dimension_numbers = #tpu.dot_dimension_numbers<[0], [0], [1], [1], [0, 1, 1, 1], [], []>} : vector<304x256xbf16>, vector<304x128xbf16>, vector<256x128xf32> -> vector<256x128xf32>
    %23 = tpu.iota {dimensions = array<i32: 1>} : vector<256x128xi32>
    %c32_i32_11 = arith.constant 32 : i32
    %24 = vector.broadcast %c32_i32_11 : i32 to vector<256x128xi32>
    %25 = arith.cmpi eq, %23, %24 : vector<256x128xi32>
    %cst_12 = arith.constant 0.000000e+00 : f32
    %26 = vector.broadcast %cst_12 : f32 to vector<256x128xf32>
    %27 = arith.select %25, %22, %26 : vector<256x128xi1>, vector<256x128xf32>
    %cst_13 = arith.constant dense<0.000000e+00> : vector<256xf32>
    %28 = vector.multi_reduction <add>, %27, %cst_13 [1] : vector<256x128xf32> to vector<256xf32>
    %29 = vector.shape_cast %28 : vector<256xf32> to vector<256x1xf32>
    %cst_14 = arith.constant 1.000000e+00 : f32
    %30 = vector.broadcast %cst_14 : f32 to vector<256x1xf32>
    %31 = arith.maximumf %29, %30 : vector<256x1xf32>
    %32 = tpu.reciprocal %31 {approx = true} : vector<256x1xf32> -> vector<256x1xf32>
    %33 = vector.broadcast %32 : vector<256x1xf32> to vector<256x128xf32>
    %34 = arith.mulf %22, %33 : vector<256x128xf32>
    %35 = arith.truncf %34 : vector<256x128xf32> to vector<256x128xbf16>
    %cst_15 = arith.constant dense<0.000000e+00> : vector<304x128xf32>
    %36 = tpu.matmul %1, %35, %cst_15 {dimension_numbers = #tpu.dot_dimension_numbers<[1], [0], [0], [1], [0, 0, 1, 1], [], []>} : vector<304x256xbf16>, vector<256x128xbf16>, vector<304x128xf32> -> vector<304x128xf32>
    %37 = vector.broadcast %7 : vector<304x1xf32> to vector<304x128xf32>
    %38 = arith.mulf %36, %37 : vector<304x128xf32>
    %39 = arith.truncf %38 : vector<304x128xf32> to vector<304x128xbf16>
    %cst_16 = arith.constant dense<0.000000e+00> : vector<256x128xf32>
    %40 = tpu.matmul %1, %39, %cst_16 {dimension_numbers = #tpu.dot_dimension_numbers<[0], [0], [1], [1], [0, 1, 1, 1], [], []>} : vector<304x256xbf16>, vector<304x128xbf16>, vector<256x128xf32> -> vector<256x128xf32>
    %41 = vector.broadcast %32 : vector<256x1xf32> to vector<256x128xf32>
    %42 = arith.mulf %40, %41 : vector<256x128xf32>
    %c0_17 = arith.constant 0 : index
    %c0_18 = arith.constant 0 : index
    %43 = vector.load %arg5[%c0_17, %c0_18] : memref<1x128xf32, #tpu.memory_space<vmem>>, vector<1x128xf32>
    %44 = vector.broadcast %43 : vector<1x128xf32> to vector<256x128xf32>
    %45 = arith.mulf %42, %44 : vector<256x128xf32>
    %cst_19 = arith.constant dense<0.000000e+00> : vector<256xf32>
    %46 = vector.multi_reduction <add>, %45, %cst_19 [1] : vector<256x128xf32> to vector<256xf32>
    %47 = vector.shape_cast %46 : vector<256xf32> to vector<256x1xf32>
    %c0_20 = arith.constant 0 : index
    %c0_21 = arith.constant 0 : index
    %48 = memref.load %arg6[%c0_20, %c0_21] : memref<1x1xf32, #tpu.memory_space<smem>>
    %49 = vector.broadcast %48 : f32 to vector<256x1xf32>
    %50 = arith.addf %47, %49 : vector<256x1xf32>
    %51 = arith.negf %50 : vector<256x1xf32>
    %52 = math.exp %51 : vector<256x1xf32>
    %cst_22 = arith.constant 1.000000e+00 : f32
    %53 = vector.broadcast %cst_22 : f32 to vector<256x1xf32>
    %54 = arith.addf %53, %52 : vector<256x1xf32>
    %55 = arith.divf %53, %54 : vector<256x1xf32>
    %56 = vector.broadcast %55 : vector<256x1xf32> to vector<256x128xf32>
    %57 = arith.mulf %42, %56 : vector<256x128xf32>
    %58 = arith.truncf %57 : vector<256x128xf32> to vector<256x128xbf16>
    %cst_23 = arith.constant dense<0.000000e+00> : vector<304x128xf32>
    %59 = tpu.matmul %1, %58, %cst_23 {dimension_numbers = #tpu.dot_dimension_numbers<[1], [0], [0], [1], [0, 0, 1, 1], [], []>} : vector<304x256xbf16>, vector<256x128xbf16>, vector<304x128xf32> -> vector<304x128xf32>
    %60 = tpu.reciprocal %6 {approx = true} : vector<304x1xf32> -> vector<304x1xf32>
    %61 = vector.broadcast %60 : vector<304x1xf32> to vector<304x128xf32>
    %62 = arith.mulf %59, %61 : vector<304x128xf32>
    %c0_24 = arith.constant 0 : index
    %c0_25 = arith.constant 0 : index
    %63 = vector.load %arg7[%c0_24, %c0_25] : memref<304x128xf32, #tpu.memory_space<vmem>>, vector<304x128xf32>
    tpu.vector_store %arg7[%c0_24, %c0_25], %62 {strides = array<i32>} : memref<304x128xf32, #tpu.memory_space<vmem>>, vector<304x128xf32>,
    return
  }
  func.func @transform_0(%arg0: i32) -> (i32, i32) {
    %c0_i32 = arith.constant 0 : i32
    %c0_i32_0 = arith.constant 0 : i32
    %c0_i32_1 = arith.constant 0 : i32
    return %c0_i32, %c0_i32_0 : i32, i32
  }
  func.func @transform_1(%arg0: i32) -> (i32, i32) {
    %c0_i32 = arith.constant 0 : i32
    %c0_i32_0 = arith.constant 0 : i32
    %c0_i32_1 = arith.constant 0 : i32
    return %c0_i32, %c0_i32_0 : i32, i32
  }
  func.func @transform_2(%arg0: i32) -> (i32, i32) {
    %c0_i32 = arith.constant 0 : i32
    %c0_i32_0 = arith.constant 0 : i32
    %c0_i32_1 = arith.constant 0 : i32
    return %c0_i32, %c0_i32_0 : i32, i32
  }
  func.func @transform_3(%arg0: i32) -> (i32, i32) {
    %c0_i32 = arith.constant 0 : i32
    %c0_i32_0 = arith.constant 0 : i32
    %c0_i32_1 = arith.constant 0 : i32
    return %c0_i32, %c0_i32_0 : i32, i32
  }
  func.func @transform_4(%arg0: i32) -> (i32, i32) {
    %c0_i32 = arith.constant 0 : i32
    %c0_i32_0 = arith.constant 0 : i32
    %c0_i32_1 = arith.constant 0 : i32
    return %c0_i32, %c0_i32_0 : i32, i32
  }
  func.func @transform_5(%arg0: i32) -> (i32, i32) {
    %c0_i32 = arith.constant 0 : i32
    %c0_i32_0 = arith.constant 0 : i32
    %c0_i32_1 = arith.constant 0 : i32
    return %c0_i32, %c0_i32_0 : i32, i32
  }
  func.func @transform_6(%arg0: i32) -> (i32, i32) {
    %c0_i32 = arith.constant 0 : i32
    %c0_i32_0 = arith.constant 0 : i32
    %c0_i32_1 = arith.constant 0 : i32
    return %c0_i32, %c0_i32_0 : i32, i32
  }
}

</mosaic_0001>

<llo_original>
// kernel: tpu_custom_call.1
$region0: #{tpu_custom_call.1}
  #allocation0 [shape = 'u32[]', space=smem, size = 0x4, offset = 0x4, fixed_abs, tag = 'smem constant byte address 0x4 - core index']
  #allocation1 [shape = 'u32[144,128]{1,0:T(1,128)}', space=vmem, size = 0x12000, scoped, tag = 'internal scratch']
  #allocation2 [shape = 'f32[1,1]{1,0:T(1,128)S(6)}', space=smem, size = 0x200, scoped, tag = 'scoped memory for tpu_custom_call.1']
  %s0 = inlined_call_operand.vmem [shape: s8[304,256], index: 0, kind: input, shape index: {}]
  %s1 = inlined_call_operand.vmem [shape: bf16[304,16], index: 1, kind: input, shape index: {}]
  %s2 = inlined_call_operand.vmem [shape: bf16[16,128], index: 2, kind: input, shape index: {}]
  %s3 = inlined_call_operand.vmem [shape: f32[1,128], index: 3, kind: input, shape index: {}]
  %s4 = inlined_call_operand.vmem [shape: f32[1,128], index: 4, kind: input, shape index: {}]
  %s5 = inlined_call_operand.<no memory space> [shape: f32[1,1], index: 5, kind: input, shape index: {}]
  %s6 = inlined_call_operand.hbm [shape: f32[304,128], index: 6, kind: output, shape index: {}]
  %s7 = sld [smem:[#allocation0]]
  $region34: #{tpu_custom_call.1} parent=0
    _
  %s9 = ssub.s32 1, %s7
  %s10 = scalar_select 0, %s9, %s7
  %11 = sst [smem:[#allocation2]] %s5
  $region1: #{tpu_custom_call.1} parent=0
    #allocation3 [shape = 'u8[155648]{0}', space=vmem, size = 0x26000, scoped, tag = 'output window, operand 0, single buffered']
    #allocation4 [shape = 's32[1]{0}', space=sflag, size = 0x4, scoped, tag = 'scoped memory for tpu_custom_call.1']
    %12 = vsyncpa [#allocation4], 0
    // Predicated region
    $region2: #{tpu_custom_call.1} parent=1 // pred_check
      _
    $region3: #{tpu_custom_call.1} parent=1 // pred_check_branch
      %14 = sbr.rel (0) target = $region5
    $region4: #{tpu_custom_call.1} parent=1 // pred_region
      _
    $region5: #{tpu_custom_call.1} parent=1 // pred_fallthru
      _
    // Predicated region
    $region6: #{tpu_custom_call.1} parent=1 // pred_check
      _
    $region7: #{tpu_custom_call.1} parent=1 // pred_check_branch
      %16 = sbr.rel (0) target = $region9
    $region8: #{tpu_custom_call.1} parent=1 // pred_region
      _
    $region9: #{tpu_custom_call.1} parent=1 // pred_fallthru
      _
    // Predicated region
    $region10: #{tpu_custom_call.1} parent=1 // pred_check
      _
    $region11: #{tpu_custom_call.1} parent=1 // pred_check_branch
      %18 = sbr.rel (0) target = $region13
    $region12: #{tpu_custom_call.1} parent=1 // pred_region
      _
    $region13: #{tpu_custom_call.1} parent=1 // pred_fallthru
      _
    // Predicated region
    $region14: #{tpu_custom_call.1} parent=1 // pred_check
      _
    $region15: #{tpu_custom_call.1} parent=1 // pred_check_branch
      %20 = sbr.rel (0) target = $region17
    $region16: #{tpu_custom_call.1} parent=1 // pred_region
      _
    $region17: #{tpu_custom_call.1} parent=1 // pred_fallthru
      _
    // Predicated region
    $region18: #{tpu_custom_call.1} parent=1 // pred_check
      _
    $region19: #{tpu_custom_call.1} parent=1 // pred_check_branch
      %22 = sbr.rel (0) target = $region21
    $region20: #{tpu_custom_call.1} parent=1 // pred_region
      _
    $region21: #{tpu_custom_call.1} parent=1 // pred_fallthru
      _
    // Predicated region
    $region22: #{tpu_custom_call.1} parent=1 // pred_check
      _
    $region23: #{tpu_custom_call.1} parent=1 // pred_check_branch
      %24 = sbr.rel (0) target = $region25
    $region24: #{tpu_custom_call.1} parent=1 // pred_region
      _
    $region25: #{tpu_custom_call.1} parent=1 // pred_fallthru
      _
    %v26 = vld [vmem:[%s0] sm:$0xf]
    %v27 = vld [vmem:[%s0 + $0x4] sm:$0xf]
    %v28 = vld [vmem:[%s0 + $0x8] sm:$0xf]
    %v29 = vld [vmem:[%s0 + $0xc] sm:$0xf]
    %v30 = vld [vmem:[%s0 + $0x10] sm:$0xf]
    %v31 = vld [vmem:[%s0 + $0x14] sm:$0xf]
    %v32 = vld [vmem:[%s0 + $0x18] sm:$0xf]
    %v33 = vld [vmem:[%s0 + $0x1c] sm:$0xf]
    %v34 = vld [vmem:[%s0 + $0x20] sm:$0xf]
    %v35 = vld [vmem:[%s0 + $0x24] sm:$0xf]
    %v36 = vld [vmem:[%s0 + $0x28] sm:$0xf]
    %v37 = vld [vmem:[%s0 + $0x2c] sm:$0xf]
    %v38 = vld [vmem:[%s0 + $0x30] sm:$0xf]
    %v39 = vld [vmem:[%s0 + $0x34] sm:$0xf]
    %v40 = vld [vmem:[%s0 + $0x38] sm:$0xf]
    %v41 = vld [vmem:[%s0 + $0x3c] sm:$0xf]
    %v42 = vld [vmem:[%s0 + $0x40] sm:$0xf]
    %v43 = vld [vmem:[%s0 + $0x44] sm:$0xf]
    %v44 = vld [vmem:[%s0 + $0x48] sm:$0xf]
    %v45 = vld [vmem:[%s0 + $0x4c] sm:$0xf]
    %v46 = vld [vmem:[%s0 + $0x50] sm:$0xf]
    %v47 = vld [vmem:[%s0 + $0x54] sm:$0xf]
    %v48 = vld [vmem:[%s0 + $0x58] sm:$0xf]
    %v49 = vld [vmem:[%s0 + $0x5c] sm:$0xf]
    %v50 = vld [vmem:[%s0 + $0x60] sm:$0xf]
    %v51 = vld [vmem:[%s0 + $0x64] sm:$0xf]
    %v52 = vld [vmem:[%s0 + $0x68] sm:$0xf]
    %v53 = vld [vmem:[%s0 + $0x6c] sm:$0xf]
    %v54 = vld [vmem:[%s0 + $0x70] sm:$0xf]
    %v55 = vld [vmem:[%s0 + $0x74] sm:$0xf]
    %v56 = vld [vmem:[%s0 + $0x78] sm:$0xf]
    %v57 = vld [vmem:[%s0 + $0x7c] sm:$0xf]
    %v58 = vld [vmem:[%s0 + $0x80] sm:$0xf]
    %v59 = vld [vmem:[%s0 + $0x84] sm:$0xf]
    %v60 = vld [vmem:[%s0 + $0x88] sm:$0xf]
    %v61 = vld [vmem:[%s0 + $0x8c] sm:$0xf]
    %v62 = vld [vmem:[%s0 + $0x90] sm:$0xf]
    %v63 = vld [vmem:[%s0 + $0x94] sm:$0xf]
    %v64 = vunpack.c.l.s8.bf16 %v26
    %v65 = vunpack.c.l.s8.bf16 %v27
    %v66 = vunpack.c.l.s8.bf16 %v28
    %v67 = vunpack.c.l.s8.bf16 %v29
    %v68 = vunpack.c.l.s8.bf16 %v30
    %v69 = vunpack.c.l.s8.bf16 %v31
    %v70 = vunpack.c.l.s8.bf16 %v32
    %v71 = vunpack.c.l.s8.bf16 %v33
    %v72 = vunpack.c.l.s8.bf16 %v34
    %v73 = vunpack.c.l.s8.bf16 %v35
    %v74 = vunpack.c.l.s8.bf16 %v36
    %v75 = vunpack.c.l.s8.bf16 %v37
    %v76 = vunpack.c.l.s8.bf16 %v38
    %v77 = vunpack.c.l.s8.bf16 %v39
    %v78 = vunpack.c.l.s8.bf16 %v40
    %v79 = vunpack.c.l.s8.bf16 %v41
    %v80 = vunpack.c.l.s8.bf16 %v42
    %v81 = vunpack.c.l.s8.bf16 %v43
    %v82 = vunpack.c.l.s8.bf16 %v44
    %v83 = vunpack.c.l.s8.bf16 %v45
    %v84 = vunpack.c.l.s8.bf16 %v46
    %v85 = vunpack.c.l.s8.bf16 %v47
    %v86 = vunpack.c.l.s8.bf16 %v48
    %v87 = vunpack.c.l.s8.bf16 %v49
    %v88 = vunpack.c.l.s8.bf16 %v50
    %v89 = vunpack.c.l.s8.bf16 %v51
    %v90 = vunpack.c.l.s8.bf16 %v52
    %v91 = vunpack.c.l.s8.bf16 %v53
    %v92 = vunpack.c.l.s8.bf16 %v54
    %v93 = vunpack.c.l.s8.bf16 %v55
    %v94 = vunpack.c.l.s8.bf16 %v56
    %v95 = vunpack.c.l.s8.bf16 %v57
    %v96 = vunpack.c.l.s8.bf16 %v58
    %v97 = vunpack.c.l.s8.bf16 %v59
    %v98 = vunpack.c.l.s8.bf16 %v60
    %v99 = vunpack.c.l.s8.bf16 %v61
    %v100 = vunpack.c.l.s8.bf16 %v62
    %v101 = vunpack.c.l.s8.bf16 %v63
    %v102 = vunpack.c.l.bf16 %v64
    %v103 = vunpack.c.h.bf16 %v64
    %v104 = vunpack.c.l.bf16 %v65
    %v105 = vunpack.c.h.bf16 %v65
    %v106 = vunpack.c.l.bf16 %v66
    %v107 = vunpack.c.h.bf16 %v66
    %v108 = vunpack.c.l.bf16 %v67
    %v109 = vunpack.c.h.bf16 %v67
    %v110 = vunpack.c.l.bf16 %v68
    %v111 = vunpack.c.h.bf16 %v68
    %v112 = vunpack.c.l.bf16 %v69
    %v113 = vunpack.c.h.bf16 %v69
    %v114 = vunpack.c.l.bf16 %v70
    %v115 = vunpack.c.h.bf16 %v70
    %v116 = vunpack.c.l.bf16 %v71
    %v117 = vunpack.c.h.bf16 %v71
    %v118 = vunpack.c.l.bf16 %v72
    %v119 = vunpack.c.h.bf16 %v72
    %v120 = vunpack.c.l.bf16 %v73
    %v121 = vunpack.c.h.bf16 %v73
    %v122 = vunpack.c.l.bf16 %v74
    %v123 = vunpack.c.h.bf16 %v74
    %v124 = vunpack.c.l.bf16 %v75
    %v125 = vunpack.c.h.bf16 %v75
    %v126 = vunpack.c.l.bf16 %v76
    %v127 = vunpack.c.h.bf16 %v76
    %v128 = vunpack.c.l.bf16 %v77
    %v129 = vunpack.c.h.bf16 %v77
    %v130 = vunpack.c.l.bf16 %v78
    %v131 = vunpack.c.h.bf16 %v78
    %v132 = vunpack.c.l.bf16 %v79
    %v133 = vunpack.c.h.bf16 %v79
    %v134 = vunpack.c.l.bf16 %v80
    %v135 = vunpack.c.h.bf16 %v80
    %v136 = vunpack.c.l.bf16 %v81
    %v137 = vunpack.c.h.bf16 %v81
    %v138 = vunpack.c.l.bf16 %v82
    %v139 = vunpack.c.h.bf16 %v82
    %v140 = vunpack.c.l.bf16 %v83
    %v141 = vunpack.c.h.bf16 %v83
    %v142 = vunpack.c.l.bf16 %v84
    %v143 = vunpack.c.h.bf16 %v84
    %v144 = vunpack.c.l.bf16 %v85
    %v145 = vunpack.c.h.bf16 %v85
    %v146 = vunpack.c.l.bf16 %v86
    %v147 = vunpack.c.h.bf16 %v86
    %v148 = vunpack.c.l.bf16 %v87
    %v149 = vunpack.c.h.bf16 %v87
    %v150 = vunpack.c.l.bf16 %v88
    %v151 = vunpack.c.h.bf16 %v88
    %v152 = vunpack.c.l.bf16 %v89
    %v153 = vunpack.c.h.bf16 %v89
    %v154 = vunpack.c.l.bf16 %v90
    %v155 = vunpack.c.h.bf16 %v90
    %v156 = vunpack.c.l.bf16 %v91
    %v157 = vunpack.c.h.bf16 %v91
    %v158 = vunpack.c.l.bf16 %v92
    %v159 = vunpack.c.h.bf16 %v92
    %v160 = vunpack.c.l.bf16 %v93
    %v161 = vunpack.c.h.bf16 %v93
    %v162 = vunpack.c.l.bf16 %v94
    %v163 = vunpack.c.h.bf16 %v94
    %v164 = vunpack.c.l.bf16 %v95
    %v165 = vunpack.c.h.bf16 %v95
    %v166 = vunpack.c.l.bf16 %v96
    %v167 = vunpack.c.h.bf16 %v96
    %v168 = vunpack.c.l.bf16 %v97
    %v169 = vunpack.c.h.bf16 %v97
    %v170 = vunpack.c.l.bf16 %v98
    %v171 = vunpack.c.h.bf16 %v98
    %v172 = vunpack.c.l.bf16 %v99
    %v173 = vunpack.c.h.bf16 %v99
    %v174 = vunpack.c.l.bf16 %v100
    %v175 = vunpack.c.h.bf16 %v100
    %v176 = vunpack.c.l.bf16 %v101
    %v177 = vunpack.c.h.bf16 %v101
    %v178 = vadd.f32 %v102, %v103
    %179 = vadd.xlane.f32.xlu0 %v178
    %v180 = vpop.xlane.xlu0 %179
    %v181 = vadd.f32 %v104, %v105
    %182 = vadd.xlane.f32.xlu0 %v181
    %v183 = vpop.xlane.xlu0 %182
    %v184 = vadd.f32 %v106, %v107
    %185 = vadd.xlane.f32.xlu0 %v184
    %v186 = vpop.xlane.xlu0 %185
    %v187 = vadd.f32 %v108, %v109
    %188 = vadd.xlane.f32.xlu0 %v187
    %v189 = vpop.xlane.xlu0 %188
    %v190 = vadd.f32 %v110, %v111
    %191 = vadd.xlane.f32.xlu0 %v190
    %v192 = vpop.xlane.xlu0 %191
    %v193 = vadd.f32 %v112, %v113
    %194 = vadd.xlane.f32.xlu0 %v193
    %v195 = vpop.xlane.xlu0 %194
    %v196 = vadd.f32 %v114, %v115
    %197 = vadd.xlane.f32.xlu0 %v196
    %v198 = vpop.xlane.xlu0 %197
    %v199 = vadd.f32 %v116, %v117
    %200 = vadd.xlane.f32.xlu0 %v199
    %v201 = vpop.xlane.xlu0 %200
    %v202 = vadd.f32 %v118, %v119
    %203 = vadd.xlane.f32.xlu0 %v202
    %v204 = vpop.xlane.xlu0 %203
    %v205 = vadd.f32 %v120, %v121
    %206 = vadd.xlane.f32.xlu0 %v205
    %v207 = vpop.xlane.xlu0 %206
    %v208 = vadd.f32 %v122, %v123
    %209 = vadd.xlane.f32.xlu0 %v208
    %v210 = vpop.xlane.xlu0 %209
    %v211 = vadd.f32 %v124, %v125
    %212 = vadd.xlane.f32.xlu0 %v211
    %v213 = vpop.xlane.xlu0 %212
    %v214 = vadd.f32 %v126, %v127
    %215 = vadd.xlane.f32.xlu0 %v214
    %v216 = vpop.xlane.xlu0 %215
    %v217 = vadd.f32 %v128, %v129
    %218 = vadd.xlane.f32.xlu0 %v217
    %v219 = vpop.xlane.xlu0 %218
    %v220 = vadd.f32 %v130, %v131
    %221 = vadd.xlane.f32.xlu0 %v220
    %v222 = vpop.xlane.xlu0 %221
    %v223 = vadd.f32 %v132, %v133
    %224 = vadd.xlane.f32.xlu0 %v223
    %v225 = vpop.xlane.xlu0 %224
    %v226 = vadd.f32 %v134, %v135
    %227 = vadd.xlane.f32.xlu0 %v226
    %v228 = vpop.xlane.xlu0 %227
    %v229 = vadd.f32 %v136, %v137
    %230 = vadd.xlane.f32.xlu0 %v229
    %v231 = vpop.xlane.xlu0 %230
    %v232 = vadd.f32 %v138, %v139
    %233 = vadd.xlane.f32.xlu0 %v232
    %v234 = vpop.xlane.xlu0 %233
    %v235 = vadd.f32 %v140, %v141
    %236 = vadd.xlane.f32.xlu0 %v235
    %v237 = vpop.xlane.xlu0 %236
    %v238 = vadd.f32 %v142, %v143
    %239 = vadd.xlane.f32.xlu0 %v238
    %v240 = vpop.xlane.xlu0 %239
    %v241 = vadd.f32 %v144, %v145
    %242 = vadd.xlane.f32.xlu0 %v241
    %v243 = vpop.xlane.xlu0 %242
    %v244 = vadd.f32 %v146, %v147
    %245 = vadd.xlane.f32.xlu0 %v244
    %v246 = vpop.xlane.xlu0 %245
    %v247 = vadd.f32 %v148, %v149
    %248 = vadd.xlane.f32.xlu0 %v247
    %v249 = vpop.xlane.xlu0 %248
    %v250 = vadd.f32 %v150, %v151
    %251 = vadd.xlane.f32.xlu0 %v250
    %v252 = vpop.xlane.xlu0 %251
    %v253 = vadd.f32 %v152, %v153
    %254 = vadd.xlane.f32.xlu0 %v253
    %v255 = vpop.xlane.xlu0 %254
    %v256 = vadd.f32 %v154, %v155
    %257 = vadd.xlane.f32.xlu0 %v256
    %v258 = vpop.xlane.xlu0 %257
    %v259 = vadd.f32 %v156, %v157
    %260 = vadd.xlane.f32.xlu0 %v259
    %v261 = vpop.xlane.xlu0 %260
    %v262 = vadd.f32 %v158, %v159
    %263 = vadd.xlane.f32.xlu0 %v262
    %v264 = vpop.xlane.xlu0 %263
    %v265 = vadd.f32 %v160, %v161
    %266 = vadd.xlane.f32.xlu0 %v265
    %v267 = vpop.xlane.xlu0 %266
    %v268 = vadd.f32 %v162, %v163
    %269 = vadd.xlane.f32.xlu0 %v268
    %v270 = vpop.xlane.xlu0 %269
    %v271 = vadd.f32 %v164, %v165
    %272 = vadd.xlane.f32.xlu0 %v271
    %v273 = vpop.xlane.xlu0 %272
    %v274 = vadd.f32 %v166, %v167
    %275 = vadd.xlane.f32.xlu0 %v274
    %v276 = vpop.xlane.xlu0 %275
    %v277 = vadd.f32 %v168, %v169
    %278 = vadd.xlane.f32.xlu0 %v277
    %v279 = vpop.xlane.xlu0 %278
    %v280 = vadd.f32 %v170, %v171
    %281 = vadd.xlane.f32.xlu0 %v280
    %v282 = vpop.xlane.xlu0 %281
    %v283 = vadd.f32 %v172, %v173
    %284 = vadd.xlane.f32.xlu0 %v283
    %v285 = vpop.xlane.xlu0 %284
    %v286 = vadd.f32 %v174, %v175
    %287 = vadd.xlane.f32.xlu0 %v286
    %v288 = vpop.xlane.xlu0 %287
    %v289 = vadd.f32 %v176, %v177
    %290 = vadd.xlane.f32.xlu0 %v289
    %v291 = vpop.xlane.xlu0 %290
    %v292 = vmax.f32 %v180, 1.0
    %v293 = vmax.f32 %v183, 1.0
    %v294 = vmax.f32 %v186, 1.0
    %v295 = vmax.f32 %v189, 1.0
    %v296 = vmax.f32 %v192, 1.0
    %v297 = vmax.f32 %v195, 1.0
    %v298 = vmax.f32 %v198, 1.0
    %v299 = vmax.f32 %v201, 1.0
    %v300 = vmax.f32 %v204, 1.0
    %v301 = vmax.f32 %v207, 1.0
    %v302 = vmax.f32 %v210, 1.0
    %v303 = vmax.f32 %v213, 1.0
    %v304 = vmax.f32 %v216, 1.0
    %v305 = vmax.f32 %v219, 1.0
    %v306 = vmax.f32 %v222, 1.0
    %v307 = vmax.f32 %v225, 1.0
    %v308 = vmax.f32 %v228, 1.0
    %v309 = vmax.f32 %v231, 1.0
    %v310 = vmax.f32 %v234, 1.0
    %v311 = vmax.f32 %v237, 1.0
    %v312 = vmax.f32 %v240, 1.0
    %v313 = vmax.f32 %v243, 1.0
    %v314 = vmax.f32 %v246, 1.0
    %v315 = vmax.f32 %v249, 1.0
    %v316 = vmax.f32 %v252, 1.0
    %v317 = vmax.f32 %v255, 1.0
    %v318 = vmax.f32 %v258, 1.0
    %v319 = vmax.f32 %v261, 1.0
    %v320 = vmax.f32 %v264, 1.0
    %v321 = vmax.f32 %v267, 1.0
    %v322 = vmax.f32 %v270, 1.0
    %v323 = vmax.f32 %v273, 1.0
    %v324 = vmax.f32 %v276, 1.0
    %v325 = vmax.f32 %v279, 1.0
    %v326 = vmax.f32 %v282, 1.0
    %v327 = vmax.f32 %v285, 1.0
    %v328 = vmax.f32 %v288, 1.0
    %v329 = vmax.f32 %v291, 1.0
    %v330 = vrsqrt.pop %v292
    %v331 = vrsqrt.pop %v293
    %v332 = vrsqrt.pop %v294
    %v333 = vrsqrt.pop %v295
    %v334 = vrsqrt.pop %v296
    %v335 = vrsqrt.pop %v297
    %v336 = vrsqrt.pop %v298
    %v337 = vrsqrt.pop %v299
    %v338 = vrsqrt.pop %v300
    %v339 = vrsqrt.pop %v301
    %v340 = vrsqrt.pop %v302
    %v341 = vrsqrt.pop %v303
    %v342 = vrsqrt.pop %v304
    %v343 = vrsqrt.pop %v305
    %v344 = vrsqrt.pop %v306
    %v345 = vrsqrt.pop %v307
    %v346 = vrsqrt.pop %v308
    %v347 = vrsqrt.pop %v309
    %v348 = vrsqrt.pop %v310
    %v349 = vrsqrt.pop %v311
    %v350 = vrsqrt.pop %v312
    %v351 = vrsqrt.pop %v313
    %v352 = vrsqrt.pop %v314
    %v353 = vrsqrt.pop %v315
    %v354 = vrsqrt.pop %v316
    %v355 = vrsqrt.pop %v317
    %v356 = vrsqrt.pop %v318
    %v357 = vrsqrt.pop %v319
    %v358 = vrsqrt.pop %v320
    %v359 = vrsqrt.pop %v321
    %v360 = vrsqrt.pop %v322
    %v361 = vrsqrt.pop %v323
    %v362 = vrsqrt.pop %v324
    %v363 = vrsqrt.pop %v325
    %v364 = vrsqrt.pop %v326
    %v365 = vrsqrt.pop %v327
    %v366 = vrsqrt.pop %v328
    %v367 = vrsqrt.pop %v329
    %v368 = vld [vmem:[%s1] sm:$0xf]
    %v369 = vld [vmem:[%s1 + $0x4] sm:$0xf]
    %v370 = vld [vmem:[%s1 + $0x8] sm:$0xf]
    %v371 = vld [vmem:[%s1 + $0xc] sm:$0xf]
    %v372 = vld [vmem:[%s1 + $0x10] sm:$0xf]
    %v373 = vld [vmem:[%s1 + $0x14] sm:$0xf]
    %v374 = vld [vmem:[%s1 + $0x18] sm:$0xf]
    %v375 = vld [vmem:[%s1 + $0x1c] sm:$0xf]
    %v376 = vld [vmem:[%s1 + $0x20] sm:$0xf]
    %v377 = vld [vmem:[%s1 + $0x24] sm:$0xf]
    %v378 = vld [vmem:[%s1 + $0x28] sm:$0xf]
    %v379 = vld [vmem:[%s1 + $0x2c] sm:$0xf]
    %v380 = vld [vmem:[%s1 + $0x30] sm:$0xf]
    %v381 = vld [vmem:[%s1 + $0x34] sm:$0xf]
    %v382 = vld [vmem:[%s1 + $0x38] sm:$0xf]
    %v383 = vld [vmem:[%s1 + $0x3c] sm:$0xf]
    %v384 = vld [vmem:[%s1 + $0x40] sm:$0xf]
    %v385 = vld [vmem:[%s1 + $0x44] sm:$0xf]
    %v386 = vld [vmem:[%s1 + $0x48] sm:$0xf]
    %v387 = vld [vmem:[%s1 + $0x4c] sm:$0xf]
    %v388 = vld [vmem:[%s1 + $0x50] sm:$0xf]
    %v389 = vld [vmem:[%s1 + $0x54] sm:$0xf]
    %v390 = vld [vmem:[%s1 + $0x58] sm:$0xf]
    %v391 = vld [vmem:[%s1 + $0x5c] sm:$0xf]
    %v392 = vld [vmem:[%s1 + $0x60] sm:$0xf]
    %v393 = vld [vmem:[%s1 + $0x64] sm:$0xf]
    %v394 = vld [vmem:[%s1 + $0x68] sm:$0xf]
    %v395 = vld [vmem:[%s1 + $0x6c] sm:$0xf]
    %v396 = vld [vmem:[%s1 + $0x70] sm:$0xf]
    %v397 = vld [vmem:[%s1 + $0x74] sm:$0xf]
    %v398 = vld [vmem:[%s1 + $0x78] sm:$0xf]
    %v399 = vld [vmem:[%s1 + $0x7c] sm:$0xf]
    %v400 = vld [vmem:[%s1 + $0x80] sm:$0xf]
    %v401 = vld [vmem:[%s1 + $0x84] sm:$0xf]
    %v402 = vld [vmem:[%s1 + $0x88] sm:$0xf]
    %v403 = vld [vmem:[%s1 + $0x8c] sm:$0xf]
    %v404 = vld [vmem:[%s1 + $0x90] sm:$0xf]
    %v405 = vld [vmem:[%s1 + $0x94] sm:$0xf]
    %v406 = vld [vmem:[%s2] sm:$0xf]
    %v407 = vld [vmem:[%s2 + $0x4] sm:$0xf]
    %v408 = vld [vmem:[%s3] sm:$0x1]
    %v410 = vlaneseq
    %v411 = vshrl.u32 %v410, 7
    %v412 = vsub.s32 0, %v411
    %v413 = vrot.slane %v408, %v412
    %v453 = vunpack.c.l.b16 %v368
    %v454 = vunpack.c.l.b16 %v369
    %v455 = vunpack.c.l.b16 %v370
    %v456 = vunpack.c.l.b16 %v371
    %v457 = vunpack.c.l.b16 %v372
    %v458 = vunpack.c.l.b16 %v373
    %v459 = vunpack.c.l.b16 %v374
    %v460 = vunpack.c.l.b16 %v375
    %v461 = vunpack.c.l.b16 %v376
    %v462 = vunpack.c.l.b16 %v377
    %v463 = vunpack.c.l.b16 %v378
    %v464 = vunpack.c.l.b16 %v379
    %v465 = vunpack.c.l.b16 %v380
    %v466 = vunpack.c.l.b16 %v381
    %v467 = vunpack.c.l.b16 %v382
    %v468 = vunpack.c.l.b16 %v383
    %v469 = vunpack.c.l.b16 %v384
    %v470 = vunpack.c.l.b16 %v385
    %v471 = vunpack.c.l.b16 %v386
    %v472 = vunpack.c.l.b16 %v387
    %v473 = vunpack.c.l.b16 %v388
    %v474 = vunpack.c.l.b16 %v389
    %v475 = vunpack.c.l.b16 %v390
    %v476 = vunpack.c.l.b16 %v391
    %v477 = vunpack.c.l.b16 %v392
    %v478 = vunpack.c.l.b16 %v393
    %v479 = vunpack.c.l.b16 %v394
    %v480 = vunpack.c.l.b16 %v395
    %v481 = vunpack.c.l.b16 %v396
    %v482 = vunpack.c.l.b16 %v397
    %v483 = vunpack.c.l.b16 %v398
    %v484 = vunpack.c.l.b16 %v399
    %v485 = vunpack.c.l.b16 %v400
    %v486 = vunpack.c.l.b16 %v401
    %v487 = vunpack.c.l.b16 %v402
    %v488 = vunpack.c.l.b16 %v403
    %v489 = vunpack.c.l.b16 %v404
    %v490 = vunpack.c.l.b16 %v405
    %v491 = vpack.c.b16 %v454, %v453
    %v492 = vpack.c.b16 %v456, %v455
    %v493 = vpack.c.b16 %v458, %v457
    %v494 = vpack.c.b16 %v460, %v459
    %v495 = vpack.c.b16 %v462, %v461
    %v496 = vpack.c.b16 %v464, %v463
    %v497 = vpack.c.b16 %v466, %v465
    %v498 = vpack.c.b16 %v468, %v467
    %v499 = vpack.c.b16 %v470, %v469
    %v500 = vpack.c.b16 %v472, %v471
    %v501 = vpack.c.b16 %v474, %v473
    %v502 = vpack.c.b16 %v476, %v475
    %v503 = vpack.c.b16 %v478, %v477
    %v504 = vpack.c.b16 %v480, %v479
    %v505 = vpack.c.b16 %v482, %v481
    %v506 = vpack.c.b16 %v484, %v483
    %v507 = vpack.c.b16 %v486, %v485
    %v508 = vpack.c.b16 %v488, %v487
    %v509 = vpack.c.b16 %v490, %v489
    %v512 = vunpack.c.l.b16 %v406
    %v513 = vunpack.c.l.b16 %v407
    %v514 = vpack.c.b16 %v513, %v512
    %vm516 = vcmask 130048
    %v518 = vsel %vm516, %v491, 0
    %v521 = vsel %vm516, %v492, 0
    %v524 = vsel %vm516, %v493, 0
    %v527 = vsel %vm516, %v494, 0
    %v530 = vsel %vm516, %v495, 0
    %v533 = vsel %vm516, %v496, 0
    %v536 = vsel %vm516, %v497, 0
    %v539 = vsel %vm516, %v498, 0
    %v542 = vsel %vm516, %v499, 0
    %v545 = vsel %vm516, %v500, 0
    %v548 = vsel %vm516, %v501, 0
    %v551 = vsel %vm516, %v502, 0
    %v554 = vsel %vm516, %v503, 0
    %v557 = vsel %vm516, %v504, 0
    %v560 = vsel %vm516, %v505, 0
    %v563 = vsel %vm516, %v506, 0
    %v566 = vsel %vm516, %v507, 0
    %v569 = vsel %vm516, %v508, 0
    %v572 = vsel %vm516, %v509, 0
    %574 = vmatprep.subr.bf16.mxu0 0
    %575 = vmatpush1.bf16.msra.mxu0 %v514
    %576 = vmatprep.subr.bf16.mxu0 0
    %577 = vmatpush1.bf16.msra.mxu0 0
    %578 = vmatprep.subr.bf16.mxu0 0
    %579 = vmatpush1.bf16.msra.mxu0 0
    %580 = vmatprep.subr.bf16.mxu0 0
    %581 = vmatpush1.bf16.msra.mxu0 0
    %582 = vmatprep.subr.bf16.mxu0 0
    %583 = vmatpush1.bf16.msra.mxu0 0
    %584 = vmatprep.subr.bf16.mxu0 0
    %585 = vmatpush1.bf16.msra.mxu0 0
    %586 = vmatprep.subr.bf16.mxu0 0
    %587 = vmatpush1.bf16.msra.mxu0 0
    %588 = vmatprep.subr.bf16.mxu0 0
    %589 = vmatpush1.bf16.msra.mxu0 0
    %590 = vmatprep.subr.bf16.mxu0 0
    %591 = vmatpush1.bf16.msra.mxu0 0
    %592 = vmatprep.subr.bf16.mxu0 0
    %593 = vmatpush1.bf16.msra.mxu0 0
    %594 = vmatprep.subr.bf16.mxu0 0
    %595 = vmatpush1.bf16.msra.mxu0 0
    %596 = vmatprep.subr.bf16.mxu0 0
    %597 = vmatpush1.bf16.msra.mxu0 0
    %598 = vmatprep.subr.bf16.mxu0 0
    %599 = vmatpush1.bf16.msra.mxu0 0
    %600 = vmatprep.subr.bf16.mxu0 0
    %601 = vmatpush1.bf16.msra.mxu0 0
    %602 = vmatprep.subr.bf16.mxu0 0
    %603 = vmatpush1.bf16.msra.mxu0 0
    %604 = vmatprep.subr.bf16.mxu0 0
    %605 = vmatpush1.bf16.msra.mxu0 0
    %606 = vmatprep.mubr.bf16.mxu0 0
    %607 = vmatmul.mubr.bf16.gmra.mrb[0].mxu0 %v518
    %v608 = vpop.f32.mrb[0].mxu0
    %v609 = vadd.f32 %v413, %v608
    %v610 = vpop.f32.mrb[0].mxu0
    %v611 = vpop.f32.mrb[0].mxu0
    %v612 = vadd.f32 %v413, %v611
    %v613 = vpop.f32.mrb[0].mxu0
    %614 = vmatprep.mubr.bf16.mxu0 0
    %615 = vmatmul.mubr.bf16.gmra.mrb[0].mxu0 %v521
    %v616 = vpop.f32.mrb[0].mxu0
    %v617 = vadd.f32 %v413, %v616
    %v618 = vpop.f32.mrb[0].mxu0
    %v619 = vpop.f32.mrb[0].mxu0
    %v620 = vadd.f32 %v413, %v619
    %v621 = vpop.f32.mrb[0].mxu0
    %622 = vmatprep.mubr.bf16.mxu0 0
    %623 = vmatmul.mubr.bf16.gmra.mrb[0].mxu0 %v524
    %v624 = vpop.f32.mrb[0].mxu0
    %v625 = vadd.f32 %v413, %v624
    %v626 = vpop.f32.mrb[0].mxu0
    %v627 = vpop.f32.mrb[0].mxu0
    %v628 = vadd.f32 %v413, %v627
    %v629 = vpop.f32.mrb[0].mxu0
    %630 = vmatprep.mubr.bf16.mxu0 0
    %631 = vmatmul.mubr.bf16.gmra.mrb[0].mxu0 %v527
    %v632 = vpop.f32.mrb[0].mxu0
    %v633 = vadd.f32 %v413, %v632
    %v634 = vpop.f32.mrb[0].mxu0
    %v635 = vpop.f32.mrb[0].mxu0
    %v636 = vadd.f32 %v413, %v635
    %v637 = vpop.f32.mrb[0].mxu0
    %638 = vmatprep.mubr.bf16.mxu0 0
    %639 = vmatmul.mubr.bf16.gmra.mrb[0].mxu0 %v530
    %v640 = vpop.f32.mrb[0].mxu0
    %v641 = vadd.f32 %v413, %v640
    %v642 = vpop.f32.mrb[0].mxu0
    %v643 = vpop.f32.mrb[0].mxu0
    %v644 = vadd.f32 %v413, %v643
    %v645 = vpop.f32.mrb[0].mxu0
    %646 = vmatprep.mubr.bf16.mxu0 0
    %647 = vmatmul.mubr.bf16.gmra.mrb[0].mxu0 %v533
    %v648 = vpop.f32.mrb[0].mxu0
    %v649 = vadd.f32 %v413, %v648
    %v650 = vpop.f32.mrb[0].mxu0
    %v651 = vpop.f32.mrb[0].mxu0
    %v652 = vadd.f32 %v413, %v651
    %v653 = vpop.f32.mrb[0].mxu0
    %654 = vmatprep.mubr.bf16.mxu0 0
    %655 = vmatmul.mubr.bf16.gmra.mrb[0].mxu0 %v536
    %v656 = vpop.f32.mrb[0].mxu0
    %v657 = vadd.f32 %v413, %v656
    %v658 = vpop.f32.mrb[0].mxu0
    %v659 = vpop.f32.mrb[0].mxu0
    %v660 = vadd.f32 %v413, %v659
    %v661 = vpop.f32.mrb[0].mxu0
    %662 = vmatprep.mubr.bf16.mxu0 0
    %663 = vmatmul.mubr.bf16.gmra.mrb[0].mxu0 %v539
    %v664 = vpop.f32.mrb[0].mxu0
    %v665 = vadd.f32 %v413, %v664
    %v666 = vpop.f32.mrb[0].mxu0
    %v667 = vpop.f32.mrb[0].mxu0
    %v668 = vadd.f32 %v413, %v667
    %v669 = vpop.f32.mrb[0].mxu0
    %670 = vmatprep.mubr.bf16.mxu0 0
    %671 = vmatmul.mubr.bf16.gmra.mrb[0].mxu0 %v542
    %v672 = vpop.f32.mrb[0].mxu0
    %v673 = vadd.f32 %v413, %v672
    %v674 = vpop.f32.mrb[0].mxu0
    %v675 = vpop.f32.mrb[0].mxu0
    %v676 = vadd.f32 %v413, %v675
    %v677 = vpop.f32.mrb[0].mxu0
    %678 = vmatprep.mubr.bf16.mxu0 0
    %679 = vmatmul.mubr.bf16.gmra.mrb[0].mxu0 %v545
    %v680 = vpop.f32.mrb[0].mxu0
    %v681 = vadd.f32 %v413, %v680
    %v682 = vpop.f32.mrb[0].mxu0
    %v683 = vpop.f32.mrb[0].mxu0
    %v684 = vadd.f32 %v413, %v683
    %v685 = vpop.f32.mrb[0].mxu0
    %686 = vmatprep.mubr.bf16.mxu0 0
    %687 = vmatmul.mubr.bf16.gmra.mrb[0].mxu0 %v548
    %v688 = vpop.f32.mrb[0].mxu0
    %v689 = vadd.f32 %v413, %v688
    %v690 = vpop.f32.mrb[0].mxu0
    %v691 = vpop.f32.mrb[0].mxu0
    %v692 = vadd.f32 %v413, %v691
    %v693 = vpop.f32.mrb[0].mxu0
    %694 = vmatprep.mubr.bf16.mxu0 0
    %695 = vmatmul.mubr.bf16.gmra.mrb[0].mxu0 %v551
    %v696 = vpop.f32.mrb[0].mxu0
    %v697 = vadd.f32 %v413, %v696
    %v698 = vpop.f32.mrb[0].mxu0
    %v699 = vpop.f32.mrb[0].mxu0
    %v700 = vadd.f32 %v413, %v699
    %v701 = vpop.f32.mrb[0].mxu0
    %702 = vmatprep.mubr.bf16.mxu0 0
    %703 = vmatmul.mubr.bf16.gmra.mrb[0].mxu0 %v554
    %v704 = vpop.f32.mrb[0].mxu0
    %v705 = vadd.f32 %v413, %v704
    %v706 = vpop.f32.mrb[0].mxu0
    %v707 = vpop.f32.mrb[0].mxu0
    %v708 = vadd.f32 %v413, %v707
    %v709 = vpop.f32.mrb[0].mxu0
    %710 = vmatprep.mubr.bf16.mxu0 0
    %711 = vmatmul.mubr.bf16.gmra.mrb[0].mxu0 %v557
    %v712 = vpop.f32.mrb[0].mxu0
    %v713 = vadd.f32 %v413, %v712
    %v714 = vpop.f32.mrb[0].mxu0
    %v715 = vpop.f32.mrb[0].mxu0
    %v716 = vadd.f32 %v413, %v715
    %v717 = vpop.f32.mrb[0].mxu0
    %718 = vmatprep.mubr.bf16.mxu0 0
    %719 = vmatmul.mubr.bf16.gmra.mrb[0].mxu0 %v560
    %v720 = vpop.f32.mrb[0].mxu0
    %v721 = vadd.f32 %v413, %v720
    %v722 = vpop.f32.mrb[0].mxu0
    %v723 = vpop.f32.mrb[0].mxu0
    %v724 = vadd.f32 %v413, %v723
    %v725 = vpop.f32.mrb[0].mxu0
    %726 = vmatprep.mubr.bf16.mxu0 0
    %727 = vmatmul.mubr.bf16.gmra.mrb[0].mxu0 %v563
    %v728 = vpop.f32.mrb[0].mxu0
    %v729 = vadd.f32 %v413, %v728
    %v730 = vpop.f32.mrb[0].mxu0
    %v731 = vpop.f32.mrb[0].mxu0
    %v732 = vadd.f32 %v413, %v731
    %v733 = vpop.f32.mrb[0].mxu0
    %734 = vmatprep.mubr.bf16.mxu0 0
    %735 = vmatmul.mubr.bf16.gmra.mrb[0].mxu0 %v566
    %v736 = vpop.f32.mrb[0].mxu0
    %v737 = vadd.f32 %v413, %v736
    %v738 = vpop.f32.mrb[0].mxu0
    %v739 = vpop.f32.mrb[0].mxu0
    %v740 = vadd.f32 %v413, %v739
    %v741 = vpop.f32.mrb[0].mxu0
    %742 = vmatprep.mubr.bf16.mxu0 0
    %743 = vmatmul.mubr.bf16.gmra.mrb[0].mxu0 %v569
    %v744 = vpop.f32.mrb[0].mxu0
    %v745 = vadd.f32 %v413, %v744
    %v746 = vpop.f32.mrb[0].mxu0
    %v747 = vpop.f32.mrb[0].mxu0
    %v748 = vadd.f32 %v413, %v747
    %v749 = vpop.f32.mrb[0].mxu0
    %750 = vmatprep.mubr.bf16.mxu0 0
    %751 = vmatmul.mubr.bf16.gmra.mrb[0].mxu0 %v572
    %v752 = vpop.f32.mrb[0].mxu0
    %v753 = vadd.f32 %v413, %v752
    %v754 = vpop.f32.mrb[0].mxu0
    %v755 = vpop.f32.mrb[0].mxu0
    %v756 = vadd.f32 %v413, %v755
    %v757 = vpop.f32.mrb[0].mxu0
    %758 = vdwg.mxu0
    %v759 = vmul.f32 %v609, %v330
    %v760 = vmul.f32 %v612, %v331
    %v761 = vmul.f32 %v617, %v332
    %v762 = vmul.f32 %v620, %v333
    %v763 = vmul.f32 %v625, %v334
    %v764 = vmul.f32 %v628, %v335
    %v765 = vmul.f32 %v633, %v336
    %v766 = vmul.f32 %v636, %v337
    %v767 = vmul.f32 %v641, %v338
    %v768 = vmul.f32 %v644, %v339
    %v769 = vmul.f32 %v649, %v340
    %v770 = vmul.f32 %v652, %v341
    %v771 = vmul.f32 %v657, %v342
    %v772 = vmul.f32 %v660, %v343
    %v773 = vmul.f32 %v665, %v344
    %v774 = vmul.f32 %v668, %v345
    %v775 = vmul.f32 %v673, %v346
    %v776 = vmul.f32 %v676, %v347
    %v777 = vmul.f32 %v681, %v348
    %v778 = vmul.f32 %v684, %v349
    %v779 = vmul.f32 %v689, %v350
    %v780 = vmul.f32 %v692, %v351
    %v781 = vmul.f32 %v697, %v352
    %v782 = vmul.f32 %v700, %v353
    %v783 = vmul.f32 %v705, %v354
    %v784 = vmul.f32 %v708, %v355
    %v785 = vmul.f32 %v713, %v356
    %v786 = vmul.f32 %v716, %v357
    %v787 = vmul.f32 %v721, %v358
    %v788 = vmul.f32 %v724, %v359
    %v789 = vmul.f32 %v729, %v360
    %v790 = vmul.f32 %v732, %v361
    %v791 = vmul.f32 %v737, %v362
    %v792 = vmul.f32 %v740, %v363
    %v793 = vmul.f32 %v745, %v364
    %v794 = vmul.f32 %v748, %v365
    %v795 = vmul.f32 %v753, %v366
    %v796 = vmul.f32 %v756, %v367
    %v797 = vlaneseq
    %v798 = vand.u32 %v797, 127
    %vm799 = vcmp.eq.s32.totalorder %v798, 32
    %v800 = vsel %vm799, 1.0, %v759
    %v801 = vsel %vm799, 1.0, %v760
    %v802 = vsel %vm799, 1.0, %v761
    %v803 = vsel %vm799, 1.0, %v762
    %v804 = vsel %vm799, 1.0, %v763
    %v805 = vsel %vm799, 1.0, %v764
    %v806 = vsel %vm799, 1.0, %v765
    %v807 = vsel %vm799, 1.0, %v766
    %v808 = vsel %vm799, 1.0, %v767
    %v809 = vsel %vm799, 1.0, %v768
    %v810 = vsel %vm799, 1.0, %v769
    %v811 = vsel %vm799, 1.0, %v770
    %v812 = vsel %vm799, 1.0, %v771
    %v813 = vsel %vm799, 1.0, %v772
    %v814 = vsel %vm799, 1.0, %v773
    %v815 = vsel %vm799, 1.0, %v774
    %v816 = vsel %vm799, 1.0, %v775
    %v817 = vsel %vm799, 1.0, %v776
    %v818 = vsel %vm799, 1.0, %v777
    %v819 = vsel %vm799, 1.0, %v778
    %v820 = vsel %vm799, 1.0, %v779
    %v821 = vsel %vm799, 1.0, %v780
    %v822 = vsel %vm799, 1.0, %v781
    %v823 = vsel %vm799, 1.0, %v782
    %v824 = vsel %vm799, 1.0, %v783
    %v825 = vsel %vm799, 1.0, %v784
    %v826 = vsel %vm799, 1.0, %v785
    %v827 = vsel %vm799, 1.0, %v786
    %v828 = vsel %vm799, 1.0, %v787
    %v829 = vsel %vm799, 1.0, %v788
    %v830 = vsel %vm799, 1.0, %v789
    %v831 = vsel %vm799, 1.0, %v790
    %v832 = vsel %vm799, 1.0, %v791
    %v833 = vsel %vm799, 1.0, %v792
    %v834 = vsel %vm799, 1.0, %v793
    %v835 = vsel %vm799, 1.0, %v794
    %v836 = vsel %vm799, 1.0, %v795
    %v837 = vsel %vm799, 1.0, %v796
    %v838 = vpack.c.bf16 %v801, %v800
    %v839 = vpack.c.bf16 %v803, %v802
    %v840 = vpack.c.bf16 %v805, %v804
    %v841 = vpack.c.bf16 %v807, %v806
    %v842 = vpack.c.bf16 %v809, %v808
    %v843 = vpack.c.bf16 %v811, %v810
    %v844 = vpack.c.bf16 %v813, %v812
    %v845 = vpack.c.bf16 %v815, %v814
    %v846 = vpack.c.bf16 %v817, %v816
    %v847 = vpack.c.bf16 %v819, %v818
    %v848 = vpack.c.bf16 %v821, %v820
    %v849 = vpack.c.bf16 %v823, %v822
    %v850 = vpack.c.bf16 %v825, %v824
    %v851 = vpack.c.bf16 %v827, %v826
    %v852 = vpack.c.bf16 %v829, %v828
    %v853 = vpack.c.bf16 %v831, %v830
    %v854 = vpack.c.bf16 %v833, %v832
    %v855 = vpack.c.bf16 %v835, %v834
    %v856 = vpack.c.bf16 %v837, %v836
    %v895 = vunpack.c.l.b16 %v64
    %v896 = vunpack.c.h.b16 %v64
    %v897 = vunpack.c.l.b16 %v65
    %v898 = vunpack.c.h.b16 %v65
    %v899 = vunpack.c.l.b16 %v66
    %v900 = vunpack.c.h.b16 %v66
    %v901 = vunpack.c.l.b16 %v67
    %v902 = vunpack.c.h.b16 %v67
    %v903 = vunpack.c.l.b16 %v68
    %v904 = vunpack.c.h.b16 %v68
    %v905 = vunpack.c.l.b16 %v69
    %v906 = vunpack.c.h.b16 %v69
    %v907 = vunpack.c.l.b16 %v70
    %v908 = vunpack.c.h.b16 %v70
    %v909 = vunpack.c.l.b16 %v71
    %v910 = vunpack.c.h.b16 %v71
    %v911 = vunpack.c.l.b16 %v72
    %v912 = vunpack.c.h.b16 %v72
    %v913 = vunpack.c.l.b16 %v73
    %v914 = vunpack.c.h.b16 %v73
    %v915 = vunpack.c.l.b16 %v74
    %v916 = vunpack.c.h.b16 %v74
    %v917 = vunpack.c.l.b16 %v75
    %v918 = vunpack.c.h.b16 %v75
    %v919 = vunpack.c.l.b16 %v76
    %v920 = vunpack.c.h.b16 %v76
    %v921 = vunpack.c.l.b16 %v77
    %v922 = vunpack.c.h.b16 %v77
    %v923 = vunpack.c.l.b16 %v78
    %v924 = vunpack.c.h.b16 %v78
    %v925 = vunpack.c.l.b16 %v79
    %v926 = vunpack.c.h.b16 %v79
    %v927 = vunpack.c.l.b16 %v80
    %v928 = vunpack.c.h.b16 %v80
    %v929 = vunpack.c.l.b16 %v81
    %v930 = vunpack.c.h.b16 %v81
    %v931 = vunpack.c.l.b16 %v82
    %v932 = vunpack.c.h.b16 %v82
    %v933 = vunpack.c.l.b16 %v83
    %v934 = vunpack.c.h.b16 %v83
    %v935 = vunpack.c.l.b16 %v84
    %v936 = vunpack.c.h.b16 %v84
    %v937 = vunpack.c.l.b16 %v85
    %v938 = vunpack.c.h.b16 %v85
    %v939 = vunpack.c.l.b16 %v86
    %v940 = vunpack.c.h.b16 %v86
    %v941 = vunpack.c.l.b16 %v87
    %v942 = vunpack.c.h.b16 %v87
    %v943 = vunpack.c.l.b16 %v88
    %v944 = vunpack.c.h.b16 %v88
    %v945 = vunpack.c.l.b16 %v89
    %v946 = vunpack.c.h.b16 %v89
    %v947 = vunpack.c.l.b16 %v90
    %v948 = vunpack.c.h.b16 %v90
    %v949 = vunpack.c.l.b16 %v91
    %v950 = vunpack.c.h.b16 %v91
    %v951 = vunpack.c.l.b16 %v92
    %v952 = vunpack.c.h.b16 %v92
    %v953 = vunpack.c.l.b16 %v93
    %v954 = vunpack.c.h.b16 %v93
    %v955 = vunpack.c.l.b16 %v94
    %v956 = vunpack.c.h.b16 %v94
    %v957 = vunpack.c.l.b16 %v95
    %v958 = vunpack.c.h.b16 %v95
    %v959 = vunpack.c.l.b16 %v96
    %v960 = vunpack.c.h.b16 %v96
    %v961 = vunpack.c.l.b16 %v97
    %v962 = vunpack.c.h.b16 %v97
    %v963 = vunpack.c.l.b16 %v98
    %v964 = vunpack.c.h.b16 %v98
    %v965 = vunpack.c.l.b16 %v99
    %v966 = vunpack.c.h.b16 %v99
    %v967 = vunpack.c.l.b16 %v100
    %v968 = vunpack.c.h.b16 %v100
    %v969 = vunpack.c.l.b16 %v101
    %v970 = vunpack.c.h.b16 %v101
    %v971 = vpack.c.b16 %v897, %v895
    %v972 = vpack.c.b16 %v898, %v896
    %v973 = vpack.c.b16 %v901, %v899
    %v974 = vpack.c.b16 %v902, %v900
    %v975 = vpack.c.b16 %v905, %v903
    %v976 = vpack.c.b16 %v906, %v904
    %v977 = vpack.c.b16 %v909, %v907
    %v978 = vpack.c.b16 %v910, %v908
    %v979 = vpack.c.b16 %v913, %v911
    %v980 = vpack.c.b16 %v914, %v912
    %v981 = vpack.c.b16 %v917, %v915
    %v982 = vpack.c.b16 %v918, %v916
    %v983 = vpack.c.b16 %v921, %v919
    %v984 = vpack.c.b16 %v922, %v920
    %v985 = vpack.c.b16 %v925, %v923
    %v986 = vpack.c.b16 %v926, %v924
    %v987 = vpack.c.b16 %v929, %v927
    %v988 = vpack.c.b16 %v930, %v928
    %v989 = vpack.c.b16 %v933, %v931
    %v990 = vpack.c.b16 %v934, %v932
    %v991 = vpack.c.b16 %v937, %v935
    %v992 = vpack.c.b16 %v938, %v936
    %v993 = vpack.c.b16 %v941, %v939
    %v994 = vpack.c.b16 %v942, %v940
    %v995 = vpack.c.b16 %v945, %v943
    %v996 = vpack.c.b16 %v946, %v944
    %v997 = vpack.c.b16 %v949, %v947
    %v998 = vpack.c.b16 %v950, %v948
    %v999 = vpack.c.b16 %v953, %v951
    %v1000 = vpack.c.b16 %v954, %v952
    %v1001 = vpack.c.b16 %v957, %v955
    %v1002 = vpack.c.b16 %v958, %v956
    %v1003 = vpack.c.b16 %v961, %v959
    %v1004 = vpack.c.b16 %v962, %v960
    %v1005 = vpack.c.b16 %v965, %v963
    %v1006 = vpack.c.b16 %v966, %v964
    %v1007 = vpack.c.b16 %v969, %v967
    %v1008 = vpack.c.b16 %v970, %v968
    %1047 = vxpose.xlu0.c.b16.start [1/8] %v971, 128
    %1048 = vxpose.xlu0.c.b16.cont [2/8] %v973, 128
    %1049 = vxpose.xlu0.c.b16.cont [3/8] %v975, 128
    %1050 = vxpose.xlu0.c.b16.cont [4/8] %v977, 128
    %1051 = vxpose.xlu0.c.b16.cont [5/8] %v979, 128
    %1052 = vxpose.xlu0.c.b16.cont [6/8] %v981, 128
    %1053 = vxpose.xlu0.c.b16.cont [7/8] %v983, 128
    %1054 = vxpose.xlu0.c.b16.end [8/8] %v985, 128
    %v1055 = vpop.trf.xlu0
    %v1056 = vpop.trf.xlu0
    %v1057 = vpop.trf.xlu0
    %v1058 = vpop.trf.xlu0
    %v1059 = vpop.trf.xlu0
    %v1060 = vpop.trf.xlu0
    %v1061 = vpop.trf.xlu0
    %v1062 = vpop.trf.xlu0
    %1063 = vxpose.xlu0.c.b16.start [1/8] %v972, 128
    %1064 = vxpose.xlu0.c.b16.cont [2/8] %v974, 128
    %1065 = vxpose.xlu0.c.b16.cont [3/8] %v976, 128
    %1066 = vxpose.xlu0.c.b16.cont [4/8] %v978, 128
    %1067 = vxpose.xlu0.c.b16.cont [5/8] %v980, 128
    %1068 = vxpose.xlu0.c.b16.cont [6/8] %v982, 128
    %1069 = vxpose.xlu0.c.b16.cont [7/8] %v984, 128
    %1070 = vxpose.xlu0.c.b16.end [8/8] %v986, 128
    %v1071 = vpop.trf.xlu0
    %v1072 = vpop.trf.xlu0
    %v1073 = vpop.trf.xlu0
    %v1074 = vpop.trf.xlu0
    %v1075 = vpop.trf.xlu0
    %v1076 = vpop.trf.xlu0
    %v1077 = vpop.trf.xlu0
    %v1078 = vpop.trf.xlu0
    %1079 = vxpose.xlu0.c.b16.start [1/8] %v987, 128
    %1080 = vxpose.xlu0.c.b16.cont [2/8] %v989, 128
    %1081 = vxpose.xlu0.c.b16.cont [3/8] %v991, 128
    %1082 = vxpose.xlu0.c.b16.cont [4/8] %v993, 128
    %1083 = vxpose.xlu0.c.b16.cont [5/8] %v995, 128
    %1084 = vxpose.xlu0.c.b16.cont [6/8] %v997, 128
    %1085 = vxpose.xlu0.c.b16.cont [7/8] %v999, 128
    %1086 = vxpose.xlu0.c.b16.end [8/8] %v1001, 128
    %v1087 = vpop.trf.xlu0
    %v1088 = vpop.trf.xlu0
    %v1089 = vpop.trf.xlu0
    %v1090 = vpop.trf.xlu0
    %v1091 = vpop.trf.xlu0
    %v1092 = vpop.trf.xlu0
    %v1093 = vpop.trf.xlu0
    %v1094 = vpop.trf.xlu0
    %1095 = vxpose.xlu0.c.b16.start [1/8] %v988, 128
    %1096 = vxpose.xlu0.c.b16.cont [2/8] %v990, 128
    %1097 = vxpose.xlu0.c.b16.cont [3/8] %v992, 128
    %1098 = vxpose.xlu0.c.b16.cont [4/8] %v994, 128
    %1099 = vxpose.xlu0.c.b16.cont [5/8] %v996, 128
    %1100 = vxpose.xlu0.c.b16.cont [6/8] %v998, 128
    %1101 = vxpose.xlu0.c.b16.cont [7/8] %v1000, 128
    %1102 = vxpose.xlu0.c.b16.end [8/8] %v1002, 128
    %v1103 = vpop.trf.xlu0
    %v1104 = vpop.trf.xlu0
    %v1105 = vpop.trf.xlu0
    %v1106 = vpop.trf.xlu0
    %v1107 = vpop.trf.xlu0
    %v1108 = vpop.trf.xlu0
    %v1109 = vpop.trf.xlu0
    %v1110 = vpop.trf.xlu0
    %1111 = vxpose.xlu0.c.b16.start [1/8] %v1003, 128
    %1112 = vxpose.xlu0.c.b16.cont [2/8] %v1005, 128
    %1113 = vxpose.xlu0.c.b16.cont [3/8] %v1007, 128
    %1114 = vxpose.xlu0.c.b16.cont [4/8] 0, 128
    %1115 = vxpose.xlu0.c.b16.cont [5/8] 0, 128
    %1116 = vxpose.xlu0.c.b16.cont [6/8] 0, 128
    %1117 = vxpose.xlu0.c.b16.cont [7/8] 0, 128
    %1118 = vxpose.xlu0.c.b16.end [8/8] 0, 128
    %v1119 = vpop.trf.xlu0
    %v1120 = vpop.trf.xlu0
    %v1121 = vpop.trf.xlu0
    %v1122 = vpop.trf.xlu0
    %v1123 = vpop.trf.xlu0
    %v1124 = vpop.trf.xlu0
    %v1125 = vpop.trf.xlu0
    %v1126 = vpop.trf.xlu0
    %1127 = vxpose.xlu0.c.b16.start [1/8] %v1004, 128
    %1128 = vxpose.xlu0.c.b16.cont [2/8] %v1006, 128
    %1129 = vxpose.xlu0.c.b16.cont [3/8] %v1008, 128
    %1130 = vxpose.xlu0.c.b16.cont [4/8] 0, 128
    %1131 = vxpose.xlu0.c.b16.cont [5/8] 0, 128
    %1132 = vxpose.xlu0.c.b16.cont [6/8] 0, 128
    %1133 = vxpose.xlu0.c.b16.cont [7/8] 0, 128
    %1134 = vxpose.xlu0.c.b16.end [8/8] 0, 128
    %v1135 = vpop.trf.xlu0
    %v1136 = vpop.trf.xlu0
    %v1137 = vpop.trf.xlu0
    %v1138 = vpop.trf.xlu0
    %v1139 = vpop.trf.xlu0
    %v1140 = vpop.trf.xlu0
    %v1141 = vpop.trf.xlu0
    %v1142 = vpop.trf.xlu0
    %vm1143 = vcmask 392192
    %v1145 = vsel %vm1143, %v1119, 0
    %v1148 = vsel %vm1143, %v1120, 0
    %v1151 = vsel %vm1143, %v1121, 0
    %v1154 = vsel %vm1143, %v1122, 0
    %v1157 = vsel %vm1143, %v1123, 0
    %v1160 = vsel %vm1143, %v1124, 0
    %v1163 = vsel %vm1143, %v1125, 0
    %v1166 = vsel %vm1143, %v1126, 0
    %v1169 = vsel %vm1143, %v1135, 0
    %v1172 = vsel %vm1143, %v1136, 0
    %v1175 = vsel %vm1143, %v1137, 0
    %v1178 = vsel %vm1143, %v1138, 0
    %v1181 = vsel %vm1143, %v1139, 0
    %v1184 = vsel %vm1143, %v1140, 0
    %v1187 = vsel %vm1143, %v1141, 0
    %v1190 = vsel %vm1143, %v1142, 0
    %1192 = vmatprep.subr.bf16.mxu0 0
    %1193 = vmatpush1.bf16.msra.mxu0 %v838
    %1194 = vmatprep.subr.bf16.mxu0 0
    %1195 = vmatpush1.bf16.msra.mxu0 %v839
    %1196 = vmatprep.subr.bf16.mxu0 0
    %1197 = vmatpush1.bf16.msra.mxu0 %v840
    %1198 = vmatprep.subr.bf16.mxu0 0
    %1199 = vmatpush1.bf16.msra.mxu0 %v841
    %1200 = vmatprep.subr.bf16.mxu0 0
    %1201 = vmatpush1.bf16.msra.mxu0 %v842
    %1202 = vmatprep.subr.bf16.mxu0 0
    %1203 = vmatpush1.bf16.msra.mxu0 %v843
    %1204 = vmatprep.subr.bf16.mxu0 0
    %1205 = vmatpush1.bf16.msra.mxu0 %v844
    %1206 = vmatprep.subr.bf16.mxu0 0
    %1207 = vmatpush1.bf16.msra.mxu0 %v845
    %1208 = vmatprep.subr.bf16.mxu0 0
    %1209 = vmatpush1.bf16.msra.mxu0 %v846
    %1210 = vmatprep.subr.bf16.mxu0 0
    %1211 = vmatpush1.bf16.msra.mxu0 %v847
    %1212 = vmatprep.subr.bf16.mxu0 0
    %1213 = vmatpush1.bf16.msra.mxu0 %v848
    %1214 = vmatprep.subr.bf16.mxu0 0
    %1215 = vmatpush1.bf16.msra.mxu0 %v849
    %1216 = vmatprep.subr.bf16.mxu0 0
    %1217 = vmatpush1.bf16.msra.mxu0 %v850
    %1218 = vmatprep.subr.bf16.mxu0 0
    %1219 = vmatpush1.bf16.msra.mxu0 %v851
    %1220 = vmatprep.subr.bf16.mxu0 0
    %1221 = vmatpush1.bf16.msra.mxu0 %v852
    %1222 = vmatprep.subr.bf16.mxu0 0
    %1223 = vmatpush1.bf16.msra.mxu0 %v853
    %1224 = vmatprep.mubr.bf16.mxu0 %v1087
    %1225 = vmatmul.mubr.bf16.gmra.mrb[0].mxu0 %v1055
    %v1226 = vpop.f32.mrb[0].mxu0
    %v1227 = vadd.f32 0.0, %v1226
    %v1228 = vpop.f32.mrb[0].mxu0
    %v1229 = vpop.f32.mrb[0].mxu0
    %v1230 = vadd.f32 0.0, %v1229
    %v1231 = vpop.f32.mrb[0].mxu0
    %1232 = vmatprep.mubr.bf16.mxu0 %v1088
    %1233 = vmatmul.mubr.bf16.gmra.mrb[0].mxu0 %v1056
    %v1234 = vpop.f32.mrb[0].mxu0
    %v1235 = vadd.f32 0.0, %v1234
    %v1236 = vpop.f32.mrb[0].mxu0
    %v1237 = vpop.f32.mrb[0].mxu0
    %v1238 = vadd.f32 0.0, %v1237
    %v1239 = vpop.f32.mrb[0].mxu0
    %1240 = vmatprep.mubr.bf16.mxu0 %v1089
    %1241 = vmatmul.mubr.bf16.gmra.mrb[0].mxu0 %v1057
    %v1242 = vpop.f32.mrb[0].mxu0
    %v1243 = vadd.f32 0.0, %v1242
    %v1244 = vpop.f32.mrb[0].mxu0
    %v1245 = vpop.f32.mrb[0].mxu0
    %v1246 = vadd.f32 0.0, %v1245
    %v1247 = vpop.f32.mrb[0].mxu0
    %1248 = vmatprep.mubr.bf16.mxu0 %v1090
    %1249 = vmatmul.mubr.bf16.gmra.mrb[0].mxu0 %v1058
    %v1250 = vpop.f32.mrb[0].mxu0
    %v1251 = vadd.f32 0.0, %v1250
    %v1252 = vpop.f32.mrb[0].mxu0
    %v1253 = vpop.f32.mrb[0].mxu0
    %v1254 = vadd.f32 0.0, %v1253
    %v1255 = vpop.f32.mrb[0].mxu0
    %1256 = vmatprep.mubr.bf16.mxu0 %v1091
    %1257 = vmatmul.mubr.bf16.gmra.mrb[0].mxu0 %v1059
    %v1258 = vpop.f32.mrb[0].mxu0
    %v1259 = vadd.f32 0.0, %v1258
    %v1260 = vpop.f32.mrb[0].mxu0
    %v1261 = vpop.f32.mrb[0].mxu0
    %v1262 = vadd.f32 0.0, %v1261
    %v1263 = vpop.f32.mrb[0].mxu0
    %1264 = vmatprep.mubr.bf16.mxu0 %v1092
    %1265 = vmatmul.mubr.bf16.gmra.mrb[0].mxu0 %v1060
    %v1266 = vpop.f32.mrb[0].mxu0
    %v1267 = vadd.f32 0.0, %v1266
    %v1268 = vpop.f32.mrb[0].mxu0
    %v1269 = vpop.f32.mrb[0].mxu0
    %v1270 = vadd.f32 0.0, %v1269
    %v1271 = vpop.f32.mrb[0].mxu0
    %1272 = vmatprep.mubr.bf16.mxu0 %v1093
    %1273 = vmatmul.mubr.bf16.gmra.mrb[0].mxu0 %v1061
    %v1274 = vpop.f32.mrb[0].mxu0
    %v1275 = vadd.f32 0.0, %v1274
    %v1276 = vpop.f32.mrb[0].mxu0
    %v1277 = vpop.f32.mrb[0].mxu0
    %v1278 = vadd.f32 0.0, %v1277
    %v1279 = vpop.f32.mrb[0].mxu0
    %1280 = vmatprep.mubr.bf16.mxu0 %v1094
    %1281 = vmatmul.mubr.bf16.gmra.mrb[0].mxu0 %v1062
    %v1282 = vpop.f32.mrb[0].mxu0
    %v1283 = vadd.f32 0.0, %v1282
    %v1284 = vpop.f32.mrb[0].mxu0
    %v1285 = vpop.f32.mrb[0].mxu0
    %v1286 = vadd.f32 0.0, %v1285
    %v1287 = vpop.f32.mrb[0].mxu0
    %1288 = vmatprep.mubr.bf16.mxu0 %v1103
    %1289 = vmatmul.mubr.bf16.gmra.mrb[0].mxu0 %v1071
    %v1290 = vpop.f32.mrb[0].mxu0
    %v1291 = vadd.f32 0.0, %v1290
    %v1292 = vpop.f32.mrb[0].mxu0
    %v1293 = vpop.f32.mrb[0].mxu0
    %v1294 = vadd.f32 0.0, %v1293
    %v1295 = vpop.f32.mrb[0].mxu0
    %1296 = vmatprep.mubr.bf16.mxu0 %v1104
    %1297 = vmatmul.mubr.bf16.gmra.mrb[0].mxu0 %v1072
    %v1298 = vpop.f32.mrb[0].mxu0
    %v1299 = vadd.f32 0.0, %v1298
    %v1300 = vpop.f32.mrb[0].mxu0
    %v1301 = vpop.f32.mrb[0].mxu0
    %v1302 = vadd.f32 0.0, %v1301
    %v1303 = vpop.f32.mrb[0].mxu0
    %1304 = vmatprep.mubr.bf16.mxu0 %v1105
    %1305 = vmatmul.mubr.bf16.gmra.mrb[0].mxu0 %v1073
    %v1306 = vpop.f32.mrb[0].mxu0
    %v1307 = vadd.f32 0.0, %v1306
    %v1308 = vpop.f32.mrb[0].mxu0
    %v1309 = vpop.f32.mrb[0].mxu0
    %v1310 = vadd.f32 0.0, %v1309
    %v1311 = vpop.f32.mrb[0].mxu0
    %1312 = vmatprep.mubr.bf16.mxu0 %v1106
    %1313 = vmatmul.mubr.bf16.gmra.mrb[0].mxu0 %v1074
    %v1314 = vpop.f32.mrb[0].mxu0
    %v1315 = vadd.f32 0.0, %v1314
    %v1316 = vpop.f32.mrb[0].mxu0
    %v1317 = vpop.f32.mrb[0].mxu0
    %v1318 = vadd.f32 0.0, %v1317
    %v1319 = vpop.f32.mrb[0].mxu0
    %1320 = vmatprep.mubr.bf16.mxu0 %v1107
    %1321 = vmatmul.mubr.bf16.gmra.mrb[0].mxu0 %v1075
    %v1322 = vpop.f32.mrb[0].mxu0
    %v1323 = vadd.f32 0.0, %v1322
    %v1324 = vpop.f32.mrb[0].mxu0
    %v1325 = vpop.f32.mrb[0].mxu0
    %v1326 = vadd.f32 0.0, %v1325
    %v1327 = vpop.f32.mrb[0].mxu0
    %1328 = vmatprep.mubr.bf16.mxu0 %v1108
    %1329 = vmatmul.mubr.bf16.gmra.mrb[0].mxu0 %v1076
    %v1330 = vpop.f32.mrb[0].mxu0
    %v1331 = vadd.f32 0.0, %v1330
    %v1332 = vpop.f32.mrb[0].mxu0
    %v1333 = vpop.f32.mrb[0].mxu0
    %v1334 = vadd.f32 0.0, %v1333
    %v1335 = vpop.f32.mrb[0].mxu0
    %1336 = vmatprep.mubr.bf16.mxu0 %v1109
    %1337 = vmatmul.mubr.bf16.gmra.mrb[0].mxu0 %v1077
    %v1338 = vpop.f32.mrb[0].mxu0
    %v1339 = vadd.f32 0.0, %v1338
    %v1340 = vpop.f32.mrb[0].mxu0
    %v1341 = vpop.f32.mrb[0].mxu0
    %v1342 = vadd.f32 0.0, %v1341
    %v1343 = vpop.f32.mrb[0].mxu0
    %1344 = vmatprep.mubr.bf16.mxu0 %v1110
    %1345 = vmatmul.mubr.bf16.gmra.mrb[0].mxu0 %v1078
    %v1346 = vpop.f32.mrb[0].mxu0
    %v1347 = vadd.f32 0.0, %v1346
    %v1348 = vpop.f32.mrb[0].mxu0
    %v1349 = vpop.f32.mrb[0].mxu0
    %v1350 = vadd.f32 0.0, %v1349
    %v1351 = vpop.f32.mrb[0].mxu0
    %1352 = vdwg.mxu0
    %1353 = vmatprep.subr.bf16.mxu0 0
    %1354 = vmatpush1.bf16.msra.mxu0 %v854
    %1355 = vmatprep.subr.bf16.mxu0 0
    %1356 = vmatpush1.bf16.msra.mxu0 %v855
    %1357 = vmatprep.subr.bf16.mxu0 0
    %1358 = vmatpush1.bf16.msra.mxu0 %v856
    %1359 = vmatprep.subr.bf16.mxu0 0
    %1360 = vmatpush1.bf16.msra.mxu0 0
    %1361 = vmatprep.subr.bf16.mxu0 0
    %1362 = vmatpush1.bf16.msra.mxu0 0
    %1363 = vmatprep.subr.bf16.mxu0 0
    %1364 = vmatpush1.bf16.msra.mxu0 0
    %1365 = vmatprep.subr.bf16.mxu0 0
    %1366 = vmatpush1.bf16.msra.mxu0 0
    %1367 = vmatprep.subr.bf16.mxu0 0
    %1368 = vmatpush1.bf16.msra.mxu0 0
    %1369 = vmatprep.subr.bf16.mxu0 0
    %1370 = vmatpush1.bf16.msra.mxu0 0
    %1371 = vmatprep.subr.bf16.mxu0 0
    %1372 = vmatpush1.bf16.msra.mxu0 0
    %1373 = vmatprep.subr.bf16.mxu0 0
    %1374 = vmatpush1.bf16.msra.mxu0 0
    %1375 = vmatprep.subr.bf16.mxu0 0
    %1376 = vmatpush1.bf16.msra.mxu0 0
    %1377 = vmatprep.subr.bf16.mxu0 0
    %1378 = vmatpush1.bf16.msra.mxu0 0
    %1379 = vmatprep.subr.bf16.mxu0 0
    %1380 = vmatpush1.bf16.msra.mxu0 0
    %1381 = vmatprep.subr.bf16.mxu0 0
    %1382 = vmatpush1.bf16.msra.mxu0 0
    %1383 = vmatprep.subr.bf16.mxu0 0
    %1384 = vmatpush1.bf16.msra.mxu0 0
    %1385 = vmatprep.mubr.bf16.mxu0 0
    %1386 = vmatmul.mubr.bf16.gmra.mrb[0].mxu0 %v1145
    %v1387 = vpop.f32.mrb[0].mxu0
    %v1388 = vadd.f32 %v1227, %v1387
    %v1389 = vpop.f32.mrb[0].mxu0
    %v1390 = vpop.f32.mrb[0].mxu0
    %v1391 = vadd.f32 %v1230, %v1390
    %v1392 = vpop.f32.mrb[0].mxu0
    %1393 = vmatprep.mubr.bf16.mxu0 0
    %1394 = vmatmul.mubr.bf16.gmra.mrb[0].mxu0 %v1148
    %v1395 = vpop.f32.mrb[0].mxu0
    %v1396 = vadd.f32 %v1235, %v1395
    %v1397 = vpop.f32.mrb[0].mxu0
    %v1398 = vpop.f32.mrb[0].mxu0
    %v1399 = vadd.f32 %v1238, %v1398
    %v1400 = vpop.f32.mrb[0].mxu0
    %1401 = vmatprep.mubr.bf16.mxu0 0
    %1402 = vmatmul.mubr.bf16.gmra.mrb[0].mxu0 %v1151
    %v1403 = vpop.f32.mrb[0].mxu0
    %v1404 = vadd.f32 %v1243, %v1403
    %v1405 = vpop.f32.mrb[0].mxu0
    %v1406 = vpop.f32.mrb[0].mxu0
    %v1407 = vadd.f32 %v1246, %v1406
    %v1408 = vpop.f32.mrb[0].mxu0
    %1409 = vmatprep.mubr.bf16.mxu0 0
    %1410 = vmatmul.mubr.bf16.gmra.mrb[0].mxu0 %v1154
    %v1411 = vpop.f32.mrb[0].mxu0
    %v1412 = vadd.f32 %v1251, %v1411
    %v1413 = vpop.f32.mrb[0].mxu0
    %v1414 = vpop.f32.mrb[0].mxu0
    %v1415 = vadd.f32 %v1254, %v1414
    %v1416 = vpop.f32.mrb[0].mxu0
    %1417 = vmatprep.mubr.bf16.mxu0 0
    %1418 = vmatmul.mubr.bf16.gmra.mrb[0].mxu0 %v1157
    %v1419 = vpop.f32.mrb[0].mxu0
    %v1420 = vadd.f32 %v1259, %v1419
    %v1421 = vpop.f32.mrb[0].mxu0
    %v1422 = vpop.f32.mrb[0].mxu0
    %v1423 = vadd.f32 %v1262, %v1422
    %v1424 = vpop.f32.mrb[0].mxu0
    %1425 = vmatprep.mubr.bf16.mxu0 0
    %1426 = vmatmul.mubr.bf16.gmra.mrb[0].mxu0 %v1160
    %v1427 = vpop.f32.mrb[0].mxu0
    %v1428 = vadd.f32 %v1267, %v1427
    %v1429 = vpop.f32.mrb[0].mxu0
    %v1430 = vpop.f32.mrb[0].mxu0
    %v1431 = vadd.f32 %v1270, %v1430
    %v1432 = vpop.f32.mrb[0].mxu0
    %1433 = vmatprep.mubr.bf16.mxu0 0
    %1434 = vmatmul.mubr.bf16.gmra.mrb[0].mxu0 %v1163
    %v1435 = vpop.f32.mrb[0].mxu0
    %v1436 = vadd.f32 %v1275, %v1435
    %v1437 = vpop.f32.mrb[0].mxu0
    %v1438 = vpop.f32.mrb[0].mxu0
    %v1439 = vadd.f32 %v1278, %v1438
    %v1440 = vpop.f32.mrb[0].mxu0
    %1441 = vmatprep.mubr.bf16.mxu0 0
    %1442 = vmatmul.mubr.bf16.gmra.mrb[0].mxu0 %v1166
    %v1443 = vpop.f32.mrb[0].mxu0
    %v1444 = vadd.f32 %v1283, %v1443
    %v1445 = vpop.f32.mrb[0].mxu0
    %v1446 = vpop.f32.mrb[0].mxu0
    %v1447 = vadd.f32 %v1286, %v1446
    %v1448 = vpop.f32.mrb[0].mxu0
    %1449 = vmatprep.mubr.bf16.mxu0 0
    %1450 = vmatmul.mubr.bf16.gmra.mrb[0].mxu0 %v1169
    %v1451 = vpop.f32.mrb[0].mxu0
    %v1452 = vadd.f32 %v1291, %v1451
    %v1453 = vpop.f32.mrb[0].mxu0
    %v1454 = vpop.f32.mrb[0].mxu0
    %v1455 = vadd.f32 %v1294, %v1454
    %v1456 = vpop.f32.mrb[0].mxu0
    %1457 = vmatprep.mubr.bf16.mxu0 0
    %1458 = vmatmul.mubr.bf16.gmra.mrb[0].mxu0 %v1172
    %v1459 = vpop.f32.mrb[0].mxu0
    %v1460 = vadd.f32 %v1299, %v1459
    %v1461 = vpop.f32.mrb[0].mxu0
    %v1462 = vpop.f32.mrb[0].mxu0
    %v1463 = vadd.f32 %v1302, %v1462
    %v1464 = vpop.f32.mrb[0].mxu0
    %1465 = vmatprep.mubr.bf16.mxu0 0
    %1466 = vmatmul.mubr.bf16.gmra.mrb[0].mxu0 %v1175
    %v1467 = vpop.f32.mrb[0].mxu0
    %v1468 = vadd.f32 %v1307, %v1467
    %v1469 = vpop.f32.mrb[0].mxu0
    %v1470 = vpop.f32.mrb[0].mxu0
    %v1471 = vadd.f32 %v1310, %v1470
    %v1472 = vpop.f32.mrb[0].mxu0
    %1473 = vmatprep.mubr.bf16.mxu0 0
    %1474 = vmatmul.mubr.bf16.gmra.mrb[0].mxu0 %v1178
    %v1475 = vpop.f32.mrb[0].mxu0
    %v1476 = vadd.f32 %v1315, %v1475
    %v1477 = vpop.f32.mrb[0].mxu0
    %v1478 = vpop.f32.mrb[0].mxu0
    %v1479 = vadd.f32 %v1318, %v1478
    %v1480 = vpop.f32.mrb[0].mxu0
    %1481 = vmatprep.mubr.bf16.mxu0 0
    %1482 = vmatmul.mubr.bf16.gmra.mrb[0].mxu0 %v1181
    %v1483 = vpop.f32.mrb[0].mxu0
    %v1484 = vadd.f32 %v1323, %v1483
    %v1485 = vpop.f32.mrb[0].mxu0
    %v1486 = vpop.f32.mrb[0].mxu0
    %v1487 = vadd.f32 %v1326, %v1486
    %v1488 = vpop.f32.mrb[0].mxu0
    %1489 = vmatprep.mubr.bf16.mxu0 0
    %1490 = vmatmul.mubr.bf16.gmra.mrb[0].mxu0 %v1184
    %v1491 = vpop.f32.mrb[0].mxu0
    %v1492 = vadd.f32 %v1331, %v1491
    %v1493 = vpop.f32.mrb[0].mxu0
    %v1494 = vpop.f32.mrb[0].mxu0
    %v1495 = vadd.f32 %v1334, %v1494
    %v1496 = vpop.f32.mrb[0].mxu0
    %1497 = vmatprep.mubr.bf16.mxu0 0
    %1498 = vmatmul.mubr.bf16.gmra.mrb[0].mxu0 %v1187
    %v1499 = vpop.f32.mrb[0].mxu0
    %v1500 = vadd.f32 %v1339, %v1499
    %v1501 = vpop.f32.mrb[0].mxu0
    %v1502 = vpop.f32.mrb[0].mxu0
    %v1503 = vadd.f32 %v1342, %v1502
    %v1504 = vpop.f32.mrb[0].mxu0
    %1505 = vmatprep.mubr.bf16.mxu0 0
    %1506 = vmatmul.mubr.bf16.gmra.mrb[0].mxu0 %v1190
    %v1507 = vpop.f32.mrb[0].mxu0
    %v1508 = vadd.f32 %v1347, %v1507
    %v1509 = vpop.f32.mrb[0].mxu0
    %v1510 = vpop.f32.mrb[0].mxu0
    %v1511 = vadd.f32 %v1350, %v1510
    %v1512 = vpop.f32.mrb[0].mxu0
    %1513 = vdwg.mxu0
    %v1514 = vsel %vm799, %v1388, 0.0
    %v1515 = vsel %vm799, %v1391, 0.0
    %v1516 = vsel %vm799, %v1396, 0.0
    %v1517 = vsel %vm799, %v1399, 0.0
    %v1518 = vsel %vm799, %v1404, 0.0
    %v1519 = vsel %vm799, %v1407, 0.0
    %v1520 = vsel %vm799, %v1412, 0.0
    %v1521 = vsel %vm799, %v1415, 0.0
    %v1522 = vsel %vm799, %v1420, 0.0
    %v1523 = vsel %vm799, %v1423, 0.0
    %v1524 = vsel %vm799, %v1428, 0.0
    %v1525 = vsel %vm799, %v1431, 0.0
    %v1526 = vsel %vm799, %v1436, 0.0
    %v1527 = vsel %vm799, %v1439, 0.0
    %v1528 = vsel %vm799, %v1444, 0.0
    %v1529 = vsel %vm799, %v1447, 0.0
    %v1530 = vsel %vm799, %v1452, 0.0
    %v1531 = vsel %vm799, %v1455, 0.0
    %v1532 = vsel %vm799, %v1460, 0.0
    %v1533 = vsel %vm799, %v1463, 0.0
    %v1534 = vsel %vm799, %v1468, 0.0
    %v1535 = vsel %vm799, %v1471, 0.0
    %v1536 = vsel %vm799, %v1476, 0.0
    %v1537 = vsel %vm799, %v1479, 0.0
    %v1538 = vsel %vm799, %v1484, 0.0
    %v1539 = vsel %vm799, %v1487, 0.0
    %v1540 = vsel %vm799, %v1492, 0.0
    %v1541 = vsel %vm799, %v1495, 0.0
    %v1542 = vsel %vm799, %v1500, 0.0
    %v1543 = vsel %vm799, %v1503, 0.0
    %v1544 = vsel %vm799, %v1508, 0.0
    %v1545 = vsel %vm799, %v1511, 0.0
    %1546 = vadd.xlane.f32.xlu0 %v1514
    %v1547 = vpop.xlane.xlu0 %1546
    %1548 = vadd.xlane.f32.xlu0 %v1515
    %v1549 = vpop.xlane.xlu0 %1548
    %1550 = vadd.xlane.f32.xlu0 %v1516
    %v1551 = vpop.xlane.xlu0 %1550
    %1552 = vadd.xlane.f32.xlu0 %v1517
    %v1553 = vpop.xlane.xlu0 %1552
    %1554 = vadd.xlane.f32.xlu0 %v1518
    %v1555 = vpop.xlane.xlu0 %1554
    %1556 = vadd.xlane.f32.xlu0 %v1519
    %v1557 = vpop.xlane.xlu0 %1556
    %1558 = vadd.xlane.f32.xlu0 %v1520
    %v1559 = vpop.xlane.xlu0 %1558
    %1560 = vadd.xlane.f32.xlu0 %v1521
    %v1561 = vpop.xlane.xlu0 %1560
    %1562 = vadd.xlane.f32.xlu0 %v1522
    %v1563 = vpop.xlane.xlu0 %1562
    %1564 = vadd.xlane.f32.xlu0 %v1523
    %v1565 = vpop.xlane.xlu0 %1564
    %1566 = vadd.xlane.f32.xlu0 %v1524
    %v1567 = vpop.xlane.xlu0 %1566
    %1568 = vadd.xlane.f32.xlu0 %v1525
    %v1569 = vpop.xlane.xlu0 %1568
    %1570 = vadd.xlane.f32.xlu0 %v1526
    %v1571 = vpop.xlane.xlu0 %1570
    %1572 = vadd.xlane.f32.xlu0 %v1527
    %v1573 = vpop.xlane.xlu0 %1572
    %1574 = vadd.xlane.f32.xlu0 %v1528
    %v1575 = vpop.xlane.xlu0 %1574
    %1576 = vadd.xlane.f32.xlu0 %v1529
    %v1577 = vpop.xlane.xlu0 %1576
    %1578 = vadd.xlane.f32.xlu0 %v1530
    %v1579 = vpop.xlane.xlu0 %1578
    %1580 = vadd.xlane.f32.xlu0 %v1531
    %v1581 = vpop.xlane.xlu0 %1580
    %1582 = vadd.xlane.f32.xlu0 %v1532
    %v1583 = vpop.xlane.xlu0 %1582
    %1584 = vadd.xlane.f32.xlu0 %v1533
    %v1585 = vpop.xlane.xlu0 %1584
    %1586 = vadd.xlane.f32.xlu0 %v1534
    %v1587 = vpop.xlane.xlu0 %1586
    %1588 = vadd.xlane.f32.xlu0 %v1535
    %v1589 = vpop.xlane.xlu0 %1588
    %1590 = vadd.xlane.f32.xlu0 %v1536
    %v1591 = vpop.xlane.xlu0 %1590
    %1592 = vadd.xlane.f32.xlu0 %v1537
    %v1593 = vpop.xlane.xlu0 %1592
    %1594 = vadd.xlane.f32.xlu0 %v1538
    %v1595 = vpop.xlane.xlu0 %1594
    %1596 = vadd.xlane.f32.xlu0 %v1539
    %v1597 = vpop.xlane.xlu0 %1596
    %1598 = vadd.xlane.f32.xlu0 %v1540
    %v1599 = vpop.xlane.xlu0 %1598
    %1600 = vadd.xlane.f32.xlu0 %v1541
    %v1601 = vpop.xlane.xlu0 %1600
    %1602 = vadd.xlane.f32.xlu0 %v1542
    %v1603 = vpop.xlane.xlu0 %1602
    %1604 = vadd.xlane.f32.xlu0 %v1543
    %v1605 = vpop.xlane.xlu0 %1604
    %1606 = vadd.xlane.f32.xlu0 %v1544
    %v1607 = vpop.xlane.xlu0 %1606
    %1608 = vadd.xlane.f32.xlu0 %v1545
    %v1609 = vpop.xlane.xlu0 %1608
    %v1610 = vmax.f32 %v1547, 1.0
    %v1611 = vmax.f32 %v1549, 1.0
    %v1612 = vmax.f32 %v1551, 1.0
    %v1613 = vmax.f32 %v1553, 1.0
    %v1614 = vmax.f32 %v1555, 1.0
    %v1615 = vmax.f32 %v1557, 1.0
    %v1616 = vmax.f32 %v1559, 1.0
    %v1617 = vmax.f32 %v1561, 1.0
    %v1618 = vmax.f32 %v1563, 1.0
    %v1619 = vmax.f32 %v1565, 1.0
    %v1620 = vmax.f32 %v1567, 1.0
    %v1621 = vmax.f32 %v1569, 1.0
    %v1622 = vmax.f32 %v1571, 1.0
    %v1623 = vmax.f32 %v1573, 1.0
    %v1624 = vmax.f32 %v1575, 1.0
    %v1625 = vmax.f32 %v1577, 1.0
    %v1626 = vmax.f32 %v1579, 1.0
    %v1627 = vmax.f32 %v1581, 1.0
    %v1628 = vmax.f32 %v1583, 1.0
    %v1629 = vmax.f32 %v1585, 1.0
    %v1630 = vmax.f32 %v1587, 1.0
    %v1631 = vmax.f32 %v1589, 1.0
    %v1632 = vmax.f32 %v1591, 1.0
    %v1633 = vmax.f32 %v1593, 1.0
    %v1634 = vmax.f32 %v1595, 1.0
    %v1635 = vmax.f32 %v1597, 1.0
    %v1636 = vmax.f32 %v1599, 1.0
    %v1637 = vmax.f32 %v1601, 1.0
    %v1638 = vmax.f32 %v1603, 1.0
    %v1639 = vmax.f32 %v1605, 1.0
    %v1640 = vmax.f32 %v1607, 1.0
    %v1641 = vmax.f32 %v1609, 1.0
    %v1642 = vrcp.pop %v1610
    %v1643 = vrcp.pop %v1611
    %v1644 = vrcp.pop %v1612
    %v1645 = vrcp.pop %v1613
    %v1646 = vrcp.pop %v1614
    %v1647 = vrcp.pop %v1615
    %v1648 = vrcp.pop %v1616
    %v1649 = vrcp.pop %v1617
    %v1650 = vrcp.pop %v1618
    %v1651 = vrcp.pop %v1619
    %v1652 = vrcp.pop %v1620
    %v1653 = vrcp.pop %v1621
    %v1654 = vrcp.pop %v1622
    %v1655 = vrcp.pop %v1623
    %v1656 = vrcp.pop %v1624
    %v1657 = vrcp.pop %v1625
    %v1658 = vrcp.pop %v1626
    %v1659 = vrcp.pop %v1627
    %v1660 = vrcp.pop %v1628
    %v1661 = vrcp.pop %v1629
    %v1662 = vrcp.pop %v1630
    %v1663 = vrcp.pop %v1631
    %v1664 = vrcp.pop %v1632
    %v1665 = vrcp.pop %v1633
    %v1666 = vrcp.pop %v1634
    %v1667 = vrcp.pop %v1635
    %v1668 = vrcp.pop %v1636
    %v1669 = vrcp.pop %v1637
    %v1670 = vrcp.pop %v1638
    %v1671 = vrcp.pop %v1639
    %v1672 = vrcp.pop %v1640
    %v1673 = vrcp.pop %v1641
    %v1674 = vmul.f32 %v1388, %v1642
    %v1675 = vmul.f32 %v1391, %v1643
    %v1676 = vmul.f32 %v1396, %v1644
    %v1677 = vmul.f32 %v1399, %v1645
    %v1678 = vmul.f32 %v1404, %v1646
    %v1679 = vmul.f32 %v1407, %v1647
    %v1680 = vmul.f32 %v1412, %v1648
    %v1681 = vmul.f32 %v1415, %v1649
    %v1682 = vmul.f32 %v1420, %v1650
    %v1683 = vmul.f32 %v1423, %v1651
    %v1684 = vmul.f32 %v1428, %v1652
    %v1685 = vmul.f32 %v1431, %v1653
    %v1686 = vmul.f32 %v1436, %v1654
    %v1687 = vmul.f32 %v1439, %v1655
    %v1688 = vmul.f32 %v1444, %v1656
    %v1689 = vmul.f32 %v1447, %v1657
    %v1690 = vmul.f32 %v1452, %v1658
    %v1691 = vmul.f32 %v1455, %v1659
    %v1692 = vmul.f32 %v1460, %v1660
    %v1693 = vmul.f32 %v1463, %v1661
    %v1694 = vmul.f32 %v1468, %v1662
    %v1695 = vmul.f32 %v1471, %v1663
    %v1696 = vmul.f32 %v1476, %v1664
    %v1697 = vmul.f32 %v1479, %v1665
    %v1698 = vmul.f32 %v1484, %v1666
    %v1699 = vmul.f32 %v1487, %v1667
    %v1700 = vmul.f32 %v1492, %v1668
    %v1701 = vmul.f32 %v1495, %v1669
    %v1702 = vmul.f32 %v1500, %v1670
    %v1703 = vmul.f32 %v1503, %v1671
    %v1704 = vmul.f32 %v1508, %v1672
    %v1705 = vmul.f32 %v1511, %v1673
    %v1706 = vpack.c.bf16 %v1675, %v1674
    %v1707 = vpack.c.bf16 %v1677, %v1676
    %v1708 = vpack.c.bf16 %v1679, %v1678
    %v1709 = vpack.c.bf16 %v1681, %v1680
    %v1710 = vpack.c.bf16 %v1683, %v1682
    %v1711 = vpack.c.bf16 %v1685, %v1684
    %v1712 = vpack.c.bf16 %v1687, %v1686
    %v1713 = vpack.c.bf16 %v1689, %v1688
    %v1714 = vpack.c.bf16 %v1691, %v1690
    %v1715 = vpack.c.bf16 %v1693, %v1692
    %v1716 = vpack.c.bf16 %v1695, %v1694
    %v1717 = vpack.c.bf16 %v1697, %v1696
    %v1718 = vpack.c.bf16 %v1699, %v1698
    %v1719 = vpack.c.bf16 %v1701, %v1700
    %v1720 = vpack.c.bf16 %v1703, %v1702
    %v1721 = vpack.c.bf16 %v1705, %v1704
    %1722 = vmatprep.subr.bf16.mxu0 0
    %1723 = vmatpush1.bf16.msra.mxu0 %v1706
    %1724 = vmatprep.subr.bf16.mxu0 0
    %1725 = vmatpush1.bf16.msra.mxu0 %v1707
    %1726 = vmatprep.subr.bf16.mxu0 0
    %1727 = vmatpush1.bf16.msra.mxu0 %v1708
    %1728 = vmatprep.subr.bf16.mxu0 0
    %1729 = vmatpush1.bf16.msra.mxu0 %v1709
    %1730 = vmatprep.subr.bf16.mxu0 0
    %1731 = vmatpush1.bf16.msra.mxu0 %v1710
    %1732 = vmatprep.subr.bf16.mxu0 0
    %1733 = vmatpush1.bf16.msra.mxu0 %v1711
    %1734 = vmatprep.subr.bf16.mxu0 0
    %1735 = vmatpush1.bf16.msra.mxu0 %v1712
    %1736 = vmatprep.subr.bf16.mxu0 0
    %1737 = vmatpush1.bf16.msra.mxu0 %v1713
    %1738 = vmatprep.subr.bf16.mxu0 0
    %1739 = vmatpush1.bf16.msra.mxu0 %v1714
    %1740 = vmatprep.subr.bf16.mxu0 0
    %1741 = vmatpush1.bf16.msra.mxu0 %v1715
    %1742 = vmatprep.subr.bf16.mxu0 0
    %1743 = vmatpush1.bf16.msra.mxu0 %v1716
    %1744 = vmatprep.subr.bf16.mxu0 0
    %1745 = vmatpush1.bf16.msra.mxu0 %v1717
    %1746 = vmatprep.subr.bf16.mxu0 0
    %1747 = vmatpush1.bf16.msra.mxu0 %v1718
    %1748 = vmatprep.subr.bf16.mxu0 0
    %1749 = vmatpush1.bf16.msra.mxu0 %v1719
    %1750 = vmatprep.subr.bf16.mxu0 0
    %1751 = vmatpush1.bf16.msra.mxu0 %v1720
    %1752 = vmatprep.subr.bf16.mxu0 0
    %1753 = vmatpush1.bf16.msra.mxu0 %v1721
    %1754 = vmatprep.mubr.bf16.mxu0 %v972
    %1755 = vmatmul.mubr.bf16.gmra.mrb[0].mxu0 %v971
    %v1756 = vpop.f32.mrb[0].mxu0
    %v1757 = vadd.f32 0.0, %v1756
    %v1758 = vpop.f32.mrb[0].mxu0
    %v1759 = vpop.f32.mrb[0].mxu0
    %v1760 = vadd.f32 0.0, %v1759
    %v1761 = vpop.f32.mrb[0].mxu0
    %1762 = vmatprep.mubr.bf16.mxu0 %v974
    %1763 = vmatmul.mubr.bf16.gmra.mrb[0].mxu0 %v973
    %v1764 = vpop.f32.mrb[0].mxu0
    %v1765 = vadd.f32 0.0, %v1764
    %v1766 = vpop.f32.mrb[0].mxu0
    %v1767 = vpop.f32.mrb[0].mxu0
    %v1768 = vadd.f32 0.0, %v1767
    %v1769 = vpop.f32.mrb[0].mxu0
    %1770 = vmatprep.mubr.bf16.mxu0 %v976
    %1771 = vmatmul.mubr.bf16.gmra.mrb[0].mxu0 %v975
    %v1772 = vpop.f32.mrb[0].mxu0
    %v1773 = vadd.f32 0.0, %v1772
    %v1774 = vpop.f32.mrb[0].mxu0
    %v1775 = vpop.f32.mrb[0].mxu0
    %v1776 = vadd.f32 0.0, %v1775
    %v1777 = vpop.f32.mrb[0].mxu0
    %1778 = vmatprep.mubr.bf16.mxu0 %v978
    %1779 = vmatmul.mubr.bf16.gmra.mrb[0].mxu0 %v977
    %v1780 = vpop.f32.mrb[0].mxu0
    %v1781 = vadd.f32 0.0, %v1780
    %v1782 = vpop.f32.mrb[0].mxu0
    %v1783 = vpop.f32.mrb[0].mxu0
    %v1784 = vadd.f32 0.0, %v1783
    %v1785 = vpop.f32.mrb[0].mxu0
    %1786 = vmatprep.mubr.bf16.mxu0 %v980
    %1787 = vmatmul.mubr.bf16.gmra.mrb[0].mxu0 %v979
    %v1788 = vpop.f32.mrb[0].mxu0
    %v1789 = vadd.f32 0.0, %v1788
    %v1790 = vpop.f32.mrb[0].mxu0
    %v1791 = vpop.f32.mrb[0].mxu0
    %v1792 = vadd.f32 0.0, %v1791
    %v1793 = vpop.f32.mrb[0].mxu0
    %1794 = vmatprep.mubr.bf16.mxu0 %v982
    %1795 = vmatmul.mubr.bf16.gmra.mrb[0].mxu0 %v981
    %v1796 = vpop.f32.mrb[0].mxu0
    %v1797 = vadd.f32 0.0, %v1796
    %v1798 = vpop.f32.mrb[0].mxu0
    %v1799 = vpop.f32.mrb[0].mxu0
    %v1800 = vadd.f32 0.0, %v1799
    %v1801 = vpop.f32.mrb[0].mxu0
    %1802 = vmatprep.mubr.bf16.mxu0 %v984
    %1803 = vmatmul.mubr.bf16.gmra.mrb[0].mxu0 %v983
    %v1804 = vpop.f32.mrb[0].mxu0
    %v1805 = vadd.f32 0.0, %v1804
    %v1806 = vpop.f32.mrb[0].mxu0
    %v1807 = vpop.f32.mrb[0].mxu0
    %v1808 = vadd.f32 0.0, %v1807
    %v1809 = vpop.f32.mrb[0].mxu0
    %1810 = vmatprep.mubr.bf16.mxu0 %v986
    %1811 = vmatmul.mubr.bf16.gmra.mrb[0].mxu0 %v985
    %v1812 = vpop.f32.mrb[0].mxu0
    %v1813 = vadd.f32 0.0, %v1812
    %v1814 = vpop.f32.mrb[0].mxu0
    %v1815 = vpop.f32.mrb[0].mxu0
    %v1816 = vadd.f32 0.0, %v1815
    %v1817 = vpop.f32.mrb[0].mxu0
    %1818 = vmatprep.mubr.bf16.mxu0 %v988
    %1819 = vmatmul.mubr.bf16.gmra.mrb[0].mxu0 %v987
    %v1820 = vpop.f32.mrb[0].mxu0
    %v1821 = vadd.f32 0.0, %v1820
    %v1822 = vpop.f32.mrb[0].mxu0
    %v1823 = vpop.f32.mrb[0].mxu0
    %v1824 = vadd.f32 0.0, %v1823
    %v1825 = vpop.f32.mrb[0].mxu0
    %1826 = vmatprep.mubr.bf16.mxu0 %v990
    %1827 = vmatmul.mubr.bf16.gmra.mrb[0].mxu0 %v989
    %v1828 = vpop.f32.mrb[0].mxu0
    %v1829 = vadd.f32 0.0, %v1828
    %v1830 = vpop.f32.mrb[0].mxu0
    %v1831 = vpop.f32.mrb[0].mxu0
    %v1832 = vadd.f32 0.0, %v1831
    %v1833 = vpop.f32.mrb[0].mxu0
    %1834 = vmatprep.mubr.bf16.mxu0 %v992
    %1835 = vmatmul.mubr.bf16.gmra.mrb[0].mxu0 %v991
    %v1836 = vpop.f32.mrb[0].mxu0
    %v1837 = vadd.f32 0.0, %v1836
    %v1838 = vpop.f32.mrb[0].mxu0
    %v1839 = vpop.f32.mrb[0].mxu0
    %v1840 = vadd.f32 0.0, %v1839
    %v1841 = vpop.f32.mrb[0].mxu0
    %1842 = vmatprep.mubr.bf16.mxu0 %v994
    %1843 = vmatmul.mubr.bf16.gmra.mrb[0].mxu0 %v993
    %v1844 = vpop.f32.mrb[0].mxu0
    %v1845 = vadd.f32 0.0, %v1844
    %v1846 = vpop.f32.mrb[0].mxu0
    %v1847 = vpop.f32.mrb[0].mxu0
    %v1848 = vadd.f32 0.0, %v1847
    %v1849 = vpop.f32.mrb[0].mxu0
    %1850 = vmatprep.mubr.bf16.mxu0 %v996
    %1851 = vmatmul.mubr.bf16.gmra.mrb[0].mxu0 %v995
    %v1852 = vpop.f32.mrb[0].mxu0
    %v1853 = vadd.f32 0.0, %v1852
    %v1854 = vpop.f32.mrb[0].mxu0
    %v1855 = vpop.f32.mrb[0].mxu0
    %v1856 = vadd.f32 0.0, %v1855
    %v1857 = vpop.f32.mrb[0].mxu0
    %1858 = vmatprep.mubr.bf16.mxu0 %v998
    %1859 = vmatmul.mubr.bf16.gmra.mrb[0].mxu0 %v997
    %v1860 = vpop.f32.mrb[0].mxu0
    %v1861 = vadd.f32 0.0, %v1860
    %v1862 = vpop.f32.mrb[0].mxu0
    %v1863 = vpop.f32.mrb[0].mxu0
    %v1864 = vadd.f32 0.0, %v1863
    %v1865 = vpop.f32.mrb[0].mxu0
    %1866 = vmatprep.mubr.bf16.mxu0 %v1000
    %1867 = vmatmul.mubr.bf16.gmra.mrb[0].mxu0 %v999
    %v1868 = vpop.f32.mrb[0].mxu0
    %v1869 = vadd.f32 0.0, %v1868
    %v1870 = vpop.f32.mrb[0].mxu0
    %v1871 = vpop.f32.mrb[0].mxu0
    %v1872 = vadd.f32 0.0, %v1871
    %v1873 = vpop.f32.mrb[0].mxu0
    %1874 = vmatprep.mubr.bf16.mxu0 %v1002
    %1875 = vmatmul.mubr.bf16.gmra.mrb[0].mxu0 %v1001
    %v1876 = vpop.f32.mrb[0].mxu0
    %v1877 = vadd.f32 0.0, %v1876
    %v1878 = vpop.f32.mrb[0].mxu0
    %v1879 = vpop.f32.mrb[0].mxu0
    %v1880 = vadd.f32 0.0, %v1879
    %v1881 = vpop.f32.mrb[0].mxu0
    %1882 = vmatprep.mubr.bf16.mxu0 %v1004
    %1883 = vmatmul.mubr.bf16.gmra.mrb[0].mxu0 %v1003
    %v1884 = vpop.f32.mrb[0].mxu0
    %v1885 = vadd.f32 0.0, %v1884
    %v1886 = vpop.f32.mrb[0].mxu0
    %v1887 = vpop.f32.mrb[0].mxu0
    %v1888 = vadd.f32 0.0, %v1887
    %v1889 = vpop.f32.mrb[0].mxu0
    %1890 = vmatprep.mubr.bf16.mxu0 %v1006
    %1891 = vmatmul.mubr.bf16.gmra.mrb[0].mxu0 %v1005
    %v1892 = vpop.f32.mrb[0].mxu0
    %v1893 = vadd.f32 0.0, %v1892
    %v1894 = vpop.f32.mrb[0].mxu0
    %v1895 = vpop.f32.mrb[0].mxu0
    %v1896 = vadd.f32 0.0, %v1895
    %v1897 = vpop.f32.mrb[0].mxu0
    %1898 = vmatprep.mubr.bf16.mxu0 %v1008
    %1899 = vmatmul.mubr.bf16.gmra.mrb[0].mxu0 %v1007
    %v1900 = vpop.f32.mrb[0].mxu0
    %v1901 = vadd.f32 0.0, %v1900
    %v1902 = vpop.f32.mrb[0].mxu0
    %v1903 = vpop.f32.mrb[0].mxu0
    %v1904 = vadd.f32 0.0, %v1903
    %v1905 = vpop.f32.mrb[0].mxu0
    %1906 = vdwg.mxu0
    %v1907 = vmul.f32 %v1757, %v330
    %v1908 = vmul.f32 %v1760, %v331
    %v1909 = vmul.f32 %v1765, %v332
    %v1910 = vmul.f32 %v1768, %v333
    %v1911 = vmul.f32 %v1773, %v334
    %v1912 = vmul.f32 %v1776, %v335
    %v1913 = vmul.f32 %v1781, %v336
    %v1914 = vmul.f32 %v1784, %v337
    %v1915 = vmul.f32 %v1789, %v338
    %v1916 = vmul.f32 %v1792, %v339
    %v1917 = vmul.f32 %v1797, %v340
    %v1918 = vmul.f32 %v1800, %v341
    %v1919 = vmul.f32 %v1805, %v342
    %v1920 = vmul.f32 %v1808, %v343
    %v1921 = vmul.f32 %v1813, %v344
    %v1922 = vmul.f32 %v1816, %v345
    %v1923 = vmul.f32 %v1821, %v346
    %v1924 = vmul.f32 %v1824, %v347
    %v1925 = vmul.f32 %v1829, %v348
    %v1926 = vmul.f32 %v1832, %v349
    %v1927 = vmul.f32 %v1837, %v350
    %v1928 = vmul.f32 %v1840, %v351
    %v1929 = vmul.f32 %v1845, %v352
    %v1930 = vmul.f32 %v1848, %v353
    %v1931 = vmul.f32 %v1853, %v354
    %v1932 = vmul.f32 %v1856, %v355
    %v1933 = vmul.f32 %v1861, %v356
    %v1934 = vmul.f32 %v1864, %v357
    %v1935 = vmul.f32 %v1869, %v358
    %v1936 = vmul.f32 %v1872, %v359
    %v1937 = vmul.f32 %v1877, %v360
    %v1938 = vmul.f32 %v1880, %v361
    %v1939 = vmul.f32 %v1885, %v362
    %v1940 = vmul.f32 %v1888, %v363
    %v1941 = vmul.f32 %v1893, %v364
    %v1942 = vmul.f32 %v1896, %v365
    %v1943 = vmul.f32 %v1901, %v366
    %v1944 = vmul.f32 %v1904, %v367
    %v1945 = vpack.c.bf16 %v1908, %v1907
    %v1946 = vpack.c.bf16 %v1910, %v1909
    %v1947 = vpack.c.bf16 %v1912, %v1911
    %v1948 = vpack.c.bf16 %v1914, %v1913
    %v1949 = vpack.c.bf16 %v1916, %v1915
    %v1950 = vpack.c.bf16 %v1918, %v1917
    %v1951 = vpack.c.bf16 %v1920, %v1919
    %v1952 = vpack.c.bf16 %v1922, %v1921
    %v1953 = vpack.c.bf16 %v1924, %v1923
    %v1954 = vpack.c.bf16 %v1926, %v1925
    %v1955 = vpack.c.bf16 %v1928, %v1927
    %v1956 = vpack.c.bf16 %v1930, %v1929
    %v1957 = vpack.c.bf16 %v1932, %v1931
    %v1958 = vpack.c.bf16 %v1934, %v1933
    %v1959 = vpack.c.bf16 %v1936, %v1935
    %v1960 = vpack.c.bf16 %v1938, %v1937
    %v1961 = vpack.c.bf16 %v1940, %v1939
    %v1962 = vpack.c.bf16 %v1942, %v1941
    %v1963 = vpack.c.bf16 %v1944, %v1943
    %1964 = vmatprep.subr.bf16.mxu0 0
    %1965 = vmatpush1.bf16.msra.mxu0 %v1945
    %1966 = vmatprep.subr.bf16.mxu0 0
    %1967 = vmatpush1.bf16.msra.mxu0 %v1946
    %1968 = vmatprep.subr.bf16.mxu0 0
    %1969 = vmatpush1.bf16.msra.mxu0 %v1947
    %1970 = vmatprep.subr.bf16.mxu0 0
    %1971 = vmatpush1.bf16.msra.mxu0 %v1948
    %1972 = vmatprep.subr.bf16.mxu0 0
    %1973 = vmatpush1.bf16.msra.mxu0 %v1949
    %1974 = vmatprep.subr.bf16.mxu0 0
    %1975 = vmatpush1.bf16.msra.mxu0 %v1950
    %1976 = vmatprep.subr.bf16.mxu0 0
    %1977 = vmatpush1.bf16.msra.mxu0 %v1951
    %1978 = vmatprep.subr.bf16.mxu0 0
    %1979 = vmatpush1.bf16.msra.mxu0 %v1952
    %1980 = vmatprep.subr.bf16.mxu0 0
    %1981 = vmatpush1.bf16.msra.mxu0 %v1953
    %1982 = vmatprep.subr.bf16.mxu0 0
    %1983 = vmatpush1.bf16.msra.mxu0 %v1954
    %1984 = vmatprep.subr.bf16.mxu0 0
    %1985 = vmatpush1.bf16.msra.mxu0 %v1955
    %1986 = vmatprep.subr.bf16.mxu0 0
    %1987 = vmatpush1.bf16.msra.mxu0 %v1956
    %1988 = vmatprep.subr.bf16.mxu0 0
    %1989 = vmatpush1.bf16.msra.mxu0 %v1957
    %1990 = vmatprep.subr.bf16.mxu0 0
    %1991 = vmatpush1.bf16.msra.mxu0 %v1958
    %1992 = vmatprep.subr.bf16.mxu0 0
    %1993 = vmatpush1.bf16.msra.mxu0 %v1959
    %1994 = vmatprep.subr.bf16.mxu0 0
    %1995 = vmatpush1.bf16.msra.mxu0 %v1960
    %1996 = vmatprep.mubr.bf16.mxu0 %v1087
    %1997 = vmatmul.mubr.bf16.gmra.mrb[0].mxu0 %v1055
    %v1998 = vpop.f32.mrb[0].mxu0
    %v1999 = vadd.f32 0.0, %v1998
    %v2000 = vpop.f32.mrb[0].mxu0
    %v2001 = vpop.f32.mrb[0].mxu0
    %v2002 = vadd.f32 0.0, %v2001
    %v2003 = vpop.f32.mrb[0].mxu0
    %2004 = vmatprep.mubr.bf16.mxu0 %v1088
    %2005 = vmatmul.mubr.bf16.gmra.mrb[0].mxu0 %v1056
    %v2006 = vpop.f32.mrb[0].mxu0
    %v2007 = vadd.f32 0.0, %v2006
    %v2008 = vpop.f32.mrb[0].mxu0
    %v2009 = vpop.f32.mrb[0].mxu0
    %v2010 = vadd.f32 0.0, %v2009
    %v2011 = vpop.f32.mrb[0].mxu0
    %2012 = vmatprep.mubr.bf16.mxu0 %v1089
    %2013 = vmatmul.mubr.bf16.gmra.mrb[0].mxu0 %v1057
    %v2014 = vpop.f32.mrb[0].mxu0
    %v2015 = vadd.f32 0.0, %v2014
    %v2016 = vpop.f32.mrb[0].mxu0
    %v2017 = vpop.f32.mrb[0].mxu0
    %v2018 = vadd.f32 0.0, %v2017
    %v2019 = vpop.f32.mrb[0].mxu0
    %2020 = vmatprep.mubr.bf16.mxu0 %v1090
    %2021 = vmatmul.mubr.bf16.gmra.mrb[0].mxu0 %v1058
    %v2022 = vpop.f32.mrb[0].mxu0
    %v2023 = vadd.f32 0.0, %v2022
    %v2024 = vpop.f32.mrb[0].mxu0
    %v2025 = vpop.f32.mrb[0].mxu0
    %v2026 = vadd.f32 0.0, %v2025
    %v2027 = vpop.f32.mrb[0].mxu0
    %2028 = vmatprep.mubr.bf16.mxu0 %v1091
    %2029 = vmatmul.mubr.bf16.gmra.mrb[0].mxu0 %v1059
    %v2030 = vpop.f32.mrb[0].mxu0
    %v2031 = vadd.f32 0.0, %v2030
    %v2032 = vpop.f32.mrb[0].mxu0
    %v2033 = vpop.f32.mrb[0].mxu0
    %v2034 = vadd.f32 0.0, %v2033
    %v2035 = vpop.f32.mrb[0].mxu0
    %2036 = vmatprep.mubr.bf16.mxu0 %v1092
    %2037 = vmatmul.mubr.bf16.gmra.mrb[0].mxu0 %v1060
    %v2038 = vpop.f32.mrb[0].mxu0
    %v2039 = vadd.f32 0.0, %v2038
    %v2040 = vpop.f32.mrb[0].mxu0
    %v2041 = vpop.f32.mrb[0].mxu0
    %v2042 = vadd.f32 0.0, %v2041
    %v2043 = vpop.f32.mrb[0].mxu0
    %2044 = vmatprep.mubr.bf16.mxu0 %v1093
    %2045 = vmatmul.mubr.bf16.gmra.mrb[0].mxu0 %v1061
    %v2046 = vpop.f32.mrb[0].mxu0
    %v2047 = vadd.f32 0.0, %v2046
    %v2048 = vpop.f32.mrb[0].mxu0
    %v2049 = vpop.f32.mrb[0].mxu0
    %v2050 = vadd.f32 0.0, %v2049
    %v2051 = vpop.f32.mrb[0].mxu0
    %2052 = vmatprep.mubr.bf16.mxu0 %v1094
    %2053 = vmatmul.mubr.bf16.gmra.mrb[0].mxu0 %v1062
    %v2054 = vpop.f32.mrb[0].mxu0
    %v2055 = vadd.f32 0.0, %v2054
    %v2056 = vpop.f32.mrb[0].mxu0
    %v2057 = vpop.f32.mrb[0].mxu0
    %v2058 = vadd.f32 0.0, %v2057
    %v2059 = vpop.f32.mrb[0].mxu0
    %2060 = vmatprep.mubr.bf16.mxu0 %v1103
    %2061 = vmatmul.mubr.bf16.gmra.mrb[0].mxu0 %v1071
    %v2062 = vpop.f32.mrb[0].mxu0
    %v2063 = vadd.f32 0.0, %v2062
    %v2064 = vpop.f32.mrb[0].mxu0
    %v2065 = vpop.f32.mrb[0].mxu0
    %v2066 = vadd.f32 0.0, %v2065
    %v2067 = vpop.f32.mrb[0].mxu0
    %2068 = vmatprep.mubr.bf16.mxu0 %v1104
    %2069 = vmatmul.mubr.bf16.gmra.mrb[0].mxu0 %v1072
    %v2070 = vpop.f32.mrb[0].mxu0
    %v2071 = vadd.f32 0.0, %v2070
    %v2072 = vpop.f32.mrb[0].mxu0
    %v2073 = vpop.f32.mrb[0].mxu0
    %v2074 = vadd.f32 0.0, %v2073
    %v2075 = vpop.f32.mrb[0].mxu0
    %2076 = vmatprep.mubr.bf16.mxu0 %v1105
    %2077 = vmatmul.mubr.bf16.gmra.mrb[0].mxu0 %v1073
    %v2078 = vpop.f32.mrb[0].mxu0
    %v2079 = vadd.f32 0.0, %v2078
    %v2080 = vpop.f32.mrb[0].mxu0
    %v2081 = vpop.f32.mrb[0].mxu0
    %v2082 = vadd.f32 0.0, %v2081
    %v2083 = vpop.f32.mrb[0].mxu0
    %2084 = vmatprep.mubr.bf16.mxu0 %v1106
    %2085 = vmatmul.mubr.bf16.gmra.mrb[0].mxu0 %v1074
    %v2086 = vpop.f32.mrb[0].mxu0
    %v2087 = vadd.f32 0.0, %v2086
    %v2088 = vpop.f32.mrb[0].mxu0
    %v2089 = vpop.f32.mrb[0].mxu0
    %v2090 = vadd.f32 0.0, %v2089
    %v2091 = vpop.f32.mrb[0].mxu0
    %2092 = vmatprep.mubr.bf16.mxu0 %v1107
    %2093 = vmatmul.mubr.bf16.gmra.mrb[0].mxu0 %v1075
    %v2094 = vpop.f32.mrb[0].mxu0
    %v2095 = vadd.f32 0.0, %v2094
    %v2096 = vpop.f32.mrb[0].mxu0
    %v2097 = vpop.f32.mrb[0].mxu0
    %v2098 = vadd.f32 0.0, %v2097
    %v2099 = vpop.f32.mrb[0].mxu0
    %2100 = vmatprep.mubr.bf16.mxu0 %v1108
    %2101 = vmatmul.mubr.bf16.gmra.mrb[0].mxu0 %v1076
    %v2102 = vpop.f32.mrb[0].mxu0
    %v2103 = vadd.f32 0.0, %v2102
    %v2104 = vpop.f32.mrb[0].mxu0
    %v2105 = vpop.f32.mrb[0].mxu0
    %v2106 = vadd.f32 0.0, %v2105
    %v2107 = vpop.f32.mrb[0].mxu0
    %2108 = vmatprep.mubr.bf16.mxu0 %v1109
    %2109 = vmatmul.mubr.bf16.gmra.mrb[0].mxu0 %v1077
    %v2110 = vpop.f32.mrb[0].mxu0
    %v2111 = vadd.f32 0.0, %v2110
    %v2112 = vpop.f32.mrb[0].mxu0
    %v2113 = vpop.f32.mrb[0].mxu0
    %v2114 = vadd.f32 0.0, %v2113
    %v2115 = vpop.f32.mrb[0].mxu0
    %2116 = vmatprep.mubr.bf16.mxu0 %v1110
    %2117 = vmatmul.mubr.bf16.gmra.mrb[0].mxu0 %v1078
    %v2118 = vpop.f32.mrb[0].mxu0
    %v2119 = vadd.f32 0.0, %v2118
    %v2120 = vpop.f32.mrb[0].mxu0
    %v2121 = vpop.f32.mrb[0].mxu0
    %v2122 = vadd.f32 0.0, %v2121
    %v2123 = vpop.f32.mrb[0].mxu0
    %2124 = vdwg.mxu0
    %2125 = vmatprep.subr.bf16.mxu0 0
    %2126 = vmatpush1.bf16.msra.mxu0 %v1961
    %2127 = vmatprep.subr.bf16.mxu0 0
    %2128 = vmatpush1.bf16.msra.mxu0 %v1962
    %2129 = vmatprep.subr.bf16.mxu0 0
    %2130 = vmatpush1.bf16.msra.mxu0 %v1963
    %2131 = vmatprep.subr.bf16.mxu0 0
    %2132 = vmatpush1.bf16.msra.mxu0 0
    %2133 = vmatprep.subr.bf16.mxu0 0
    %2134 = vmatpush1.bf16.msra.mxu0 0
    %2135 = vmatprep.subr.bf16.mxu0 0
    %2136 = vmatpush1.bf16.msra.mxu0 0
    %2137 = vmatprep.subr.bf16.mxu0 0
    %2138 = vmatpush1.bf16.msra.mxu0 0
    %2139 = vmatprep.subr.bf16.mxu0 0
    %2140 = vmatpush1.bf16.msra.mxu0 0
    %2141 = vmatprep.subr.bf16.mxu0 0
    %2142 = vmatpush1.bf16.msra.mxu0 0
    %2143 = vmatprep.subr.bf16.mxu0 0
    %2144 = vmatpush1.bf16.msra.mxu0 0
    %2145 = vmatprep.subr.bf16.mxu0 0
    %2146 = vmatpush1.bf16.msra.mxu0 0
    %2147 = vmatprep.subr.bf16.mxu0 0
    %2148 = vmatpush1.bf16.msra.mxu0 0
    %2149 = vmatprep.subr.bf16.mxu0 0
    %2150 = vmatpush1.bf16.msra.mxu0 0
    %2151 = vmatprep.subr.bf16.mxu0 0
    %2152 = vmatpush1.bf16.msra.mxu0 0
    %2153 = vmatprep.subr.bf16.mxu0 0
    %2154 = vmatpush1.bf16.msra.mxu0 0
    %2155 = vmatprep.subr.bf16.mxu0 0
    %2156 = vmatpush1.bf16.msra.mxu0 0
    %2157 = vmatprep.mubr.bf16.mxu0 0
    %2158 = vmatmul.mubr.bf16.gmra.mrb[0].mxu0 %v1145
    %v2159 = vpop.f32.mrb[0].mxu0
    %v2160 = vadd.f32 %v1999, %v2159
    %v2161 = vpop.f32.mrb[0].mxu0
    %v2162 = vpop.f32.mrb[0].mxu0
    %v2163 = vadd.f32 %v2002, %v2162
    %v2164 = vpop.f32.mrb[0].mxu0
    %2165 = vmatprep.mubr.bf16.mxu0 0
    %2166 = vmatmul.mubr.bf16.gmra.mrb[0].mxu0 %v1148
    %v2167 = vpop.f32.mrb[0].mxu0
    %v2168 = vadd.f32 %v2007, %v2167
    %v2169 = vpop.f32.mrb[0].mxu0
    %v2170 = vpop.f32.mrb[0].mxu0
    %v2171 = vadd.f32 %v2010, %v2170
    %v2172 = vpop.f32.mrb[0].mxu0
    %2173 = vmatprep.mubr.bf16.mxu0 0
    %2174 = vmatmul.mubr.bf16.gmra.mrb[0].mxu0 %v1151
    %v2175 = vpop.f32.mrb[0].mxu0
    %v2176 = vadd.f32 %v2015, %v2175
    %v2177 = vpop.f32.mrb[0].mxu0
    %v2178 = vpop.f32.mrb[0].mxu0
    %v2179 = vadd.f32 %v2018, %v2178
    %v2180 = vpop.f32.mrb[0].mxu0
    %2181 = vmatprep.mubr.bf16.mxu0 0
    %2182 = vmatmul.mubr.bf16.gmra.mrb[0].mxu0 %v1154
    %v2183 = vpop.f32.mrb[0].mxu0
    %v2184 = vadd.f32 %v2023, %v2183
    %v2185 = vpop.f32.mrb[0].mxu0
    %v2186 = vpop.f32.mrb[0].mxu0
    %v2187 = vadd.f32 %v2026, %v2186
    %v2188 = vpop.f32.mrb[0].mxu0
    %2189 = vmatprep.mubr.bf16.mxu0 0
    %2190 = vmatmul.mubr.bf16.gmra.mrb[0].mxu0 %v1157
    %v2191 = vpop.f32.mrb[0].mxu0
    %v2192 = vadd.f32 %v2031, %v2191
    %v2193 = vpop.f32.mrb[0].mxu0
    %v2194 = vpop.f32.mrb[0].mxu0
    %v2195 = vadd.f32 %v2034, %v2194
    %v2196 = vpop.f32.mrb[0].mxu0
    %2197 = vmatprep.mubr.bf16.mxu0 0
    %2198 = vmatmul.mubr.bf16.gmra.mrb[0].mxu0 %v1160
    %v2199 = vpop.f32.mrb[0].mxu0
    %v2200 = vadd.f32 %v2039, %v2199
    %v2201 = vpop.f32.mrb[0].mxu0
    %v2202 = vpop.f32.mrb[0].mxu0
    %v2203 = vadd.f32 %v2042, %v2202
    %v2204 = vpop.f32.mrb[0].mxu0
    %2205 = vmatprep.mubr.bf16.mxu0 0
    %2206 = vmatmul.mubr.bf16.gmra.mrb[0].mxu0 %v1163
    %v2207 = vpop.f32.mrb[0].mxu0
    %v2208 = vadd.f32 %v2047, %v2207
    %v2209 = vpop.f32.mrb[0].mxu0
    %v2210 = vpop.f32.mrb[0].mxu0
    %v2211 = vadd.f32 %v2050, %v2210
    %v2212 = vpop.f32.mrb[0].mxu0
    %2213 = vmatprep.mubr.bf16.mxu0 0
    %2214 = vmatmul.mubr.bf16.gmra.mrb[0].mxu0 %v1166
    %v2215 = vpop.f32.mrb[0].mxu0
    %v2216 = vadd.f32 %v2055, %v2215
    %v2217 = vpop.f32.mrb[0].mxu0
    %v2218 = vpop.f32.mrb[0].mxu0
    %v2219 = vadd.f32 %v2058, %v2218
    %v2220 = vpop.f32.mrb[0].mxu0
    %2221 = vmatprep.mubr.bf16.mxu0 0
    %2222 = vmatmul.mubr.bf16.gmra.mrb[0].mxu0 %v1169
    %v2223 = vpop.f32.mrb[0].mxu0
    %v2224 = vadd.f32 %v2063, %v2223
    %v2225 = vpop.f32.mrb[0].mxu0
    %v2226 = vpop.f32.mrb[0].mxu0
    %v2227 = vadd.f32 %v2066, %v2226
    %v2228 = vpop.f32.mrb[0].mxu0
    %2229 = vmatprep.mubr.bf16.mxu0 0
    %2230 = vmatmul.mubr.bf16.gmra.mrb[0].mxu0 %v1172
    %v2231 = vpop.f32.mrb[0].mxu0
    %v2232 = vadd.f32 %v2071, %v2231
    %v2233 = vpop.f32.mrb[0].mxu0
    %v2234 = vpop.f32.mrb[0].mxu0
    %v2235 = vadd.f32 %v2074, %v2234
    %v2236 = vpop.f32.mrb[0].mxu0
    %2237 = vmatprep.mubr.bf16.mxu0 0
    %2238 = vmatmul.mubr.bf16.gmra.mrb[0].mxu0 %v1175
    %v2239 = vpop.f32.mrb[0].mxu0
    %v2240 = vadd.f32 %v2079, %v2239
    %v2241 = vpop.f32.mrb[0].mxu0
    %v2242 = vpop.f32.mrb[0].mxu0
    %v2243 = vadd.f32 %v2082, %v2242
    %v2244 = vpop.f32.mrb[0].mxu0
    %2245 = vmatprep.mubr.bf16.mxu0 0
    %2246 = vmatmul.mubr.bf16.gmra.mrb[0].mxu0 %v1178
    %v2247 = vpop.f32.mrb[0].mxu0
    %v2248 = vadd.f32 %v2087, %v2247
    %v2249 = vpop.f32.mrb[0].mxu0
    %v2250 = vpop.f32.mrb[0].mxu0
    %v2251 = vadd.f32 %v2090, %v2250
    %v2252 = vpop.f32.mrb[0].mxu0
    %2253 = vmatprep.mubr.bf16.mxu0 0
    %2254 = vmatmul.mubr.bf16.gmra.mrb[0].mxu0 %v1181
    %v2255 = vpop.f32.mrb[0].mxu0
    %v2256 = vadd.f32 %v2095, %v2255
    %v2257 = vpop.f32.mrb[0].mxu0
    %v2258 = vpop.f32.mrb[0].mxu0
    %v2259 = vadd.f32 %v2098, %v2258
    %v2260 = vpop.f32.mrb[0].mxu0
    %2261 = vmatprep.mubr.bf16.mxu0 0
    %2262 = vmatmul.mubr.bf16.gmra.mrb[0].mxu0 %v1184
    %v2263 = vpop.f32.mrb[0].mxu0
    %v2264 = vadd.f32 %v2103, %v2263
    %v2265 = vpop.f32.mrb[0].mxu0
    %v2266 = vpop.f32.mrb[0].mxu0
    %v2267 = vadd.f32 %v2106, %v2266
    %v2268 = vpop.f32.mrb[0].mxu0
    %2269 = vmatprep.mubr.bf16.mxu0 0
    %2270 = vmatmul.mubr.bf16.gmra.mrb[0].mxu0 %v1187
    %v2271 = vpop.f32.mrb[0].mxu0
    %v2272 = vadd.f32 %v2111, %v2271
    %v2273 = vpop.f32.mrb[0].mxu0
    %v2274 = vpop.f32.mrb[0].mxu0
    %v2275 = vadd.f32 %v2114, %v2274
    %v2276 = vpop.f32.mrb[0].mxu0
    %2277 = vmatprep.mubr.bf16.mxu0 0
    %2278 = vmatmul.mubr.bf16.gmra.mrb[0].mxu0 %v1190
    %v2279 = vpop.f32.mrb[0].mxu0
    %v2280 = vadd.f32 %v2119, %v2279
    %v2281 = vpop.f32.mrb[0].mxu0
    %v2282 = vpop.f32.mrb[0].mxu0
    %v2283 = vadd.f32 %v2122, %v2282
    %v2284 = vpop.f32.mrb[0].mxu0
    %2285 = vdwg.mxu0
    %v2286 = vmul.f32 %v2160, %v1642
    %v2287 = vmul.f32 %v2163, %v1643
    %v2288 = vmul.f32 %v2168, %v1644
    %v2289 = vmul.f32 %v2171, %v1645
    %v2290 = vmul.f32 %v2176, %v1646
    %v2291 = vmul.f32 %v2179, %v1647
    %v2292 = vmul.f32 %v2184, %v1648
    %v2293 = vmul.f32 %v2187, %v1649
    %v2294 = vmul.f32 %v2192, %v1650
    %v2295 = vmul.f32 %v2195, %v1651
    %v2296 = vmul.f32 %v2200, %v1652
    %v2297 = vmul.f32 %v2203, %v1653
    %v2298 = vmul.f32 %v2208, %v1654
    %v2299 = vmul.f32 %v2211, %v1655
    %v2300 = vmul.f32 %v2216, %v1656
    %v2301 = vmul.f32 %v2219, %v1657
    %v2302 = vmul.f32 %v2224, %v1658
    %v2303 = vmul.f32 %v2227, %v1659
    %v2304 = vmul.f32 %v2232, %v1660
    %v2305 = vmul.f32 %v2235, %v1661
    %v2306 = vmul.f32 %v2240, %v1662
    %v2307 = vmul.f32 %v2243, %v1663
    %v2308 = vmul.f32 %v2248, %v1664
    %v2309 = vmul.f32 %v2251, %v1665
    %v2310 = vmul.f32 %v2256, %v1666
    %v2311 = vmul.f32 %v2259, %v1667
    %v2312 = vmul.f32 %v2264, %v1668
    %v2313 = vmul.f32 %v2267, %v1669
    %v2314 = vmul.f32 %v2272, %v1670
    %v2315 = vmul.f32 %v2275, %v1671
    %v2316 = vmul.f32 %v2280, %v1672
    %v2317 = vmul.f32 %v2283, %v1673
    %v2318 = vld [vmem:[%s4] sm:$0x1]
    %v2320 = vlaneseq
    %v2321 = vshrl.u32 %v2320, 7
    %v2322 = vsub.s32 0, %v2321
    %v2323 = vrot.slane %v2318, %v2322
    %v2325 = vmul.f32 %v2286, %v2323
    %v2326 = vmul.f32 %v2287, %v2323
    %v2327 = vmul.f32 %v2288, %v2323
    %v2328 = vmul.f32 %v2289, %v2323
    %v2329 = vmul.f32 %v2290, %v2323
    %v2330 = vmul.f32 %v2291, %v2323
    %v2331 = vmul.f32 %v2292, %v2323
    %v2332 = vmul.f32 %v2293, %v2323
    %v2333 = vmul.f32 %v2294, %v2323
    %v2334 = vmul.f32 %v2295, %v2323
    %v2335 = vmul.f32 %v2296, %v2323
    %v2336 = vmul.f32 %v2297, %v2323
    %v2337 = vmul.f32 %v2298, %v2323
    %v2338 = vmul.f32 %v2299, %v2323
    %v2339 = vmul.f32 %v2300, %v2323
    %v2340 = vmul.f32 %v2301, %v2323
    %v2341 = vmul.f32 %v2302, %v2323
    %v2342 = vmul.f32 %v2303, %v2323
    %v2343 = vmul.f32 %v2304, %v2323
    %v2344 = vmul.f32 %v2305, %v2323
    %v2345 = vmul.f32 %v2306, %v2323
    %v2346 = vmul.f32 %v2307, %v2323
    %v2347 = vmul.f32 %v2308, %v2323
    %v2348 = vmul.f32 %v2309, %v2323
    %v2349 = vmul.f32 %v2310, %v2323
    %v2350 = vmul.f32 %v2311, %v2323
    %v2351 = vmul.f32 %v2312, %v2323
    %v2352 = vmul.f32 %v2313, %v2323
    %v2353 = vmul.f32 %v2314, %v2323
    %v2354 = vmul.f32 %v2315, %v2323
    %v2355 = vmul.f32 %v2316, %v2323
    %v2356 = vmul.f32 %v2317, %v2323
    %2357 = vadd.xlane.f32.xlu0 %v2325
    %v2358 = vpop.xlane.xlu0 %2357
    %2359 = vadd.xlane.f32.xlu0 %v2326
    %v2360 = vpop.xlane.xlu0 %2359
    %2361 = vadd.xlane.f32.xlu0 %v2327
    %v2362 = vpop.xlane.xlu0 %2361
    %2363 = vadd.xlane.f32.xlu0 %v2328
    %v2364 = vpop.xlane.xlu0 %2363
    %2365 = vadd.xlane.f32.xlu0 %v2329
    %v2366 = vpop.xlane.xlu0 %2365
    %2367 = vadd.xlane.f32.xlu0 %v2330
    %v2368 = vpop.xlane.xlu0 %2367
    %2369 = vadd.xlane.f32.xlu0 %v2331
    %v2370 = vpop.xlane.xlu0 %2369
    %2371 = vadd.xlane.f32.xlu0 %v2332
    %v2372 = vpop.xlane.xlu0 %2371
    %2373 = vadd.xlane.f32.xlu0 %v2333
    %v2374 = vpop.xlane.xlu0 %2373
    %2375 = vadd.xlane.f32.xlu0 %v2334
    %v2376 = vpop.xlane.xlu0 %2375
    %2377 = vadd.xlane.f32.xlu0 %v2335
    %v2378 = vpop.xlane.xlu0 %2377
    %2379 = vadd.xlane.f32.xlu0 %v2336
    %v2380 = vpop.xlane.xlu0 %2379
    %2381 = vadd.xlane.f32.xlu0 %v2337
    %v2382 = vpop.xlane.xlu0 %2381
    %2383 = vadd.xlane.f32.xlu0 %v2338
    %v2384 = vpop.xlane.xlu0 %2383
    %2385 = vadd.xlane.f32.xlu0 %v2339
    %v2386 = vpop.xlane.xlu0 %2385
    %2387 = vadd.xlane.f32.xlu0 %v2340
    %v2388 = vpop.xlane.xlu0 %2387
    %2389 = vadd.xlane.f32.xlu0 %v2341
    %v2390 = vpop.xlane.xlu0 %2389
    %2391 = vadd.xlane.f32.xlu0 %v2342
    %v2392 = vpop.xlane.xlu0 %2391
    %2393 = vadd.xlane.f32.xlu0 %v2343
    %v2394 = vpop.xlane.xlu0 %2393
    %2395 = vadd.xlane.f32.xlu0 %v2344
    %v2396 = vpop.xlane.xlu0 %2395
    %2397 = vadd.xlane.f32.xlu0 %v2345
    %v2398 = vpop.xlane.xlu0 %2397
    %2399 = vadd.xlane.f32.xlu0 %v2346
    %v2400 = vpop.xlane.xlu0 %2399
    %2401 = vadd.xlane.f32.xlu0 %v2347
    %v2402 = vpop.xlane.xlu0 %2401
    %2403 = vadd.xlane.f32.xlu0 %v2348
    %v2404 = vpop.xlane.xlu0 %2403
    %2405 = vadd.xlane.f32.xlu0 %v2349
    %v2406 = vpop.xlane.xlu0 %2405
    %2407 = vadd.xlane.f32.xlu0 %v2350
    %v2408 = vpop.xlane.xlu0 %2407
    %2409 = vadd.xlane.f32.xlu0 %v2351
    %v2410 = vpop.xlane.xlu0 %2409
    %2411 = vadd.xlane.f32.xlu0 %v2352
    %v2412 = vpop.xlane.xlu0 %2411
    %2413 = vadd.xlane.f32.xlu0 %v2353
    %v2414 = vpop.xlane.xlu0 %2413
    %2415 = vadd.xlane.f32.xlu0 %v2354
    %v2416 = vpop.xlane.xlu0 %2415
    %2417 = vadd.xlane.f32.xlu0 %v2355
    %v2418 = vpop.xlane.xlu0 %2417
    %2419 = vadd.xlane.f32.xlu0 %v2356
    %v2420 = vpop.xlane.xlu0 %2419
    %s2421 = sld [smem:[#allocation2]]
    %v2422 = vstv %s2421
    %v2423 = vadd.f32 %v2358, %v2422
    %v2424 = vadd.f32 %v2360, %v2422
    %v2425 = vadd.f32 %v2362, %v2422
    %v2426 = vadd.f32 %v2364, %v2422
    %v2427 = vadd.f32 %v2366, %v2422
    %v2428 = vadd.f32 %v2368, %v2422
    %v2429 = vadd.f32 %v2370, %v2422
    %v2430 = vadd.f32 %v2372, %v2422
    %v2431 = vadd.f32 %v2374, %v2422
    %v2432 = vadd.f32 %v2376, %v2422
    %v2433 = vadd.f32 %v2378, %v2422
    %v2434 = vadd.f32 %v2380, %v2422
    %v2435 = vadd.f32 %v2382, %v2422
    %v2436 = vadd.f32 %v2384, %v2422
    %v2437 = vadd.f32 %v2386, %v2422
    %v2438 = vadd.f32 %v2388, %v2422
    %v2439 = vadd.f32 %v2390, %v2422
    %v2440 = vadd.f32 %v2392, %v2422
    %v2441 = vadd.f32 %v2394, %v2422
    %v2442 = vadd.f32 %v2396, %v2422
    %v2443 = vadd.f32 %v2398, %v2422
    %v2444 = vadd.f32 %v2400, %v2422
    %v2445 = vadd.f32 %v2402, %v2422
    %v2446 = vadd.f32 %v2404, %v2422
    %v2447 = vadd.f32 %v2406, %v2422
    %v2448 = vadd.f32 %v2408, %v2422
    %v2449 = vadd.f32 %v2410, %v2422
    %v2450 = vadd.f32 %v2412, %v2422
    %v2451 = vadd.f32 %v2414, %v2422
    %v2452 = vadd.f32 %v2416, %v2422
    %v2453 = vadd.f32 %v2418, %v2422
    %v2454 = vadd.f32 %v2420, %v2422
    %v2455 = vxor.u32 %v2423, 2147483648
    %v2456 = vxor.u32 %v2424, 2147483648
    %v2457 = vxor.u32 %v2425, 2147483648
    %v2458 = vxor.u32 %v2426, 2147483648
    %v2459 = vxor.u32 %v2427, 2147483648
    %v2460 = vxor.u32 %v2428, 2147483648
    %v2461 = vxor.u32 %v2429, 2147483648
    %v2462 = vxor.u32 %v2430, 2147483648
    %v2463 = vxor.u32 %v2431, 2147483648
    %v2464 = vxor.u32 %v2432, 2147483648
    %v2465 = vxor.u32 %v2433, 2147483648
    %v2466 = vxor.u32 %v2434, 2147483648
    %v2467 = vxor.u32 %v2435, 2147483648
    %v2468 = vxor.u32 %v2436, 2147483648
    %v2469 = vxor.u32 %v2437, 2147483648
    %v2470 = vxor.u32 %v2438, 2147483648
    %v2471 = vxor.u32 %v2439, 2147483648
    %v2472 = vxor.u32 %v2440, 2147483648
    %v2473 = vxor.u32 %v2441, 2147483648
    %v2474 = vxor.u32 %v2442, 2147483648
    %v2475 = vxor.u32 %v2443, 2147483648
    %v2476 = vxor.u32 %v2444, 2147483648
    %v2477 = vxor.u32 %v2445, 2147483648
    %v2478 = vxor.u32 %v2446, 2147483648
    %v2479 = vxor.u32 %v2447, 2147483648
    %v2480 = vxor.u32 %v2448, 2147483648
    %v2481 = vxor.u32 %v2449, 2147483648
    %v2482 = vxor.u32 %v2450, 2147483648
    %v2483 = vxor.u32 %v2451, 2147483648
    %v2484 = vxor.u32 %v2452, 2147483648
    %v2485 = vxor.u32 %v2453, 2147483648
    %v2486 = vxor.u32 %v2454, 2147483648
    %v2487 = vmul.f32 %v2455, 1.442695
    %v2488 = vpow.pop %v2487
    %v2489 = vmul.f32 %v2456, 1.442695
    %v2490 = vpow.pop %v2489
    %v2491 = vmul.f32 %v2457, 1.442695
    %v2492 = vpow.pop %v2491
    %v2493 = vmul.f32 %v2458, 1.442695
    %v2494 = vpow.pop %v2493
    %v2495 = vmul.f32 %v2459, 1.442695
    %v2496 = vpow.pop %v2495
    %v2497 = vmul.f32 %v2460, 1.442695
    %v2498 = vpow.pop %v2497
    %v2499 = vmul.f32 %v2461, 1.442695
    %v2500 = vpow.pop %v2499
    %v2501 = vmul.f32 %v2462, 1.442695
    %v2502 = vpow.pop %v2501
    %v2503 = vmul.f32 %v2463, 1.442695
    %v2504 = vpow.pop %v2503
    %v2505 = vmul.f32 %v2464, 1.442695
    %v2506 = vpow.pop %v2505
    %v2507 = vmul.f32 %v2465, 1.442695
    %v2508 = vpow.pop %v2507
    %v2509 = vmul.f32 %v2466, 1.442695
    %v2510 = vpow.pop %v2509
    %v2511 = vmul.f32 %v2467, 1.442695
    %v2512 = vpow.pop %v2511
    %v2513 = vmul.f32 %v2468, 1.442695
    %v2514 = vpow.pop %v2513
    %v2515 = vmul.f32 %v2469, 1.442695
    %v2516 = vpow.pop %v2515
    %v2517 = vmul.f32 %v2470, 1.442695
    %v2518 = vpow.pop %v2517
    %v2519 = vmul.f32 %v2471, 1.442695
    %v2520 = vpow.pop %v2519
    %v2521 = vmul.f32 %v2472, 1.442695
    %v2522 = vpow.pop %v2521
    %v2523 = vmul.f32 %v2473, 1.442695
    %v2524 = vpow.pop %v2523
    %v2525 = vmul.f32 %v2474, 1.442695
    %v2526 = vpow.pop %v2525
    %v2527 = vmul.f32 %v2475, 1.442695
    %v2528 = vpow.pop %v2527
    %v2529 = vmul.f32 %v2476, 1.442695
    %v2530 = vpow.pop %v2529
    %v2531 = vmul.f32 %v2477, 1.442695
    %v2532 = vpow.pop %v2531
    %v2533 = vmul.f32 %v2478, 1.442695
    %v2534 = vpow.pop %v2533
    %v2535 = vmul.f32 %v2479, 1.442695
    %v2536 = vpow.pop %v2535
    %v2537 = vmul.f32 %v2480, 1.442695
    %v2538 = vpow.pop %v2537
    %v2539 = vmul.f32 %v2481, 1.442695
    %v2540 = vpow.pop %v2539
    %v2541 = vmul.f32 %v2482, 1.442695
    %v2542 = vpow.pop %v2541
    %v2543 = vmul.f32 %v2483, 1.442695
    %v2544 = vpow.pop %v2543
    %v2545 = vmul.f32 %v2484, 1.442695
    %v2546 = vpow.pop %v2545
    %v2547 = vmul.f32 %v2485, 1.442695
    %v2548 = vpow.pop %v2547
    %v2549 = vmul.f32 %v2486, 1.442695
    %v2550 = vpow.pop %v2549
    %v2551 = vadd.f32 %v2488, 1.0
    %v2552 = vadd.f32 %v2490, 1.0
    %v2553 = vadd.f32 %v2492, 1.0
    %v2554 = vadd.f32 %v2494, 1.0
    %v2555 = vadd.f32 %v2496, 1.0
    %v2556 = vadd.f32 %v2498, 1.0
    %v2557 = vadd.f32 %v2500, 1.0
    %v2558 = vadd.f32 %v2502, 1.0
    %v2559 = vadd.f32 %v2504, 1.0
    %v2560 = vadd.f32 %v2506, 1.0
    %v2561 = vadd.f32 %v2508, 1.0
    %v2562 = vadd.f32 %v2510, 1.0
    %v2563 = vadd.f32 %v2512, 1.0
    %v2564 = vadd.f32 %v2514, 1.0
    %v2565 = vadd.f32 %v2516, 1.0
    %v2566 = vadd.f32 %v2518, 1.0
    %v2567 = vadd.f32 %v2520, 1.0
    %v2568 = vadd.f32 %v2522, 1.0
    %v2569 = vadd.f32 %v2524, 1.0
    %v2570 = vadd.f32 %v2526, 1.0
    %v2571 = vadd.f32 %v2528, 1.0
    %v2572 = vadd.f32 %v2530, 1.0
    %v2573 = vadd.f32 %v2532, 1.0
    %v2574 = vadd.f32 %v2534, 1.0
    %v2575 = vadd.f32 %v2536, 1.0
    %v2576 = vadd.f32 %v2538, 1.0
    %v2577 = vadd.f32 %v2540, 1.0
    %v2578 = vadd.f32 %v2542, 1.0
    %v2579 = vadd.f32 %v2544, 1.0
    %v2580 = vadd.f32 %v2546, 1.0
    %v2581 = vadd.f32 %v2548, 1.0
    %v2582 = vadd.f32 %v2550, 1.0
    %v2583 = vrcp.pop %v2551
    %v2584 = vmul.f32 1.0, %v2583
    %v2585 = vrcp.pop %v2552
    %v2586 = vmul.f32 1.0, %v2585
    %v2587 = vrcp.pop %v2553
    %v2588 = vmul.f32 1.0, %v2587
    %v2589 = vrcp.pop %v2554
    %v2590 = vmul.f32 1.0, %v2589
    %v2591 = vrcp.pop %v2555
    %v2592 = vmul.f32 1.0, %v2591
    %v2593 = vrcp.pop %v2556
    %v2594 = vmul.f32 1.0, %v2593
    %v2595 = vrcp.pop %v2557
    %v2596 = vmul.f32 1.0, %v2595
    %v2597 = vrcp.pop %v2558
    %v2598 = vmul.f32 1.0, %v2597
    %v2599 = vrcp.pop %v2559
    %v2600 = vmul.f32 1.0, %v2599
    %v2601 = vrcp.pop %v2560
    %v2602 = vmul.f32 1.0, %v2601
    %v2603 = vrcp.pop %v2561
    %v2604 = vmul.f32 1.0, %v2603
    %v2605 = vrcp.pop %v2562
    %v2606 = vmul.f32 1.0, %v2605
    %v2607 = vrcp.pop %v2563
    %v2608 = vmul.f32 1.0, %v2607
    %v2609 = vrcp.pop %v2564
    %v2610 = vmul.f32 1.0, %v2609
    %v2611 = vrcp.pop %v2565
    %v2612 = vmul.f32 1.0, %v2611
    %v2613 = vrcp.pop %v2566
    %v2614 = vmul.f32 1.0, %v2613
    %v2615 = vrcp.pop %v2567
    %v2616 = vmul.f32 1.0, %v2615
    %v2617 = vrcp.pop %v2568
    %v2618 = vmul.f32 1.0, %v2617
    %v2619 = vrcp.pop %v2569
    %v2620 = vmul.f32 1.0, %v2619
    %v2621 = vrcp.pop %v2570
    %v2622 = vmul.f32 1.0, %v2621
    %v2623 = vrcp.pop %v2571
    %v2624 = vmul.f32 1.0, %v2623
    %v2625 = vrcp.pop %v2572
    %v2626 = vmul.f32 1.0, %v2625
    %v2627 = vrcp.pop %v2573
    %v2628 = vmul.f32 1.0, %v2627
    %v2629 = vrcp.pop %v2574
    %v2630 = vmul.f32 1.0, %v2629
    %v2631 = vrcp.pop %v2575
    %v2632 = vmul.f32 1.0, %v2631
    %v2633 = vrcp.pop %v2576
    %v2634 = vmul.f32 1.0, %v2633
    %v2635 = vrcp.pop %v2577
    %v2636 = vmul.f32 1.0, %v2635
    %v2637 = vrcp.pop %v2578
    %v2638 = vmul.f32 1.0, %v2637
    %v2639 = vrcp.pop %v2579
    %v2640 = vmul.f32 1.0, %v2639
    %v2641 = vrcp.pop %v2580
    %v2642 = vmul.f32 1.0, %v2641
    %v2643 = vrcp.pop %v2581
    %v2644 = vmul.f32 1.0, %v2643
    %v2645 = vrcp.pop %v2582
    %v2646 = vmul.f32 1.0, %v2645
    %v2647 = vmul.f32 %v2286, %v2584
    %v2648 = vmul.f32 %v2287, %v2586
    %v2649 = vmul.f32 %v2288, %v2588
    %v2650 = vmul.f32 %v2289, %v2590
    %v2651 = vmul.f32 %v2290, %v2592
    %v2652 = vmul.f32 %v2291, %v2594
    %v2653 = vmul.f32 %v2292, %v2596
    %v2654 = vmul.f32 %v2293, %v2598
    %v2655 = vmul.f32 %v2294, %v2600
    %v2656 = vmul.f32 %v2295, %v2602
    %v2657 = vmul.f32 %v2296, %v2604
    %v2658 = vmul.f32 %v2297, %v2606
    %v2659 = vmul.f32 %v2298, %v2608
    %v2660 = vmul.f32 %v2299, %v2610
    %v2661 = vmul.f32 %v2300, %v2612
    %v2662 = vmul.f32 %v2301, %v2614
    %v2663 = vmul.f32 %v2302, %v2616
    %v2664 = vmul.f32 %v2303, %v2618
    %v2665 = vmul.f32 %v2304, %v2620
    %v2666 = vmul.f32 %v2305, %v2622
    %v2667 = vmul.f32 %v2306, %v2624
    %v2668 = vmul.f32 %v2307, %v2626
    %v2669 = vmul.f32 %v2308, %v2628
    %v2670 = vmul.f32 %v2309, %v2630
    %v2671 = vmul.f32 %v2310, %v2632
    %v2672 = vmul.f32 %v2311, %v2634
    %v2673 = vmul.f32 %v2312, %v2636
    %v2674 = vmul.f32 %v2313, %v2638
    %v2675 = vmul.f32 %v2314, %v2640
    %v2676 = vmul.f32 %v2315, %v2642
    %v2677 = vmul.f32 %v2316, %v2644
    %v2678 = vmul.f32 %v2317, %v2646
    %v2679 = vpack.c.bf16 %v2648, %v2647
    %v2680 = vpack.c.bf16 %v2650, %v2649
    %v2681 = vpack.c.bf16 %v2652, %v2651
    %v2682 = vpack.c.bf16 %v2654, %v2653
    %v2683 = vpack.c.bf16 %v2656, %v2655
    %v2684 = vpack.c.bf16 %v2658, %v2657
    %v2685 = vpack.c.bf16 %v2660, %v2659
    %v2686 = vpack.c.bf16 %v2662, %v2661
    %v2687 = vpack.c.bf16 %v2664, %v2663
    %v2688 = vpack.c.bf16 %v2666, %v2665
    %v2689 = vpack.c.bf16 %v2668, %v2667
    %v2690 = vpack.c.bf16 %v2670, %v2669
    %v2691 = vpack.c.bf16 %v2672, %v2671
    %v2692 = vpack.c.bf16 %v2674, %v2673
    %v2693 = vpack.c.bf16 %v2676, %v2675
    %v2694 = vpack.c.bf16 %v2678, %v2677
    %2695 = vmatprep.subr.bf16.mxu0 0
    %2696 = vmatpush1.bf16.msra.mxu0 %v2679
    %2697 = vmatprep.subr.bf16.mxu0 0
    %2698 = vmatpush1.bf16.msra.mxu0 %v2680
    %2699 = vmatprep.subr.bf16.mxu0 0
    %2700 = vmatpush1.bf16.msra.mxu0 %v2681
    %2701 = vmatprep.subr.bf16.mxu0 0
    %2702 = vmatpush1.bf16.msra.mxu0 %v2682
    %2703 = vmatprep.subr.bf16.mxu0 0
    %2704 = vmatpush1.bf16.msra.mxu0 %v2683
    %2705 = vmatprep.subr.bf16.mxu0 0
    %2706 = vmatpush1.bf16.msra.mxu0 %v2684
    %2707 = vmatprep.subr.bf16.mxu0 0
    %2708 = vmatpush1.bf16.msra.mxu0 %v2685
    %2709 = vmatprep.subr.bf16.mxu0 0
    %2710 = vmatpush1.bf16.msra.mxu0 %v2686
    %2711 = vmatprep.subr.bf16.mxu0 0
    %2712 = vmatpush1.bf16.msra.mxu0 %v2687
    %2713 = vmatprep.subr.bf16.mxu0 0
    %2714 = vmatpush1.bf16.msra.mxu0 %v2688
    %2715 = vmatprep.subr.bf16.mxu0 0
    %2716 = vmatpush1.bf16.msra.mxu0 %v2689
    %2717 = vmatprep.subr.bf16.mxu0 0
    %2718 = vmatpush1.bf16.msra.mxu0 %v2690
    %2719 = vmatprep.subr.bf16.mxu0 0
    %2720 = vmatpush1.bf16.msra.mxu0 %v2691
    %2721 = vmatprep.subr.bf16.mxu0 0
    %2722 = vmatpush1.bf16.msra.mxu0 %v2692
    %2723 = vmatprep.subr.bf16.mxu0 0
    %2724 = vmatpush1.bf16.msra.mxu0 %v2693
    %2725 = vmatprep.subr.bf16.mxu0 0
    %2726 = vmatpush1.bf16.msra.mxu0 %v2694
    %2727 = vmatprep.mubr.bf16.mxu0 %v972
    %2728 = vmatmul.mubr.bf16.gmra.mrb[0].mxu0 %v971
    %v2729 = vpop.f32.mrb[0].mxu0
    %v2730 = vadd.f32 0.0, %v2729
    %v2731 = vpop.f32.mrb[0].mxu0
    %v2732 = vpop.f32.mrb[0].mxu0
    %v2733 = vadd.f32 0.0, %v2732
    %v2734 = vpop.f32.mrb[0].mxu0
    %2735 = vmatprep.mubr.bf16.mxu0 %v974
    %2736 = vmatmul.mubr.bf16.gmra.mrb[0].mxu0 %v973
    %v2737 = vpop.f32.mrb[0].mxu0
    %v2738 = vadd.f32 0.0, %v2737
    %v2739 = vpop.f32.mrb[0].mxu0
    %v2740 = vpop.f32.mrb[0].mxu0
    %v2741 = vadd.f32 0.0, %v2740
    %v2742 = vpop.f32.mrb[0].mxu0
    %2743 = vmatprep.mubr.bf16.mxu0 %v976
    %2744 = vmatmul.mubr.bf16.gmra.mrb[0].mxu0 %v975
    %v2745 = vpop.f32.mrb[0].mxu0
    %v2746 = vadd.f32 0.0, %v2745
    %v2747 = vpop.f32.mrb[0].mxu0
    %v2748 = vpop.f32.mrb[0].mxu0
    %v2749 = vadd.f32 0.0, %v2748
    %v2750 = vpop.f32.mrb[0].mxu0
    %2751 = vmatprep.mubr.bf16.mxu0 %v978
    %2752 = vmatmul.mubr.bf16.gmra.mrb[0].mxu0 %v977
    %v2753 = vpop.f32.mrb[0].mxu0
    %v2754 = vadd.f32 0.0, %v2753
    %v2755 = vpop.f32.mrb[0].mxu0
    %v2756 = vpop.f32.mrb[0].mxu0
    %v2757 = vadd.f32 0.0, %v2756
    %v2758 = vpop.f32.mrb[0].mxu0
    %2759 = vmatprep.mubr.bf16.mxu0 %v980
    %2760 = vmatmul.mubr.bf16.gmra.mrb[0].mxu0 %v979
    %v2761 = vpop.f32.mrb[0].mxu0
    %v2762 = vadd.f32 0.0, %v2761
    %v2763 = vpop.f32.mrb[0].mxu0
    %v2764 = vpop.f32.mrb[0].mxu0
    %v2765 = vadd.f32 0.0, %v2764
    %v2766 = vpop.f32.mrb[0].mxu0
    %2767 = vmatprep.mubr.bf16.mxu0 %v982
    %2768 = vmatmul.mubr.bf16.gmra.mrb[0].mxu0 %v981
    %v2769 = vpop.f32.mrb[0].mxu0
    %v2770 = vadd.f32 0.0, %v2769
    %v2771 = vpop.f32.mrb[0].mxu0
    %v2772 = vpop.f32.mrb[0].mxu0
    %v2773 = vadd.f32 0.0, %v2772
    %v2774 = vpop.f32.mrb[0].mxu0
    %2775 = vmatprep.mubr.bf16.mxu0 %v984
    %2776 = vmatmul.mubr.bf16.gmra.mrb[0].mxu0 %v983
    %v2777 = vpop.f32.mrb[0].mxu0
    %v2778 = vadd.f32 0.0, %v2777
    %v2779 = vpop.f32.mrb[0].mxu0
    %v2780 = vpop.f32.mrb[0].mxu0
    %v2781 = vadd.f32 0.0, %v2780
    %v2782 = vpop.f32.mrb[0].mxu0
    %2783 = vmatprep.mubr.bf16.mxu0 %v986
    %2784 = vmatmul.mubr.bf16.gmra.mrb[0].mxu0 %v985
    %v2785 = vpop.f32.mrb[0].mxu0
    %v2786 = vadd.f32 0.0, %v2785
    %v2787 = vpop.f32.mrb[0].mxu0
    %v2788 = vpop.f32.mrb[0].mxu0
    %v2789 = vadd.f32 0.0, %v2788
    %v2790 = vpop.f32.mrb[0].mxu0
    %2791 = vmatprep.mubr.bf16.mxu0 %v988
    %2792 = vmatmul.mubr.bf16.gmra.mrb[0].mxu0 %v987
    %v2793 = vpop.f32.mrb[0].mxu0
    %v2794 = vadd.f32 0.0, %v2793
    %v2795 = vpop.f32.mrb[0].mxu0
    %v2796 = vpop.f32.mrb[0].mxu0
    %v2797 = vadd.f32 0.0, %v2796
    %v2798 = vpop.f32.mrb[0].mxu0
    %2799 = vmatprep.mubr.bf16.mxu0 %v990
    %2800 = vmatmul.mubr.bf16.gmra.mrb[0].mxu0 %v989
    %v2801 = vpop.f32.mrb[0].mxu0
    %v2802 = vadd.f32 0.0, %v2801
    %v2803 = vpop.f32.mrb[0].mxu0
    %v2804 = vpop.f32.mrb[0].mxu0
    %v2805 = vadd.f32 0.0, %v2804
    %v2806 = vpop.f32.mrb[0].mxu0
    %2807 = vmatprep.mubr.bf16.mxu0 %v992
    %2808 = vmatmul.mubr.bf16.gmra.mrb[0].mxu0 %v991
    %v2809 = vpop.f32.mrb[0].mxu0
    %v2810 = vadd.f32 0.0, %v2809
    %v2811 = vpop.f32.mrb[0].mxu0
    %v2812 = vpop.f32.mrb[0].mxu0
    %v2813 = vadd.f32 0.0, %v2812
    %v2814 = vpop.f32.mrb[0].mxu0
    %2815 = vmatprep.mubr.bf16.mxu0 %v994
    %2816 = vmatmul.mubr.bf16.gmra.mrb[0].mxu0 %v993
    %v2817 = vpop.f32.mrb[0].mxu0
    %v2818 = vadd.f32 0.0, %v2817
    %v2819 = vpop.f32.mrb[0].mxu0
    %v2820 = vpop.f32.mrb[0].mxu0
    %v2821 = vadd.f32 0.0, %v2820
    %v2822 = vpop.f32.mrb[0].mxu0
    %2823 = vmatprep.mubr.bf16.mxu0 %v996
    %2824 = vmatmul.mubr.bf16.gmra.mrb[0].mxu0 %v995
    %v2825 = vpop.f32.mrb[0].mxu0
    %v2826 = vadd.f32 0.0, %v2825
    %v2827 = vpop.f32.mrb[0].mxu0
    %v2828 = vpop.f32.mrb[0].mxu0
    %v2829 = vadd.f32 0.0, %v2828
    %v2830 = vpop.f32.mrb[0].mxu0
    %2831 = vmatprep.mubr.bf16.mxu0 %v998
    %2832 = vmatmul.mubr.bf16.gmra.mrb[0].mxu0 %v997
    %v2833 = vpop.f32.mrb[0].mxu0
    %v2834 = vadd.f32 0.0, %v2833
    %v2835 = vpop.f32.mrb[0].mxu0
    %v2836 = vpop.f32.mrb[0].mxu0
    %v2837 = vadd.f32 0.0, %v2836
    %v2838 = vpop.f32.mrb[0].mxu0
    %2839 = vmatprep.mubr.bf16.mxu0 %v1000
    %2840 = vmatmul.mubr.bf16.gmra.mrb[0].mxu0 %v999
    %v2841 = vpop.f32.mrb[0].mxu0
    %v2842 = vadd.f32 0.0, %v2841
    %v2843 = vpop.f32.mrb[0].mxu0
    %v2844 = vpop.f32.mrb[0].mxu0
    %v2845 = vadd.f32 0.0, %v2844
    %v2846 = vpop.f32.mrb[0].mxu0
    %2847 = vmatprep.mubr.bf16.mxu0 %v1002
    %2848 = vmatmul.mubr.bf16.gmra.mrb[0].mxu0 %v1001
    %v2849 = vpop.f32.mrb[0].mxu0
    %v2850 = vadd.f32 0.0, %v2849
    %v2851 = vpop.f32.mrb[0].mxu0
    %v2852 = vpop.f32.mrb[0].mxu0
    %v2853 = vadd.f32 0.0, %v2852
    %v2854 = vpop.f32.mrb[0].mxu0
    %2855 = vmatprep.mubr.bf16.mxu0 %v1004
    %2856 = vmatmul.mubr.bf16.gmra.mrb[0].mxu0 %v1003
    %v2857 = vpop.f32.mrb[0].mxu0
    %v2858 = vadd.f32 0.0, %v2857
    %v2859 = vpop.f32.mrb[0].mxu0
    %v2860 = vpop.f32.mrb[0].mxu0
    %v2861 = vadd.f32 0.0, %v2860
    %v2862 = vpop.f32.mrb[0].mxu0
    %2863 = vmatprep.mubr.bf16.mxu0 %v1006
    %2864 = vmatmul.mubr.bf16.gmra.mrb[0].mxu0 %v1005
    %v2865 = vpop.f32.mrb[0].mxu0
    %v2866 = vadd.f32 0.0, %v2865
    %v2867 = vpop.f32.mrb[0].mxu0
    %v2868 = vpop.f32.mrb[0].mxu0
    %v2869 = vadd.f32 0.0, %v2868
    %v2870 = vpop.f32.mrb[0].mxu0
    %2871 = vmatprep.mubr.bf16.mxu0 %v1008
    %2872 = vmatmul.mubr.bf16.gmra.mrb[0].mxu0 %v1007
    %v2873 = vpop.f32.mrb[0].mxu0
    %v2874 = vadd.f32 0.0, %v2873
    %v2875 = vpop.f32.mrb[0].mxu0
    %v2876 = vpop.f32.mrb[0].mxu0
    %v2877 = vadd.f32 0.0, %v2876
    %v2878 = vpop.f32.mrb[0].mxu0
    %2879 = vdwg.mxu0
    %v2880 = vrcp.pop %v292
    %v2881 = vrcp.pop %v293
    %v2882 = vrcp.pop %v294
    %v2883 = vrcp.pop %v295
    %v2884 = vrcp.pop %v296
    %v2885 = vrcp.pop %v297
    %v2886 = vrcp.pop %v298
    %v2887 = vrcp.pop %v299
    %v2888 = vrcp.pop %v300
    %v2889 = vrcp.pop %v301
    %v2890 = vrcp.pop %v302
    %v2891 = vrcp.pop %v303
    %v2892 = vrcp.pop %v304
    %v2893 = vrcp.pop %v305
    %v2894 = vrcp.pop %v306
    %v2895 = vrcp.pop %v307
    %v2896 = vrcp.pop %v308
    %v2897 = vrcp.pop %v309
    %v2898 = vrcp.pop %v310
    %v2899 = vrcp.pop %v311
    %v2900 = vrcp.pop %v312
    %v2901 = vrcp.pop %v313
    %v2902 = vrcp.pop %v314
    %v2903 = vrcp.pop %v315
    %v2904 = vrcp.pop %v316
    %v2905 = vrcp.pop %v317
    %v2906 = vrcp.pop %v318
    %v2907 = vrcp.pop %v319
    %v2908 = vrcp.pop %v320
    %v2909 = vrcp.pop %v321
    %v2910 = vrcp.pop %v322
    %v2911 = vrcp.pop %v323
    %v2912 = vrcp.pop %v324
    %v2913 = vrcp.pop %v325
    %v2914 = vrcp.pop %v326
    %v2915 = vrcp.pop %v327
    %v2916 = vrcp.pop %v328
    %v2917 = vrcp.pop %v329
    %v2918 = vmul.f32 %v2730, %v2880
    %v2919 = vmul.f32 %v2733, %v2881
    %v2920 = vmul.f32 %v2738, %v2882
    %v2921 = vmul.f32 %v2741, %v2883
    %v2922 = vmul.f32 %v2746, %v2884
    %v2923 = vmul.f32 %v2749, %v2885
    %v2924 = vmul.f32 %v2754, %v2886
    %v2925 = vmul.f32 %v2757, %v2887
    %v2926 = vmul.f32 %v2762, %v2888
    %v2927 = vmul.f32 %v2765, %v2889
    %v2928 = vmul.f32 %v2770, %v2890
    %v2929 = vmul.f32 %v2773, %v2891
    %v2930 = vmul.f32 %v2778, %v2892
    %v2931 = vmul.f32 %v2781, %v2893
    %v2932 = vmul.f32 %v2786, %v2894
    %v2933 = vmul.f32 %v2789, %v2895
    %v2934 = vmul.f32 %v2794, %v2896
    %v2935 = vmul.f32 %v2797, %v2897
    %v2936 = vmul.f32 %v2802, %v2898
    %v2937 = vmul.f32 %v2805, %v2899
    %v2938 = vmul.f32 %v2810, %v2900
    %v2939 = vmul.f32 %v2813, %v2901
    %v2940 = vmul.f32 %v2818, %v2902
    %v2941 = vmul.f32 %v2821, %v2903
    %v2942 = vmul.f32 %v2826, %v2904
    %v2943 = vmul.f32 %v2829, %v2905
    %v2944 = vmul.f32 %v2834, %v2906
    %v2945 = vmul.f32 %v2837, %v2907
    %v2946 = vmul.f32 %v2842, %v2908
    %v2947 = vmul.f32 %v2845, %v2909
    %v2948 = vmul.f32 %v2850, %v2910
    %v2949 = vmul.f32 %v2853, %v2911
    %v2950 = vmul.f32 %v2858, %v2912
    %v2951 = vmul.f32 %v2861, %v2913
    %v2952 = vmul.f32 %v2866, %v2914
    %v2953 = vmul.f32 %v2869, %v2915
    %v2954 = vmul.f32 %v2874, %v2916
    %v2955 = vmul.f32 %v2877, %v2917
    %2956 = vst [vmem:[#allocation3] sm:$0xff] %v2918
    %2957 = vst [vmem:[#allocation3 + $0x8] sm:$0xff] %v2919
    %2958 = vst [vmem:[#allocation3 + $0x10] sm:$0xff] %v2920
    %2959 = vst [vmem:[#allocation3 + $0x18] sm:$0xff] %v2921
    %2960 = vst [vmem:[#allocation3 + $0x20] sm:$0xff] %v2922
    %2961 = vst [vmem:[#allocation3 + $0x28] sm:$0xff] %v2923
    %2962 = vst [vmem:[#allocation3 + $0x30] sm:$0xff] %v2924
    %2963 = vst [vmem:[#allocation3 + $0x38] sm:$0xff] %v2925
    %2964 = vst [vmem:[#allocation3 + $0x40] sm:$0xff] %v2926
    %2965 = vst [vmem:[#allocation3 + $0x48] sm:$0xff] %v2927
    %2966 = vst [vmem:[#allocation3 + $0x50] sm:$0xff] %v2928
    %2967 = vst [vmem:[#allocation3 + $0x58] sm:$0xff] %v2929
    %2968 = vst [vmem:[#allocation3 + $0x60] sm:$0xff] %v2930
    %2969 = vst [vmem:[#allocation3 + $0x68] sm:$0xff] %v2931
    %2970 = vst [vmem:[#allocation3 + $0x70] sm:$0xff] %v2932
    %2971 = vst [vmem:[#allocation3 + $0x78] sm:$0xff] %v2933
    %2972 = vst [vmem:[#allocation3 + $0x80] sm:$0xff] %v2934
    %2973 = vst [vmem:[#allocation3 + $0x88] sm:$0xff] %v2935
    %2974 = vst [vmem:[#allocation3 + $0x90] sm:$0xff] %v2936
    %2975 = vst [vmem:[#allocation3 + $0x98] sm:$0xff] %v2937
    %2976 = vst [vmem:[#allocation3 + $0xa0] sm:$0xff] %v2938
    %2977 = vst [vmem:[#allocation3 + $0xa8] sm:$0xff] %v2939
    %2978 = vst [vmem:[#allocation3 + $0xb0] sm:$0xff] %v2940
    %2979 = vst [vmem:[#allocation3 + $0xb8] sm:$0xff] %v2941
    %2980 = vst [vmem:[#allocation3 + $0xc0] sm:$0xff] %v2942
    %2981 = vst [vmem:[#allocation3 + $0xc8] sm:$0xff] %v2943
    %2982 = vst [vmem:[#allocation3 + $0xd0] sm:$0xff] %v2944
    %2983 = vst [vmem:[#allocation3 + $0xd8] sm:$0xff] %v2945
    %2984 = vst [vmem:[#allocation3 + $0xe0] sm:$0xff] %v2946
    %2985 = vst [vmem:[#allocation3 + $0xe8] sm:$0xff] %v2947
    %2986 = vst [vmem:[#allocation3 + $0xf0] sm:$0xff] %v2948
    %2987 = vst [vmem:[#allocation3 + $0xf8] sm:$0xff] %v2949
    %2988 = vst [vmem:[#allocation3 + $0x100] sm:$0xff] %v2950
    %2989 = vst [vmem:[#allocation3 + $0x108] sm:$0xff] %v2951
    %2990 = vst [vmem:[#allocation3 + $0x110] sm:$0xff] %v2952
    %2991 = vst [vmem:[#allocation3 + $0x118] sm:$0xff] %v2953
    %2992 = vst [vmem:[#allocation3 + $0x120] sm:$0xff] %v2954
    %2993 = vst [vmem:[#allocation3 + $0x128] sm:$0xff] %v2955
    // Predicated region
    $region26: #{tpu_custom_call.1} parent=1 // pred_check
      _
    $region27: #{tpu_custom_call.1} parent=1 // pred_check_branch
      %2995 = sbr.rel (0) target = $region29
    $region28: #{tpu_custom_call.1} parent=1 // pred_region
      %s2997 = ssub.s32 4864, 4864
      %2998 = vsyncadd [#allocation4], %s2997
      %s2999 = sshll.u32 [#allocation3], 4
      %s3000 = int_to_ptr.vmem [resolvable:$true] %s2999
      %3005 = dma.vmem_to_hbm [thread:$0]  %s3000, 4864, %s6, [#allocation4], 128, 128, 8
    $region29: #{tpu_custom_call.1} parent=1 // pred_fallthru
      _
    // Predicated region
    $region30: #{tpu_custom_call.1} parent=1 // pred_check
      _
    $region31: #{tpu_custom_call.1} parent=1 // pred_check_branch
      %3007 = sbr.rel (0) target = $region33
    $region32: #{tpu_custom_call.1} parent=1 // pred_region
      %3008 = dma.done [#allocation4], 4864
    $region33: #{tpu_custom_call.1} parent=1 // pred_fallthru
      _
    %3009 = vsyncpa [#allocation4], 1

</llo_original>
